<compile_context>
chip_gen: v5e
topology: v5e:2x2
jax: 0.10.0
libtpu: 0.0.40
codegen_flags: <defaults>
</compile_context>

<pallas_src>
import functools

import numpy as np
import jax
import jax.numpy as jnp
from jax.experimental import pallas as pl
from jax.experimental.pallas import tpu as pltpu


def magnet_kernel(x_ref, c_ref, o_ref, *, hidden):
    # x_ref: (2, TILE)            pixel coordinates (x0 row, x1 row)
    # c_ref: (3*hidden, 8)        precomputed affine coefficients (K padded to 8)
    # o_ref: (hidden, TILE)
    x0 = x_ref[0:1, :]                                  # (1, T)
    x1 = x_ref[1:2, :]                                  # (1, T)
    t = x0.shape[1]
    basis = jnp.concatenate(
        [x0, x1, jnp.ones_like(x0), jnp.zeros((5, t), jnp.float32)], axis=0
    )                                                   # (8, T)

    # One MXU matmul produces all three affine maps for every channel.
    res = jnp.dot(
        c_ref[...], basis,
        preferred_element_type=jnp.float32,
        precision=jax.lax.Precision.HIGHEST,
    )                                                   # (3*hidden, T)

    v0 = res[0 * hidden:1 * hidden, :]
    v1 = res[1 * hidden:2 * hidden, :]
    lin = res[2 * hidden:3 * hidden, :]

    # gauss = exp(-0.5*q) with the 0.5 already folded into v0/v1 scaling.
    o_ref[...] = jnp.exp(-(v0 * v0 + v1 * v1)) * jnp.sin(lin)


def pack_magnet_coeffs(mu, gamma, theta, w, b):
    """Fold rotation / gamma / mu / -0.5 and the linear layer into (3*hidden, 8) f32."""
    ang = (2.0 * np.pi) * theta
    cos, sin = jnp.cos(ang), jnp.sin(ang)
    g0, g1 = gamma[:, 0], gamma[:, 1]
    mu0, mu1 = mu[:, 0], mu[:, 1]
    inv_sqrt2 = np.float32(1.0 / np.sqrt(2.0))

    # v0 = (g0/sqrt2) * ( cos*(x0-mu0) + sin*(x1-mu1))
    a00 = inv_sqrt2 * g0 * cos
    a01 = inv_sqrt2 * g0 * sin
    a02 = -(a00 * mu0 + a01 * mu1)
    # v1 = (g1/sqrt2) * (-sin*(x0-mu0) + cos*(x1-mu1))
    a10 = -inv_sqrt2 * g1 * sin
    a11 = inv_sqrt2 * g1 * cos
    a12 = -(a10 * mu0 + a11 * mu1)

    row_v0 = jnp.stack([a00, a01, a02], axis=1)         # (hid, 3)
    row_v1 = jnp.stack([a10, a11, a12], axis=1)         # (hid, 3)
    row_li = jnp.stack([w[:, 0], w[:, 1], b], axis=1)   # (hid, 3)

    coeffs = jnp.concatenate([row_v0, row_v1, row_li], axis=0)   # (3*hid, 3)
    coeffs = jnp.pad(coeffs, ((0, 0), (0, 5)))                   # K: 3 -> 8
    return coeffs.astype(jnp.float32)


def _round_up(a, m):
    return ((a + m - 1) // m) * m


def magnet_layer_pallas(x, coeffs, hidden_channels, *, max_tile=2048):
    """x: [B, 2, H, W] float32; coeffs: [3*hidden, 8] float32 -> [B, hidden, H, W]."""
    B, C, H, W = x.shape
    assert C == 2, "steerable MAGNet only supports dim_input_space == 2"
    N = B * H * W

    # Lane-dense tiling of the collapsed batch*spatial axis.
    tile = min(max_tile, _round_up(N, 128))
    n_pad = _round_up(N, tile)

    x_flat = jnp.transpose(x, (1, 0, 2, 3)).reshape(C, N)
    if n_pad != N:
        x_flat = jnp.pad(x_flat, ((0, 0), (0, n_pad - N)))

    out_flat = pl.pallas_call(
        functools.partial(magnet_kernel, hidden=hidden_channels),
        out_shape=jax.ShapeDtypeStruct((hidden_channels, n_pad), jnp.float32),
        grid=(n_pad // tile,),
        in_specs=[
            pl.BlockSpec((C, tile), lambda i: (0, i)),
            pl.BlockSpec((3 * hidden_channels, 8), lambda i: (0, 0)),
        ],
        out_specs=pl.BlockSpec((hidden_channels, tile), lambda i: (0, i)),
        compiler_params=pltpu.CompilerParams(
            dimension_semantics=("parallel",),
        ),
    )(x_flat, coeffs)

    out = out_flat[:, :N].reshape(hidden_channels, B, H, W)
    return jnp.transpose(out, (1, 0, 2, 3))


def magnet_layer_ref(x, mu, gamma, theta, w, b):
    """Pure-JAX reference of MAGNetLayer.forward (steerable=True, Linear == 1x1 conv)."""
    ang = 2.0 * np.pi * theta
    cos = jnp.cos(ang)[None, :, None, None]
    sin = jnp.sin(ang)[None, :, None, None]
    d0 = x[:, None, 0] - mu[None, :, 0, None, None]     # [B, hid, H, W]
    d1 = x[:, None, 1] - mu[None, :, 1, None, None]
    r0 = cos * d0 + sin * d1
    r1 = -sin * d0 + cos * d1
    g0 = gamma[None, :, 0, None, None] * r0
    g1 = gamma[None, :, 1, None, None] * r1
    gauss = jnp.exp(-0.5 * (g0 ** 2 + g1 ** 2))
    lin = (w[None, :, 0, None, None] * x[:, None, 0]
           + w[None, :, 1, None, None] * x[:, None, 1]
           + b[None, :, None, None])
    return gauss * jnp.sin(lin)


if __name__ == "__main__":
    # Module hyper-params (dim_input_space=2, dim_linear=2, steerable=True)
    dim_input_space = 2
    hidden_channels = 32
    input_scale = 2.0
    alpha, beta = 6.0, 1.0
    init_spatial_value = 1.0
    B, H, W = 2, 16, 16

    key = jax.random.PRNGKey(0)
    k_x, k_mu, k_gamma, k_w, k_b, k_theta = jax.random.split(key, 6)

    # Input coordinates (random deterministic example input), NCHW
    x = jax.random.uniform(k_x, (B, dim_input_space, H, W),
                           jnp.float32, minval=-1.0, maxval=1.0)

    # Parameters (deterministic synthetic init mirroring __init__)
    mu = init_spatial_value * (
        2.0 * jax.random.uniform(k_mu, (hidden_channels, dim_input_space), jnp.float32) - 1.0
    )
    gamma = (jax.random.gamma(k_gamma, alpha, (hidden_channels, dim_input_space)) / beta
             ).astype(jnp.float32)
    w = jax.random.normal(k_w, (hidden_channels, dim_input_space), jnp.float32) * 0.5
    w = w * (input_scale * gamma)                       # weight *= input_scale * gamma
    b = jax.random.uniform(k_b, (hidden_channels,), jnp.float32,
                           minval=-np.pi, maxval=np.pi)  # bias ~ U(-pi, pi)
    theta = jax.random.uniform(k_theta, (hidden_channels,), jnp.float32)

    coeffs = pack_magnet_coeffs(mu, gamma, theta, w, b)

    out = magnet_layer_pallas(x, coeffs, hidden_channels)
    out = jax.block_until_ready(out)

    ref = magnet_layer_ref(x, mu, gamma, theta, w, b)
    np.testing.assert_allclose(np.asarray(out), np.asarray(ref), rtol=1e-5, atol=2e-5)

    print("KERNEL_OK")
</pallas_src>

<mosaic_0001>
module attributes {stable_mosaic.version = 11 : i64} {
  func.func @magnet_kernel(%arg0: i32, %arg1: memref<2x512xf32, #tpu.memory_space<vmem>>, %arg2: memref<96x8xf32, #tpu.memory_space<vmem>>, %arg3: memref<32x512xf32, #tpu.memory_space<vmem>>) attributes {dimension_semantics = [#tpu.dimension_semantics<parallel>], iteration_bounds = array<i64: 1>, scalar_prefetch = 0 : i64, scratch_operands = 0 : i64, tpu.core_type = #tpu.core_type<tc>, window_params = [{transform_indices = @transform_0, window_bounds = array<i64: 2, 512>}, {pipeline_mode = #tpu.pipeline_mode<synchronous>, transform_indices = @transform_1, window_bounds = array<i64: 96, 8>}, {transform_indices = @transform_2, window_bounds = array<i64: 32, 512>}]} {
    %c0 = arith.constant 0 : index
    %c0_0 = arith.constant 0 : index
    %0 = vector.load %arg1[%c0, %c0_0] : memref<2x512xf32, #tpu.memory_space<vmem>>, vector<1x512xf32>
    %c1 = arith.constant 1 : index
    %c0_1 = arith.constant 0 : index
    %1 = vector.load %arg1[%c1, %c0_1] : memref<2x512xf32, #tpu.memory_space<vmem>>, vector<1x512xf32>
    %cst = arith.constant 1.000000e+00 : f32
    %2 = vector.broadcast %cst : f32 to vector<1x512xf32>
    %cst_2 = arith.constant 0.000000e+00 : f32
    %3 = vector.broadcast %cst_2 : f32 to vector<5x512xf32>
    %4 = tpu.concatenate %0, %1, %2, %3 in 0 : vector<1x512xf32>, vector<1x512xf32>, vector<1x512xf32>, vector<5x512xf32> -> vector<8x512xf32>
    %c0_3 = arith.constant 0 : index
    %c0_4 = arith.constant 0 : index
    %5 = vector.load %arg2[%c0_3, %c0_4] : memref<96x8xf32, #tpu.memory_space<vmem>>, vector<96x8xf32>
    %cst_5 = arith.constant dense<0.000000e+00> : vector<96x512xf32>
    %6 = tpu.matmul %5, %4, %cst_5 {dimension_numbers = #tpu.dot_dimension_numbers<[1], [0], [0], [1], [0, 0, 1, 1], [], []>, precision = #tpu.contract_precision<fp32>} : vector<96x8xf32>, vector<8x512xf32>, vector<96x512xf32> -> vector<96x512xf32>
    %7 = vector.extract_strided_slice %6 {offsets = [0, 0], sizes = [32, 512], strides = [1, 1]} : vector<96x512xf32> to vector<32x512xf32>
    %8 = vector.extract_strided_slice %6 {offsets = [32, 0], sizes = [32, 512], strides = [1, 1]} : vector<96x512xf32> to vector<32x512xf32>
    %9 = vector.extract_strided_slice %6 {offsets = [64, 0], sizes = [32, 512], strides = [1, 1]} : vector<96x512xf32> to vector<32x512xf32>
    %10 = arith.mulf %7, %7 : vector<32x512xf32>
    %11 = arith.mulf %8, %8 : vector<32x512xf32>
    %12 = arith.addf %10, %11 : vector<32x512xf32>
    %cst_6 = arith.constant 0.000000e+00 : f32
    %13 = vector.broadcast %cst_6 : f32 to vector<32x512xf32>
    %14 = arith.subf %13, %12 : vector<32x512xf32>
    %15 = math.exp %14 : vector<32x512xf32>
    %16 = math.sin %9 : vector<32x512xf32>
    %17 = arith.mulf %15, %16 : vector<32x512xf32>
    %c0_7 = arith.constant 0 : index
    %c0_8 = arith.constant 0 : index
    %18 = vector.load %arg3[%c0_7, %c0_8] : memref<32x512xf32, #tpu.memory_space<vmem>>, vector<32x512xf32>
    tpu.vector_store %arg3[%c0_7, %c0_8], %17 {strides = array<i32>} : memref<32x512xf32, #tpu.memory_space<vmem>>, vector<32x512xf32>,
    return
  }
  func.func @transform_0(%arg0: i32) -> (i32, i32) {
    %c0_i32 = arith.constant 0 : i32
    %c0_i32_0 = arith.constant 0 : i32
    return %c0_i32, %arg0 : i32, i32
  }
  func.func @transform_1(%arg0: i32) -> (i32, i32) {
    %c0_i32 = arith.constant 0 : i32
    %c0_i32_0 = arith.constant 0 : i32
    %c0_i32_1 = arith.constant 0 : i32
    return %c0_i32, %c0_i32_0 : i32, i32
  }
  func.func @transform_2(%arg0: i32) -> (i32, i32) {
    %c0_i32 = arith.constant 0 : i32
    %c0_i32_0 = arith.constant 0 : i32
    return %c0_i32, %arg0 : i32, i32
  }
}

</mosaic_0001>

<llo_original>
// kernel: tpu_custom_call.1
$region0: #{tpu_custom_call.1}
  #allocation0 [shape = 'u32[]', space=smem, size = 0x4, offset = 0x4, fixed_abs, tag = 'smem constant byte address 0x4 - core index']
  #allocation1 [shape = 'u32[72,128]{1,0:T(1,128)}', space=vmem, size = 0x9000, scoped, tag = 'internal scratch']
  %s0 = inlined_call_operand.vmem [shape: f32[2,512], index: 0, kind: input, shape index: {}]
  %s1 = inlined_call_operand.vmem [shape: f32[96,8], index: 1, kind: input, shape index: {}]
  %s2 = inlined_call_operand.hbm [shape: f32[32,512], index: 2, kind: output, shape index: {}]
  %s3 = sld [smem:[#allocation0]]
  $region18: #{tpu_custom_call.1} parent=0
    _
  %s5 = ssub.s32 1, %s3
  %s6 = scalar_select 0, %s5, %s3
  $region1: #{tpu_custom_call.1} parent=0
    #allocation2 [shape = 'u8[65536]{0}', space=vmem, size = 0x10000, scoped, tag = 'output window, operand 0, single buffered']
    #allocation3 [shape = 's32[1]{0}', space=sflag, size = 0x4, scoped, tag = 'scoped memory for tpu_custom_call.1']
    %7 = vsyncpa [#allocation3], 0
    // Predicated region
    $region2: #{tpu_custom_call.1} parent=1 // pred_check
      _
    $region3: #{tpu_custom_call.1} parent=1 // pred_check_branch
      %9 = sbr.rel (0) target = $region5
    $region4: #{tpu_custom_call.1} parent=1 // pred_region
      _
    $region5: #{tpu_custom_call.1} parent=1 // pred_fallthru
      _
    // Predicated region
    $region6: #{tpu_custom_call.1} parent=1 // pred_check
      _
    $region7: #{tpu_custom_call.1} parent=1 // pred_check_branch
      %11 = sbr.rel (0) target = $region9
    $region8: #{tpu_custom_call.1} parent=1 // pred_region
      _
    $region9: #{tpu_custom_call.1} parent=1 // pred_fallthru
      _
    %v12 = vld [vmem:[%s0] ss:$2 sm:$0xf]
    %s13 = scalar_lea.vmem %s0, 1
    %v14 = vld [vmem:[%s13] ss:$2 sm:$0xf]
    %v16 = vperm.slane %v12, 0
    %v17 = vperm.slane %v12, 1
    %v18 = vperm.slane %v12, 2
    %v19 = vperm.slane %v12, 3
    %v25 = vperm.slane %v14, 0
    %v26 = vperm.slane %v14, 1
    %v27 = vperm.slane %v14, 2
    %v28 = vperm.slane %v14, 3
    %vm33 = vcmask 1040384
    %v34 = vsel %vm33, %v16, %v25
    %v35 = vsel %vm33, %v17, %v26
    %v36 = vsel %vm33, %v18, %v27
    %v37 = vsel %vm33, %v19, %v28
    %vm38 = vcmask 1041408
    %v39 = vsel %vm38, %v34, 1.0
    %v40 = vsel %vm38, %v35, 1.0
    %v41 = vsel %vm38, %v36, 1.0
    %v42 = vsel %vm38, %v37, 1.0
    %vm43 = vcmask 1042432
    %v44 = vsel %vm43, %v39, 0.0
    %v45 = vsel %vm43, %v40, 0.0
    %v46 = vsel %vm43, %v41, 0.0
    %v47 = vsel %vm43, %v42, 0.0
    %v48 = vld [vmem:[%s1] sm:$0xff]
    %v49 = vld [vmem:[%s1 + $0x8] sm:$0xff]
    %v50 = vld [vmem:[%s1 + $0x10] sm:$0xff]
    %v51 = vld [vmem:[%s1 + $0x18] sm:$0xff]
    %v52 = vld [vmem:[%s1 + $0x20] sm:$0xff]
    %v53 = vld [vmem:[%s1 + $0x28] sm:$0xff]
    %v54 = vld [vmem:[%s1 + $0x30] sm:$0xff]
    %v55 = vld [vmem:[%s1 + $0x38] sm:$0xff]
    %v56 = vld [vmem:[%s1 + $0x40] sm:$0xff]
    %v57 = vld [vmem:[%s1 + $0x48] sm:$0xff]
    %v58 = vld [vmem:[%s1 + $0x50] sm:$0xff]
    %v59 = vld [vmem:[%s1 + $0x58] sm:$0xff]
    %vm60 = vcmask 64512
    %v62 = vsel %vm60, %v48, 0
    %v65 = vsel %vm60, %v49, 0
    %v68 = vsel %vm60, %v50, 0
    %v71 = vsel %vm60, %v51, 0
    %v74 = vsel %vm60, %v52, 0
    %v77 = vsel %vm60, %v53, 0
    %v80 = vsel %vm60, %v54, 0
    %v83 = vsel %vm60, %v55, 0
    %v86 = vsel %vm60, %v56, 0
    %v89 = vsel %vm60, %v57, 0
    %v92 = vsel %vm60, %v58, 0
    %v95 = vsel %vm60, %v59, 0
    %97 = vmatpush.msra.mxu0 0.0
    %98 = vmatpush.msra.mxu0 0.0
    %99 = vmatpush.msra.mxu0 0.0
    %100 = vmatpush.msra.mxu0 0.0
    %101 = vmatpush.msra.mxu0 0.0
    %102 = vmatpush.msra.mxu0 0.0
    %103 = vmatpush.msra.mxu0 0.0
    %104 = vmatpush.msra.mxu0 0.0
    %105 = vmatpush.msra.mxu0 0.0
    %106 = vmatpush.msra.mxu0 0.0
    %107 = vmatpush.msra.mxu0 0.0
    %108 = vmatpush.msra.mxu0 0.0
    %109 = vmatpush.msra.mxu0 0.0
    %110 = vmatpush.msra.mxu0 0.0
    %111 = vmatpush.msra.mxu0 0.0
    %v112 = vand.u32 %v44, 4294901760
    %113 = vmatpush.msra.mxu0 %v112
    %v114 = vand.u32 %v62, 4294901760
    %v115 = vsub.f32 %v62, %v114
    %v116 = vand.u32 %v115, 4294901760
    %v117 = vsub.f32 %v115, %v116
    %v118 = vand.u32 %v117, 4294901760
    %119 = vmatmul.f32.gmra.mxu0 %v118
    %v120 = vpop.f32.mrf.mxu0
    %v121 = vadd.f32 0.0, %v120
    %v122 = vand.u32 %v65, 4294901760
    %v123 = vsub.f32 %v65, %v122
    %v124 = vand.u32 %v123, 4294901760
    %v125 = vsub.f32 %v123, %v124
    %v126 = vand.u32 %v125, 4294901760
    %127 = vmatmul.f32.gmra.mxu0 %v126
    %v128 = vpop.f32.mrf.mxu0
    %v129 = vadd.f32 0.0, %v128
    %v130 = vand.u32 %v68, 4294901760
    %v131 = vsub.f32 %v68, %v130
    %v132 = vand.u32 %v131, 4294901760
    %v133 = vsub.f32 %v131, %v132
    %v134 = vand.u32 %v133, 4294901760
    %135 = vmatmul.f32.gmra.mxu0 %v134
    %v136 = vpop.f32.mrf.mxu0
    %v137 = vadd.f32 0.0, %v136
    %v138 = vand.u32 %v71, 4294901760
    %v139 = vsub.f32 %v71, %v138
    %v140 = vand.u32 %v139, 4294901760
    %v141 = vsub.f32 %v139, %v140
    %v142 = vand.u32 %v141, 4294901760
    %143 = vmatmul.f32.gmra.mxu0 %v142
    %v144 = vpop.f32.mrf.mxu0
    %v145 = vadd.f32 0.0, %v144
    %v146 = vand.u32 %v74, 4294901760
    %v147 = vsub.f32 %v74, %v146
    %v148 = vand.u32 %v147, 4294901760
    %v149 = vsub.f32 %v147, %v148
    %v150 = vand.u32 %v149, 4294901760
    %151 = vmatmul.f32.gmra.mxu0 %v150
    %v152 = vpop.f32.mrf.mxu0
    %v153 = vadd.f32 0.0, %v152
    %v154 = vand.u32 %v77, 4294901760
    %v155 = vsub.f32 %v77, %v154
    %v156 = vand.u32 %v155, 4294901760
    %v157 = vsub.f32 %v155, %v156
    %v158 = vand.u32 %v157, 4294901760
    %159 = vmatmul.f32.gmra.mxu0 %v158
    %v160 = vpop.f32.mrf.mxu0
    %v161 = vadd.f32 0.0, %v160
    %v162 = vand.u32 %v80, 4294901760
    %v163 = vsub.f32 %v80, %v162
    %v164 = vand.u32 %v163, 4294901760
    %v165 = vsub.f32 %v163, %v164
    %v166 = vand.u32 %v165, 4294901760
    %167 = vmatmul.f32.gmra.mxu0 %v166
    %v168 = vpop.f32.mrf.mxu0
    %v169 = vadd.f32 0.0, %v168
    %v170 = vand.u32 %v83, 4294901760
    %v171 = vsub.f32 %v83, %v170
    %v172 = vand.u32 %v171, 4294901760
    %v173 = vsub.f32 %v171, %v172
    %v174 = vand.u32 %v173, 4294901760
    %175 = vmatmul.f32.gmra.mxu0 %v174
    %v176 = vpop.f32.mrf.mxu0
    %v177 = vadd.f32 0.0, %v176
    %v178 = vand.u32 %v86, 4294901760
    %v179 = vsub.f32 %v86, %v178
    %v180 = vand.u32 %v179, 4294901760
    %v181 = vsub.f32 %v179, %v180
    %v182 = vand.u32 %v181, 4294901760
    %183 = vmatmul.f32.gmra.mxu0 %v182
    %v184 = vpop.f32.mrf.mxu0
    %v185 = vadd.f32 0.0, %v184
    %v186 = vand.u32 %v89, 4294901760
    %v187 = vsub.f32 %v89, %v186
    %v188 = vand.u32 %v187, 4294901760
    %v189 = vsub.f32 %v187, %v188
    %v190 = vand.u32 %v189, 4294901760
    %191 = vmatmul.f32.gmra.mxu0 %v190
    %v192 = vpop.f32.mrf.mxu0
    %v193 = vadd.f32 0.0, %v192
    %v194 = vand.u32 %v92, 4294901760
    %v195 = vsub.f32 %v92, %v194
    %v196 = vand.u32 %v195, 4294901760
    %v197 = vsub.f32 %v195, %v196
    %v198 = vand.u32 %v197, 4294901760
    %199 = vmatmul.f32.gmra.mxu0 %v198
    %v200 = vpop.f32.mrf.mxu0
    %v201 = vadd.f32 0.0, %v200
    %v202 = vand.u32 %v95, 4294901760
    %v203 = vsub.f32 %v95, %v202
    %v204 = vand.u32 %v203, 4294901760
    %v205 = vsub.f32 %v203, %v204
    %v206 = vand.u32 %v205, 4294901760
    %207 = vmatmul.f32.gmra.mxu0 %v206
    %v208 = vpop.f32.mrf.mxu0
    %v209 = vadd.f32 0.0, %v208
    %210 = vdwg.mxu0
    %211 = vmatpush.msra.mxu0 0.0
    %212 = vmatpush.msra.mxu0 0.0
    %213 = vmatpush.msra.mxu0 0.0
    %214 = vmatpush.msra.mxu0 0.0
    %215 = vmatpush.msra.mxu0 0.0
    %216 = vmatpush.msra.mxu0 0.0
    %217 = vmatpush.msra.mxu0 0.0
    %218 = vmatpush.msra.mxu0 0.0
    %219 = vmatpush.msra.mxu0 0.0
    %220 = vmatpush.msra.mxu0 0.0
    %221 = vmatpush.msra.mxu0 0.0
    %222 = vmatpush.msra.mxu0 0.0
    %223 = vmatpush.msra.mxu0 0.0
    %224 = vmatpush.msra.mxu0 0.0
    %225 = vmatpush.msra.mxu0 0.0
    %v226 = vand.u32 %v44, 4294901760
    %v227 = vsub.f32 %v44, %v226
    %v228 = vand.u32 %v227, 4294901760
    %v229 = vsub.f32 %v227, %v228
    %v230 = vand.u32 %v229, 4294901760
    %231 = vmatpush.msra.mxu0 %v230
    %v232 = vand.u32 %v62, 4294901760
    %233 = vmatmul.f32.gmra.mxu0 %v232
    %v234 = vpop.f32.mrf.mxu0
    %v235 = vadd.f32 %v121, %v234
    %v236 = vand.u32 %v65, 4294901760
    %237 = vmatmul.f32.gmra.mxu0 %v236
    %v238 = vpop.f32.mrf.mxu0
    %v239 = vadd.f32 %v129, %v238
    %v240 = vand.u32 %v68, 4294901760
    %241 = vmatmul.f32.gmra.mxu0 %v240
    %v242 = vpop.f32.mrf.mxu0
    %v243 = vadd.f32 %v137, %v242
    %v244 = vand.u32 %v71, 4294901760
    %245 = vmatmul.f32.gmra.mxu0 %v244
    %v246 = vpop.f32.mrf.mxu0
    %v247 = vadd.f32 %v145, %v246
    %v248 = vand.u32 %v74, 4294901760
    %249 = vmatmul.f32.gmra.mxu0 %v248
    %v250 = vpop.f32.mrf.mxu0
    %v251 = vadd.f32 %v153, %v250
    %v252 = vand.u32 %v77, 4294901760
    %253 = vmatmul.f32.gmra.mxu0 %v252
    %v254 = vpop.f32.mrf.mxu0
    %v255 = vadd.f32 %v161, %v254
    %v256 = vand.u32 %v80, 4294901760
    %257 = vmatmul.f32.gmra.mxu0 %v256
    %v258 = vpop.f32.mrf.mxu0
    %v259 = vadd.f32 %v169, %v258
    %v260 = vand.u32 %v83, 4294901760
    %261 = vmatmul.f32.gmra.mxu0 %v260
    %v262 = vpop.f32.mrf.mxu0
    %v263 = vadd.f32 %v177, %v262
    %v264 = vand.u32 %v86, 4294901760
    %265 = vmatmul.f32.gmra.mxu0 %v264
    %v266 = vpop.f32.mrf.mxu0
    %v267 = vadd.f32 %v185, %v266
    %v268 = vand.u32 %v89, 4294901760
    %269 = vmatmul.f32.gmra.mxu0 %v268
    %v270 = vpop.f32.mrf.mxu0
    %v271 = vadd.f32 %v193, %v270
    %v272 = vand.u32 %v92, 4294901760
    %273 = vmatmul.f32.gmra.mxu0 %v272
    %v274 = vpop.f32.mrf.mxu0
    %v275 = vadd.f32 %v201, %v274
    %v276 = vand.u32 %v95, 4294901760
    %277 = vmatmul.f32.gmra.mxu0 %v276
    %v278 = vpop.f32.mrf.mxu0
    %v279 = vadd.f32 %v209, %v278
    %280 = vdwg.mxu0
    %281 = vmatpush.msra.mxu0 0.0
    %282 = vmatpush.msra.mxu0 0.0
    %283 = vmatpush.msra.mxu0 0.0
    %284 = vmatpush.msra.mxu0 0.0
    %285 = vmatpush.msra.mxu0 0.0
    %286 = vmatpush.msra.mxu0 0.0
    %287 = vmatpush.msra.mxu0 0.0
    %288 = vmatpush.msra.mxu0 0.0
    %289 = vmatpush.msra.mxu0 0.0
    %290 = vmatpush.msra.mxu0 0.0
    %291 = vmatpush.msra.mxu0 0.0
    %292 = vmatpush.msra.mxu0 0.0
    %293 = vmatpush.msra.mxu0 0.0
    %294 = vmatpush.msra.mxu0 0.0
    %295 = vmatpush.msra.mxu0 0.0
    %v296 = vand.u32 %v44, 4294901760
    %v297 = vsub.f32 %v44, %v296
    %298 = vmatpush.msra.mxu0 %v297
    %v299 = vand.u32 %v62, 4294901760
    %v300 = vsub.f32 %v62, %v299
    %301 = vmatmul.f32.gmra.mxu0 %v300
    %v302 = vpop.f32.mrf.mxu0
    %v303 = vadd.f32 %v235, %v302
    %v304 = vand.u32 %v65, 4294901760
    %v305 = vsub.f32 %v65, %v304
    %306 = vmatmul.f32.gmra.mxu0 %v305
    %v307 = vpop.f32.mrf.mxu0
    %v308 = vadd.f32 %v239, %v307
    %v309 = vand.u32 %v68, 4294901760
    %v310 = vsub.f32 %v68, %v309
    %311 = vmatmul.f32.gmra.mxu0 %v310
    %v312 = vpop.f32.mrf.mxu0
    %v313 = vadd.f32 %v243, %v312
    %v314 = vand.u32 %v71, 4294901760
    %v315 = vsub.f32 %v71, %v314
    %316 = vmatmul.f32.gmra.mxu0 %v315
    %v317 = vpop.f32.mrf.mxu0
    %v318 = vadd.f32 %v247, %v317
    %v319 = vand.u32 %v74, 4294901760
    %v320 = vsub.f32 %v74, %v319
    %321 = vmatmul.f32.gmra.mxu0 %v320
    %v322 = vpop.f32.mrf.mxu0
    %v323 = vadd.f32 %v251, %v322
    %v324 = vand.u32 %v77, 4294901760
    %v325 = vsub.f32 %v77, %v324
    %326 = vmatmul.f32.gmra.mxu0 %v325
    %v327 = vpop.f32.mrf.mxu0
    %v328 = vadd.f32 %v255, %v327
    %v329 = vand.u32 %v80, 4294901760
    %v330 = vsub.f32 %v80, %v329
    %331 = vmatmul.f32.gmra.mxu0 %v330
    %v332 = vpop.f32.mrf.mxu0
    %v333 = vadd.f32 %v259, %v332
    %v334 = vand.u32 %v83, 4294901760
    %v335 = vsub.f32 %v83, %v334
    %336 = vmatmul.f32.gmra.mxu0 %v335
    %v337 = vpop.f32.mrf.mxu0
    %v338 = vadd.f32 %v263, %v337
    %v339 = vand.u32 %v86, 4294901760
    %v340 = vsub.f32 %v86, %v339
    %341 = vmatmul.f32.gmra.mxu0 %v340
    %v342 = vpop.f32.mrf.mxu0
    %v343 = vadd.f32 %v267, %v342
    %v344 = vand.u32 %v89, 4294901760
    %v345 = vsub.f32 %v89, %v344
    %346 = vmatmul.f32.gmra.mxu0 %v345
    %v347 = vpop.f32.mrf.mxu0
    %v348 = vadd.f32 %v271, %v347
    %v349 = vand.u32 %v92, 4294901760
    %v350 = vsub.f32 %v92, %v349
    %351 = vmatmul.f32.gmra.mxu0 %v350
    %v352 = vpop.f32.mrf.mxu0
    %v353 = vadd.f32 %v275, %v352
    %v354 = vand.u32 %v95, 4294901760
    %v355 = vsub.f32 %v95, %v354
    %356 = vmatmul.f32.gmra.mxu0 %v355
    %v357 = vpop.f32.mrf.mxu0
    %v358 = vadd.f32 %v279, %v357
    %359 = vdwg.mxu0
    %360 = vmatpush.msra.mxu0 0.0
    %361 = vmatpush.msra.mxu0 0.0
    %362 = vmatpush.msra.mxu0 0.0
    %363 = vmatpush.msra.mxu0 0.0
    %364 = vmatpush.msra.mxu0 0.0
    %365 = vmatpush.msra.mxu0 0.0
    %366 = vmatpush.msra.mxu0 0.0
    %367 = vmatpush.msra.mxu0 0.0
    %368 = vmatpush.msra.mxu0 0.0
    %369 = vmatpush.msra.mxu0 0.0
    %370 = vmatpush.msra.mxu0 0.0
    %371 = vmatpush.msra.mxu0 0.0
    %372 = vmatpush.msra.mxu0 0.0
    %373 = vmatpush.msra.mxu0 0.0
    %374 = vmatpush.msra.mxu0 0.0
    %v375 = vand.u32 %v44, 4294901760
    %376 = vmatpush.msra.mxu0 %v375
    %v377 = vand.u32 %v62, 4294901760
    %v378 = vsub.f32 %v62, %v377
    %v379 = vand.u32 %v378, 4294901760
    %380 = vmatmul.f32.gmra.mxu0 %v379
    %v381 = vpop.f32.mrf.mxu0
    %v382 = vadd.f32 %v303, %v381
    %v383 = vand.u32 %v65, 4294901760
    %v384 = vsub.f32 %v65, %v383
    %v385 = vand.u32 %v384, 4294901760
    %386 = vmatmul.f32.gmra.mxu0 %v385
    %v387 = vpop.f32.mrf.mxu0
    %v388 = vadd.f32 %v308, %v387
    %v389 = vand.u32 %v68, 4294901760
    %v390 = vsub.f32 %v68, %v389
    %v391 = vand.u32 %v390, 4294901760
    %392 = vmatmul.f32.gmra.mxu0 %v391
    %v393 = vpop.f32.mrf.mxu0
    %v394 = vadd.f32 %v313, %v393
    %v395 = vand.u32 %v71, 4294901760
    %v396 = vsub.f32 %v71, %v395
    %v397 = vand.u32 %v396, 4294901760
    %398 = vmatmul.f32.gmra.mxu0 %v397
    %v399 = vpop.f32.mrf.mxu0
    %v400 = vadd.f32 %v318, %v399
    %v401 = vand.u32 %v74, 4294901760
    %v402 = vsub.f32 %v74, %v401
    %v403 = vand.u32 %v402, 4294901760
    %404 = vmatmul.f32.gmra.mxu0 %v403
    %v405 = vpop.f32.mrf.mxu0
    %v406 = vadd.f32 %v323, %v405
    %v407 = vand.u32 %v77, 4294901760
    %v408 = vsub.f32 %v77, %v407
    %v409 = vand.u32 %v408, 4294901760
    %410 = vmatmul.f32.gmra.mxu0 %v409
    %v411 = vpop.f32.mrf.mxu0
    %v412 = vadd.f32 %v328, %v411
    %v413 = vand.u32 %v80, 4294901760
    %v414 = vsub.f32 %v80, %v413
    %v415 = vand.u32 %v414, 4294901760
    %416 = vmatmul.f32.gmra.mxu0 %v415
    %v417 = vpop.f32.mrf.mxu0
    %v418 = vadd.f32 %v333, %v417
    %v419 = vand.u32 %v83, 4294901760
    %v420 = vsub.f32 %v83, %v419
    %v421 = vand.u32 %v420, 4294901760
    %422 = vmatmul.f32.gmra.mxu0 %v421
    %v423 = vpop.f32.mrf.mxu0
    %v424 = vadd.f32 %v338, %v423
    %v425 = vand.u32 %v86, 4294901760
    %v426 = vsub.f32 %v86, %v425
    %v427 = vand.u32 %v426, 4294901760
    %428 = vmatmul.f32.gmra.mxu0 %v427
    %v429 = vpop.f32.mrf.mxu0
    %v430 = vadd.f32 %v343, %v429
    %v431 = vand.u32 %v89, 4294901760
    %v432 = vsub.f32 %v89, %v431
    %v433 = vand.u32 %v432, 4294901760
    %434 = vmatmul.f32.gmra.mxu0 %v433
    %v435 = vpop.f32.mrf.mxu0
    %v436 = vadd.f32 %v348, %v435
    %v437 = vand.u32 %v92, 4294901760
    %v438 = vsub.f32 %v92, %v437
    %v439 = vand.u32 %v438, 4294901760
    %440 = vmatmul.f32.gmra.mxu0 %v439
    %v441 = vpop.f32.mrf.mxu0
    %v442 = vadd.f32 %v353, %v441
    %v443 = vand.u32 %v95, 4294901760
    %v444 = vsub.f32 %v95, %v443
    %v445 = vand.u32 %v444, 4294901760
    %446 = vmatmul.f32.gmra.mxu0 %v445
    %v447 = vpop.f32.mrf.mxu0
    %v448 = vadd.f32 %v358, %v447
    %449 = vdwg.mxu0
    %450 = vmatpush.msra.mxu0 0.0
    %451 = vmatpush.msra.mxu0 0.0
    %452 = vmatpush.msra.mxu0 0.0
    %453 = vmatpush.msra.mxu0 0.0
    %454 = vmatpush.msra.mxu0 0.0
    %455 = vmatpush.msra.mxu0 0.0
    %456 = vmatpush.msra.mxu0 0.0
    %457 = vmatpush.msra.mxu0 0.0
    %458 = vmatpush.msra.mxu0 0.0
    %459 = vmatpush.msra.mxu0 0.0
    %460 = vmatpush.msra.mxu0 0.0
    %461 = vmatpush.msra.mxu0 0.0
    %462 = vmatpush.msra.mxu0 0.0
    %463 = vmatpush.msra.mxu0 0.0
    %464 = vmatpush.msra.mxu0 0.0
    %v465 = vand.u32 %v44, 4294901760
    %v466 = vsub.f32 %v44, %v465
    %v467 = vand.u32 %v466, 4294901760
    %468 = vmatpush.msra.mxu0 %v467
    %v469 = vand.u32 %v62, 4294901760
    %470 = vmatmul.f32.gmra.mxu0 %v469
    %v471 = vpop.f32.mrf.mxu0
    %v472 = vadd.f32 %v382, %v471
    %v473 = vand.u32 %v65, 4294901760
    %474 = vmatmul.f32.gmra.mxu0 %v473
    %v475 = vpop.f32.mrf.mxu0
    %v476 = vadd.f32 %v388, %v475
    %v477 = vand.u32 %v68, 4294901760
    %478 = vmatmul.f32.gmra.mxu0 %v477
    %v479 = vpop.f32.mrf.mxu0
    %v480 = vadd.f32 %v394, %v479
    %v481 = vand.u32 %v71, 4294901760
    %482 = vmatmul.f32.gmra.mxu0 %v481
    %v483 = vpop.f32.mrf.mxu0
    %v484 = vadd.f32 %v400, %v483
    %v485 = vand.u32 %v74, 4294901760
    %486 = vmatmul.f32.gmra.mxu0 %v485
    %v487 = vpop.f32.mrf.mxu0
    %v488 = vadd.f32 %v406, %v487
    %v489 = vand.u32 %v77, 4294901760
    %490 = vmatmul.f32.gmra.mxu0 %v489
    %v491 = vpop.f32.mrf.mxu0
    %v492 = vadd.f32 %v412, %v491
    %v493 = vand.u32 %v80, 4294901760
    %494 = vmatmul.f32.gmra.mxu0 %v493
    %v495 = vpop.f32.mrf.mxu0
    %v496 = vadd.f32 %v418, %v495
    %v497 = vand.u32 %v83, 4294901760
    %498 = vmatmul.f32.gmra.mxu0 %v497
    %v499 = vpop.f32.mrf.mxu0
    %v500 = vadd.f32 %v424, %v499
    %v501 = vand.u32 %v86, 4294901760
    %502 = vmatmul.f32.gmra.mxu0 %v501
    %v503 = vpop.f32.mrf.mxu0
    %v504 = vadd.f32 %v430, %v503
    %v505 = vand.u32 %v89, 4294901760
    %506 = vmatmul.f32.gmra.mxu0 %v505
    %v507 = vpop.f32.mrf.mxu0
    %v508 = vadd.f32 %v436, %v507
    %v509 = vand.u32 %v92, 4294901760
    %510 = vmatmul.f32.gmra.mxu0 %v509
    %v511 = vpop.f32.mrf.mxu0
    %v512 = vadd.f32 %v442, %v511
    %v513 = vand.u32 %v95, 4294901760
    %514 = vmatmul.f32.gmra.mxu0 %v513
    %v515 = vpop.f32.mrf.mxu0
    %v516 = vadd.f32 %v448, %v515
    %517 = vdwg.mxu0
    %518 = vmatpush.msra.mxu0 0.0
    %519 = vmatpush.msra.mxu0 0.0
    %520 = vmatpush.msra.mxu0 0.0
    %521 = vmatpush.msra.mxu0 0.0
    %522 = vmatpush.msra.mxu0 0.0
    %523 = vmatpush.msra.mxu0 0.0
    %524 = vmatpush.msra.mxu0 0.0
    %525 = vmatpush.msra.mxu0 0.0
    %526 = vmatpush.msra.mxu0 0.0
    %527 = vmatpush.msra.mxu0 0.0
    %528 = vmatpush.msra.mxu0 0.0
    %529 = vmatpush.msra.mxu0 0.0
    %530 = vmatpush.msra.mxu0 0.0
    %531 = vmatpush.msra.mxu0 0.0
    %532 = vmatpush.msra.mxu0 0.0
    %v533 = vand.u32 %v44, 4294901760
    %534 = vmatpush.msra.mxu0 %v533
    %v535 = vand.u32 %v62, 4294901760
    %536 = vmatmul.f32.gmra.mxu0 %v535
    %v537 = vpop.f32.mrf.mxu0
    %v538 = vadd.f32 %v472, %v537
    %v539 = vand.u32 %v65, 4294901760
    %540 = vmatmul.f32.gmra.mxu0 %v539
    %v541 = vpop.f32.mrf.mxu0
    %v542 = vadd.f32 %v476, %v541
    %v543 = vand.u32 %v68, 4294901760
    %544 = vmatmul.f32.gmra.mxu0 %v543
    %v545 = vpop.f32.mrf.mxu0
    %v546 = vadd.f32 %v480, %v545
    %v547 = vand.u32 %v71, 4294901760
    %548 = vmatmul.f32.gmra.mxu0 %v547
    %v549 = vpop.f32.mrf.mxu0
    %v550 = vadd.f32 %v484, %v549
    %v551 = vand.u32 %v74, 4294901760
    %552 = vmatmul.f32.gmra.mxu0 %v551
    %v553 = vpop.f32.mrf.mxu0
    %v554 = vadd.f32 %v488, %v553
    %v555 = vand.u32 %v77, 4294901760
    %556 = vmatmul.f32.gmra.mxu0 %v555
    %v557 = vpop.f32.mrf.mxu0
    %v558 = vadd.f32 %v492, %v557
    %v559 = vand.u32 %v80, 4294901760
    %560 = vmatmul.f32.gmra.mxu0 %v559
    %v561 = vpop.f32.mrf.mxu0
    %v562 = vadd.f32 %v496, %v561
    %v563 = vand.u32 %v83, 4294901760
    %564 = vmatmul.f32.gmra.mxu0 %v563
    %v565 = vpop.f32.mrf.mxu0
    %v566 = vadd.f32 %v500, %v565
    %v567 = vand.u32 %v86, 4294901760
    %568 = vmatmul.f32.gmra.mxu0 %v567
    %v569 = vpop.f32.mrf.mxu0
    %v570 = vadd.f32 %v504, %v569
    %v571 = vand.u32 %v89, 4294901760
    %572 = vmatmul.f32.gmra.mxu0 %v571
    %v573 = vpop.f32.mrf.mxu0
    %v574 = vadd.f32 %v508, %v573
    %v575 = vand.u32 %v92, 4294901760
    %576 = vmatmul.f32.gmra.mxu0 %v575
    %v577 = vpop.f32.mrf.mxu0
    %v578 = vadd.f32 %v512, %v577
    %v579 = vand.u32 %v95, 4294901760
    %580 = vmatmul.f32.gmra.mxu0 %v579
    %v581 = vpop.f32.mrf.mxu0
    %v582 = vadd.f32 %v516, %v581
    %583 = vdwg.mxu0
    %584 = vmatpush.msra.mxu0 0.0
    %585 = vmatpush.msra.mxu0 0.0
    %586 = vmatpush.msra.mxu0 0.0
    %587 = vmatpush.msra.mxu0 0.0
    %588 = vmatpush.msra.mxu0 0.0
    %589 = vmatpush.msra.mxu0 0.0
    %590 = vmatpush.msra.mxu0 0.0
    %591 = vmatpush.msra.mxu0 0.0
    %592 = vmatpush.msra.mxu0 0.0
    %593 = vmatpush.msra.mxu0 0.0
    %594 = vmatpush.msra.mxu0 0.0
    %595 = vmatpush.msra.mxu0 0.0
    %596 = vmatpush.msra.mxu0 0.0
    %597 = vmatpush.msra.mxu0 0.0
    %598 = vmatpush.msra.mxu0 0.0
    %v599 = vand.u32 %v45, 4294901760
    %600 = vmatpush.msra.mxu0 %v599
    %v601 = vand.u32 %v62, 4294901760
    %v602 = vsub.f32 %v62, %v601
    %v603 = vand.u32 %v602, 4294901760
    %v604 = vsub.f32 %v602, %v603
    %v605 = vand.u32 %v604, 4294901760
    %606 = vmatmul.f32.gmra.mxu0 %v605
    %v607 = vpop.f32.mrf.mxu0
    %v608 = vadd.f32 0.0, %v607
    %v609 = vand.u32 %v65, 4294901760
    %v610 = vsub.f32 %v65, %v609
    %v611 = vand.u32 %v610, 4294901760
    %v612 = vsub.f32 %v610, %v611
    %v613 = vand.u32 %v612, 4294901760
    %614 = vmatmul.f32.gmra.mxu0 %v613
    %v615 = vpop.f32.mrf.mxu0
    %v616 = vadd.f32 0.0, %v615
    %v617 = vand.u32 %v68, 4294901760
    %v618 = vsub.f32 %v68, %v617
    %v619 = vand.u32 %v618, 4294901760
    %v620 = vsub.f32 %v618, %v619
    %v621 = vand.u32 %v620, 4294901760
    %622 = vmatmul.f32.gmra.mxu0 %v621
    %v623 = vpop.f32.mrf.mxu0
    %v624 = vadd.f32 0.0, %v623
    %v625 = vand.u32 %v71, 4294901760
    %v626 = vsub.f32 %v71, %v625
    %v627 = vand.u32 %v626, 4294901760
    %v628 = vsub.f32 %v626, %v627
    %v629 = vand.u32 %v628, 4294901760
    %630 = vmatmul.f32.gmra.mxu0 %v629
    %v631 = vpop.f32.mrf.mxu0
    %v632 = vadd.f32 0.0, %v631
    %v633 = vand.u32 %v74, 4294901760
    %v634 = vsub.f32 %v74, %v633
    %v635 = vand.u32 %v634, 4294901760
    %v636 = vsub.f32 %v634, %v635
    %v637 = vand.u32 %v636, 4294901760
    %638 = vmatmul.f32.gmra.mxu0 %v637
    %v639 = vpop.f32.mrf.mxu0
    %v640 = vadd.f32 0.0, %v639
    %v641 = vand.u32 %v77, 4294901760
    %v642 = vsub.f32 %v77, %v641
    %v643 = vand.u32 %v642, 4294901760
    %v644 = vsub.f32 %v642, %v643
    %v645 = vand.u32 %v644, 4294901760
    %646 = vmatmul.f32.gmra.mxu0 %v645
    %v647 = vpop.f32.mrf.mxu0
    %v648 = vadd.f32 0.0, %v647
    %v649 = vand.u32 %v80, 4294901760
    %v650 = vsub.f32 %v80, %v649
    %v651 = vand.u32 %v650, 4294901760
    %v652 = vsub.f32 %v650, %v651
    %v653 = vand.u32 %v652, 4294901760
    %654 = vmatmul.f32.gmra.mxu0 %v653
    %v655 = vpop.f32.mrf.mxu0
    %v656 = vadd.f32 0.0, %v655
    %v657 = vand.u32 %v83, 4294901760
    %v658 = vsub.f32 %v83, %v657
    %v659 = vand.u32 %v658, 4294901760
    %v660 = vsub.f32 %v658, %v659
    %v661 = vand.u32 %v660, 4294901760
    %662 = vmatmul.f32.gmra.mxu0 %v661
    %v663 = vpop.f32.mrf.mxu0
    %v664 = vadd.f32 0.0, %v663
    %v665 = vand.u32 %v86, 4294901760
    %v666 = vsub.f32 %v86, %v665
    %v667 = vand.u32 %v666, 4294901760
    %v668 = vsub.f32 %v666, %v667
    %v669 = vand.u32 %v668, 4294901760
    %670 = vmatmul.f32.gmra.mxu0 %v669
    %v671 = vpop.f32.mrf.mxu0
    %v672 = vadd.f32 0.0, %v671
    %v673 = vand.u32 %v89, 4294901760
    %v674 = vsub.f32 %v89, %v673
    %v675 = vand.u32 %v674, 4294901760
    %v676 = vsub.f32 %v674, %v675
    %v677 = vand.u32 %v676, 4294901760
    %678 = vmatmul.f32.gmra.mxu0 %v677
    %v679 = vpop.f32.mrf.mxu0
    %v680 = vadd.f32 0.0, %v679
    %v681 = vand.u32 %v92, 4294901760
    %v682 = vsub.f32 %v92, %v681
    %v683 = vand.u32 %v682, 4294901760
    %v684 = vsub.f32 %v682, %v683
    %v685 = vand.u32 %v684, 4294901760
    %686 = vmatmul.f32.gmra.mxu0 %v685
    %v687 = vpop.f32.mrf.mxu0
    %v688 = vadd.f32 0.0, %v687
    %v689 = vand.u32 %v95, 4294901760
    %v690 = vsub.f32 %v95, %v689
    %v691 = vand.u32 %v690, 4294901760
    %v692 = vsub.f32 %v690, %v691
    %v693 = vand.u32 %v692, 4294901760
    %694 = vmatmul.f32.gmra.mxu0 %v693
    %v695 = vpop.f32.mrf.mxu0
    %v696 = vadd.f32 0.0, %v695
    %697 = vdwg.mxu0
    %698 = vmatpush.msra.mxu0 0.0
    %699 = vmatpush.msra.mxu0 0.0
    %700 = vmatpush.msra.mxu0 0.0
    %701 = vmatpush.msra.mxu0 0.0
    %702 = vmatpush.msra.mxu0 0.0
    %703 = vmatpush.msra.mxu0 0.0
    %704 = vmatpush.msra.mxu0 0.0
    %705 = vmatpush.msra.mxu0 0.0
    %706 = vmatpush.msra.mxu0 0.0
    %707 = vmatpush.msra.mxu0 0.0
    %708 = vmatpush.msra.mxu0 0.0
    %709 = vmatpush.msra.mxu0 0.0
    %710 = vmatpush.msra.mxu0 0.0
    %711 = vmatpush.msra.mxu0 0.0
    %712 = vmatpush.msra.mxu0 0.0
    %v713 = vand.u32 %v45, 4294901760
    %v714 = vsub.f32 %v45, %v713
    %v715 = vand.u32 %v714, 4294901760
    %v716 = vsub.f32 %v714, %v715
    %v717 = vand.u32 %v716, 4294901760
    %718 = vmatpush.msra.mxu0 %v717
    %v719 = vand.u32 %v62, 4294901760
    %720 = vmatmul.f32.gmra.mxu0 %v719
    %v721 = vpop.f32.mrf.mxu0
    %v722 = vadd.f32 %v608, %v721
    %v723 = vand.u32 %v65, 4294901760
    %724 = vmatmul.f32.gmra.mxu0 %v723
    %v725 = vpop.f32.mrf.mxu0
    %v726 = vadd.f32 %v616, %v725
    %v727 = vand.u32 %v68, 4294901760
    %728 = vmatmul.f32.gmra.mxu0 %v727
    %v729 = vpop.f32.mrf.mxu0
    %v730 = vadd.f32 %v624, %v729
    %v731 = vand.u32 %v71, 4294901760
    %732 = vmatmul.f32.gmra.mxu0 %v731
    %v733 = vpop.f32.mrf.mxu0
    %v734 = vadd.f32 %v632, %v733
    %v735 = vand.u32 %v74, 4294901760
    %736 = vmatmul.f32.gmra.mxu0 %v735
    %v737 = vpop.f32.mrf.mxu0
    %v738 = vadd.f32 %v640, %v737
    %v739 = vand.u32 %v77, 4294901760
    %740 = vmatmul.f32.gmra.mxu0 %v739
    %v741 = vpop.f32.mrf.mxu0
    %v742 = vadd.f32 %v648, %v741
    %v743 = vand.u32 %v80, 4294901760
    %744 = vmatmul.f32.gmra.mxu0 %v743
    %v745 = vpop.f32.mrf.mxu0
    %v746 = vadd.f32 %v656, %v745
    %v747 = vand.u32 %v83, 4294901760
    %748 = vmatmul.f32.gmra.mxu0 %v747
    %v749 = vpop.f32.mrf.mxu0
    %v750 = vadd.f32 %v664, %v749
    %v751 = vand.u32 %v86, 4294901760
    %752 = vmatmul.f32.gmra.mxu0 %v751
    %v753 = vpop.f32.mrf.mxu0
    %v754 = vadd.f32 %v672, %v753
    %v755 = vand.u32 %v89, 4294901760
    %756 = vmatmul.f32.gmra.mxu0 %v755
    %v757 = vpop.f32.mrf.mxu0
    %v758 = vadd.f32 %v680, %v757
    %v759 = vand.u32 %v92, 4294901760
    %760 = vmatmul.f32.gmra.mxu0 %v759
    %v761 = vpop.f32.mrf.mxu0
    %v762 = vadd.f32 %v688, %v761
    %v763 = vand.u32 %v95, 4294901760
    %764 = vmatmul.f32.gmra.mxu0 %v763
    %v765 = vpop.f32.mrf.mxu0
    %v766 = vadd.f32 %v696, %v765
    %767 = vdwg.mxu0
    %768 = vmatpush.msra.mxu0 0.0
    %769 = vmatpush.msra.mxu0 0.0
    %770 = vmatpush.msra.mxu0 0.0
    %771 = vmatpush.msra.mxu0 0.0
    %772 = vmatpush.msra.mxu0 0.0
    %773 = vmatpush.msra.mxu0 0.0
    %774 = vmatpush.msra.mxu0 0.0
    %775 = vmatpush.msra.mxu0 0.0
    %776 = vmatpush.msra.mxu0 0.0
    %777 = vmatpush.msra.mxu0 0.0
    %778 = vmatpush.msra.mxu0 0.0
    %779 = vmatpush.msra.mxu0 0.0
    %780 = vmatpush.msra.mxu0 0.0
    %781 = vmatpush.msra.mxu0 0.0
    %782 = vmatpush.msra.mxu0 0.0
    %v783 = vand.u32 %v45, 4294901760
    %v784 = vsub.f32 %v45, %v783
    %785 = vmatpush.msra.mxu0 %v784
    %v786 = vand.u32 %v62, 4294901760
    %v787 = vsub.f32 %v62, %v786
    %788 = vmatmul.f32.gmra.mxu0 %v787
    %v789 = vpop.f32.mrf.mxu0
    %v790 = vadd.f32 %v722, %v789
    %v791 = vand.u32 %v65, 4294901760
    %v792 = vsub.f32 %v65, %v791
    %793 = vmatmul.f32.gmra.mxu0 %v792
    %v794 = vpop.f32.mrf.mxu0
    %v795 = vadd.f32 %v726, %v794
    %v796 = vand.u32 %v68, 4294901760
    %v797 = vsub.f32 %v68, %v796
    %798 = vmatmul.f32.gmra.mxu0 %v797
    %v799 = vpop.f32.mrf.mxu0
    %v800 = vadd.f32 %v730, %v799
    %v801 = vand.u32 %v71, 4294901760
    %v802 = vsub.f32 %v71, %v801
    %803 = vmatmul.f32.gmra.mxu0 %v802
    %v804 = vpop.f32.mrf.mxu0
    %v805 = vadd.f32 %v734, %v804
    %v806 = vand.u32 %v74, 4294901760
    %v807 = vsub.f32 %v74, %v806
    %808 = vmatmul.f32.gmra.mxu0 %v807
    %v809 = vpop.f32.mrf.mxu0
    %v810 = vadd.f32 %v738, %v809
    %v811 = vand.u32 %v77, 4294901760
    %v812 = vsub.f32 %v77, %v811
    %813 = vmatmul.f32.gmra.mxu0 %v812
    %v814 = vpop.f32.mrf.mxu0
    %v815 = vadd.f32 %v742, %v814
    %v816 = vand.u32 %v80, 4294901760
    %v817 = vsub.f32 %v80, %v816
    %818 = vmatmul.f32.gmra.mxu0 %v817
    %v819 = vpop.f32.mrf.mxu0
    %v820 = vadd.f32 %v746, %v819
    %v821 = vand.u32 %v83, 4294901760
    %v822 = vsub.f32 %v83, %v821
    %823 = vmatmul.f32.gmra.mxu0 %v822
    %v824 = vpop.f32.mrf.mxu0
    %v825 = vadd.f32 %v750, %v824
    %v826 = vand.u32 %v86, 4294901760
    %v827 = vsub.f32 %v86, %v826
    %828 = vmatmul.f32.gmra.mxu0 %v827
    %v829 = vpop.f32.mrf.mxu0
    %v830 = vadd.f32 %v754, %v829
    %v831 = vand.u32 %v89, 4294901760
    %v832 = vsub.f32 %v89, %v831
    %833 = vmatmul.f32.gmra.mxu0 %v832
    %v834 = vpop.f32.mrf.mxu0
    %v835 = vadd.f32 %v758, %v834
    %v836 = vand.u32 %v92, 4294901760
    %v837 = vsub.f32 %v92, %v836
    %838 = vmatmul.f32.gmra.mxu0 %v837
    %v839 = vpop.f32.mrf.mxu0
    %v840 = vadd.f32 %v762, %v839
    %v841 = vand.u32 %v95, 4294901760
    %v842 = vsub.f32 %v95, %v841
    %843 = vmatmul.f32.gmra.mxu0 %v842
    %v844 = vpop.f32.mrf.mxu0
    %v845 = vadd.f32 %v766, %v844
    %846 = vdwg.mxu0
    %847 = vmatpush.msra.mxu0 0.0
    %848 = vmatpush.msra.mxu0 0.0
    %849 = vmatpush.msra.mxu0 0.0
    %850 = vmatpush.msra.mxu0 0.0
    %851 = vmatpush.msra.mxu0 0.0
    %852 = vmatpush.msra.mxu0 0.0
    %853 = vmatpush.msra.mxu0 0.0
    %854 = vmatpush.msra.mxu0 0.0
    %855 = vmatpush.msra.mxu0 0.0
    %856 = vmatpush.msra.mxu0 0.0
    %857 = vmatpush.msra.mxu0 0.0
    %858 = vmatpush.msra.mxu0 0.0
    %859 = vmatpush.msra.mxu0 0.0
    %860 = vmatpush.msra.mxu0 0.0
    %861 = vmatpush.msra.mxu0 0.0
    %v862 = vand.u32 %v45, 4294901760
    %863 = vmatpush.msra.mxu0 %v862
    %v864 = vand.u32 %v62, 4294901760
    %v865 = vsub.f32 %v62, %v864
    %v866 = vand.u32 %v865, 4294901760
    %867 = vmatmul.f32.gmra.mxu0 %v866
    %v868 = vpop.f32.mrf.mxu0
    %v869 = vadd.f32 %v790, %v868
    %v870 = vand.u32 %v65, 4294901760
    %v871 = vsub.f32 %v65, %v870
    %v872 = vand.u32 %v871, 4294901760
    %873 = vmatmul.f32.gmra.mxu0 %v872
    %v874 = vpop.f32.mrf.mxu0
    %v875 = vadd.f32 %v795, %v874
    %v876 = vand.u32 %v68, 4294901760
    %v877 = vsub.f32 %v68, %v876
    %v878 = vand.u32 %v877, 4294901760
    %879 = vmatmul.f32.gmra.mxu0 %v878
    %v880 = vpop.f32.mrf.mxu0
    %v881 = vadd.f32 %v800, %v880
    %v882 = vand.u32 %v71, 4294901760
    %v883 = vsub.f32 %v71, %v882
    %v884 = vand.u32 %v883, 4294901760
    %885 = vmatmul.f32.gmra.mxu0 %v884
    %v886 = vpop.f32.mrf.mxu0
    %v887 = vadd.f32 %v805, %v886
    %v888 = vand.u32 %v74, 4294901760
    %v889 = vsub.f32 %v74, %v888
    %v890 = vand.u32 %v889, 4294901760
    %891 = vmatmul.f32.gmra.mxu0 %v890
    %v892 = vpop.f32.mrf.mxu0
    %v893 = vadd.f32 %v810, %v892
    %v894 = vand.u32 %v77, 4294901760
    %v895 = vsub.f32 %v77, %v894
    %v896 = vand.u32 %v895, 4294901760
    %897 = vmatmul.f32.gmra.mxu0 %v896
    %v898 = vpop.f32.mrf.mxu0
    %v899 = vadd.f32 %v815, %v898
    %v900 = vand.u32 %v80, 4294901760
    %v901 = vsub.f32 %v80, %v900
    %v902 = vand.u32 %v901, 4294901760
    %903 = vmatmul.f32.gmra.mxu0 %v902
    %v904 = vpop.f32.mrf.mxu0
    %v905 = vadd.f32 %v820, %v904
    %v906 = vand.u32 %v83, 4294901760
    %v907 = vsub.f32 %v83, %v906
    %v908 = vand.u32 %v907, 4294901760
    %909 = vmatmul.f32.gmra.mxu0 %v908
    %v910 = vpop.f32.mrf.mxu0
    %v911 = vadd.f32 %v825, %v910
    %v912 = vand.u32 %v86, 4294901760
    %v913 = vsub.f32 %v86, %v912
    %v914 = vand.u32 %v913, 4294901760
    %915 = vmatmul.f32.gmra.mxu0 %v914
    %v916 = vpop.f32.mrf.mxu0
    %v917 = vadd.f32 %v830, %v916
    %v918 = vand.u32 %v89, 4294901760
    %v919 = vsub.f32 %v89, %v918
    %v920 = vand.u32 %v919, 4294901760
    %921 = vmatmul.f32.gmra.mxu0 %v920
    %v922 = vpop.f32.mrf.mxu0
    %v923 = vadd.f32 %v835, %v922
    %v924 = vand.u32 %v92, 4294901760
    %v925 = vsub.f32 %v92, %v924
    %v926 = vand.u32 %v925, 4294901760
    %927 = vmatmul.f32.gmra.mxu0 %v926
    %v928 = vpop.f32.mrf.mxu0
    %v929 = vadd.f32 %v840, %v928
    %v930 = vand.u32 %v95, 4294901760
    %v931 = vsub.f32 %v95, %v930
    %v932 = vand.u32 %v931, 4294901760
    %933 = vmatmul.f32.gmra.mxu0 %v932
    %v934 = vpop.f32.mrf.mxu0
    %v935 = vadd.f32 %v845, %v934
    %936 = vdwg.mxu0
    %937 = vmatpush.msra.mxu0 0.0
    %938 = vmatpush.msra.mxu0 0.0
    %939 = vmatpush.msra.mxu0 0.0
    %940 = vmatpush.msra.mxu0 0.0
    %941 = vmatpush.msra.mxu0 0.0
    %942 = vmatpush.msra.mxu0 0.0
    %943 = vmatpush.msra.mxu0 0.0
    %944 = vmatpush.msra.mxu0 0.0
    %945 = vmatpush.msra.mxu0 0.0
    %946 = vmatpush.msra.mxu0 0.0
    %947 = vmatpush.msra.mxu0 0.0
    %948 = vmatpush.msra.mxu0 0.0
    %949 = vmatpush.msra.mxu0 0.0
    %950 = vmatpush.msra.mxu0 0.0
    %951 = vmatpush.msra.mxu0 0.0
    %v952 = vand.u32 %v45, 4294901760
    %v953 = vsub.f32 %v45, %v952
    %v954 = vand.u32 %v953, 4294901760
    %955 = vmatpush.msra.mxu0 %v954
    %v956 = vand.u32 %v62, 4294901760
    %957 = vmatmul.f32.gmra.mxu0 %v956
    %v958 = vpop.f32.mrf.mxu0
    %v959 = vadd.f32 %v869, %v958
    %v960 = vand.u32 %v65, 4294901760
    %961 = vmatmul.f32.gmra.mxu0 %v960
    %v962 = vpop.f32.mrf.mxu0
    %v963 = vadd.f32 %v875, %v962
    %v964 = vand.u32 %v68, 4294901760
    %965 = vmatmul.f32.gmra.mxu0 %v964
    %v966 = vpop.f32.mrf.mxu0
    %v967 = vadd.f32 %v881, %v966
    %v968 = vand.u32 %v71, 4294901760
    %969 = vmatmul.f32.gmra.mxu0 %v968
    %v970 = vpop.f32.mrf.mxu0
    %v971 = vadd.f32 %v887, %v970
    %v972 = vand.u32 %v74, 4294901760
    %973 = vmatmul.f32.gmra.mxu0 %v972
    %v974 = vpop.f32.mrf.mxu0
    %v975 = vadd.f32 %v893, %v974
    %v976 = vand.u32 %v77, 4294901760
    %977 = vmatmul.f32.gmra.mxu0 %v976
    %v978 = vpop.f32.mrf.mxu0
    %v979 = vadd.f32 %v899, %v978
    %v980 = vand.u32 %v80, 4294901760
    %981 = vmatmul.f32.gmra.mxu0 %v980
    %v982 = vpop.f32.mrf.mxu0
    %v983 = vadd.f32 %v905, %v982
    %v984 = vand.u32 %v83, 4294901760
    %985 = vmatmul.f32.gmra.mxu0 %v984
    %v986 = vpop.f32.mrf.mxu0
    %v987 = vadd.f32 %v911, %v986
    %v988 = vand.u32 %v86, 4294901760
    %989 = vmatmul.f32.gmra.mxu0 %v988
    %v990 = vpop.f32.mrf.mxu0
    %v991 = vadd.f32 %v917, %v990
    %v992 = vand.u32 %v89, 4294901760
    %993 = vmatmul.f32.gmra.mxu0 %v992
    %v994 = vpop.f32.mrf.mxu0
    %v995 = vadd.f32 %v923, %v994
    %v996 = vand.u32 %v92, 4294901760
    %997 = vmatmul.f32.gmra.mxu0 %v996
    %v998 = vpop.f32.mrf.mxu0
    %v999 = vadd.f32 %v929, %v998
    %v1000 = vand.u32 %v95, 4294901760
    %1001 = vmatmul.f32.gmra.mxu0 %v1000
    %v1002 = vpop.f32.mrf.mxu0
    %v1003 = vadd.f32 %v935, %v1002
    %1004 = vdwg.mxu0
    %1005 = vmatpush.msra.mxu0 0.0
    %1006 = vmatpush.msra.mxu0 0.0
    %1007 = vmatpush.msra.mxu0 0.0
    %1008 = vmatpush.msra.mxu0 0.0
    %1009 = vmatpush.msra.mxu0 0.0
    %1010 = vmatpush.msra.mxu0 0.0
    %1011 = vmatpush.msra.mxu0 0.0
    %1012 = vmatpush.msra.mxu0 0.0
    %1013 = vmatpush.msra.mxu0 0.0
    %1014 = vmatpush.msra.mxu0 0.0
    %1015 = vmatpush.msra.mxu0 0.0
    %1016 = vmatpush.msra.mxu0 0.0
    %1017 = vmatpush.msra.mxu0 0.0
    %1018 = vmatpush.msra.mxu0 0.0
    %1019 = vmatpush.msra.mxu0 0.0
    %v1020 = vand.u32 %v45, 4294901760
    %1021 = vmatpush.msra.mxu0 %v1020
    %v1022 = vand.u32 %v62, 4294901760
    %1023 = vmatmul.f32.gmra.mxu0 %v1022
    %v1024 = vpop.f32.mrf.mxu0
    %v1025 = vadd.f32 %v959, %v1024
    %v1026 = vand.u32 %v65, 4294901760
    %1027 = vmatmul.f32.gmra.mxu0 %v1026
    %v1028 = vpop.f32.mrf.mxu0
    %v1029 = vadd.f32 %v963, %v1028
    %v1030 = vand.u32 %v68, 4294901760
    %1031 = vmatmul.f32.gmra.mxu0 %v1030
    %v1032 = vpop.f32.mrf.mxu0
    %v1033 = vadd.f32 %v967, %v1032
    %v1034 = vand.u32 %v71, 4294901760
    %1035 = vmatmul.f32.gmra.mxu0 %v1034
    %v1036 = vpop.f32.mrf.mxu0
    %v1037 = vadd.f32 %v971, %v1036
    %v1038 = vand.u32 %v74, 4294901760
    %1039 = vmatmul.f32.gmra.mxu0 %v1038
    %v1040 = vpop.f32.mrf.mxu0
    %v1041 = vadd.f32 %v975, %v1040
    %v1042 = vand.u32 %v77, 4294901760
    %1043 = vmatmul.f32.gmra.mxu0 %v1042
    %v1044 = vpop.f32.mrf.mxu0
    %v1045 = vadd.f32 %v979, %v1044
    %v1046 = vand.u32 %v80, 4294901760
    %1047 = vmatmul.f32.gmra.mxu0 %v1046
    %v1048 = vpop.f32.mrf.mxu0
    %v1049 = vadd.f32 %v983, %v1048
    %v1050 = vand.u32 %v83, 4294901760
    %1051 = vmatmul.f32.gmra.mxu0 %v1050
    %v1052 = vpop.f32.mrf.mxu0
    %v1053 = vadd.f32 %v987, %v1052
    %v1054 = vand.u32 %v86, 4294901760
    %1055 = vmatmul.f32.gmra.mxu0 %v1054
    %v1056 = vpop.f32.mrf.mxu0
    %v1057 = vadd.f32 %v991, %v1056
    %v1058 = vand.u32 %v89, 4294901760
    %1059 = vmatmul.f32.gmra.mxu0 %v1058
    %v1060 = vpop.f32.mrf.mxu0
    %v1061 = vadd.f32 %v995, %v1060
    %v1062 = vand.u32 %v92, 4294901760
    %1063 = vmatmul.f32.gmra.mxu0 %v1062
    %v1064 = vpop.f32.mrf.mxu0
    %v1065 = vadd.f32 %v999, %v1064
    %v1066 = vand.u32 %v95, 4294901760
    %1067 = vmatmul.f32.gmra.mxu0 %v1066
    %v1068 = vpop.f32.mrf.mxu0
    %v1069 = vadd.f32 %v1003, %v1068
    %1070 = vdwg.mxu0
    %1071 = vmatpush.msra.mxu0 0.0
    %1072 = vmatpush.msra.mxu0 0.0
    %1073 = vmatpush.msra.mxu0 0.0
    %1074 = vmatpush.msra.mxu0 0.0
    %1075 = vmatpush.msra.mxu0 0.0
    %1076 = vmatpush.msra.mxu0 0.0
    %1077 = vmatpush.msra.mxu0 0.0
    %1078 = vmatpush.msra.mxu0 0.0
    %1079 = vmatpush.msra.mxu0 0.0
    %1080 = vmatpush.msra.mxu0 0.0
    %1081 = vmatpush.msra.mxu0 0.0
    %1082 = vmatpush.msra.mxu0 0.0
    %1083 = vmatpush.msra.mxu0 0.0
    %1084 = vmatpush.msra.mxu0 0.0
    %1085 = vmatpush.msra.mxu0 0.0
    %v1086 = vand.u32 %v46, 4294901760
    %1087 = vmatpush.msra.mxu0 %v1086
    %v1088 = vand.u32 %v62, 4294901760
    %v1089 = vsub.f32 %v62, %v1088
    %v1090 = vand.u32 %v1089, 4294901760
    %v1091 = vsub.f32 %v1089, %v1090
    %v1092 = vand.u32 %v1091, 4294901760
    %1093 = vmatmul.f32.gmra.mxu0 %v1092
    %v1094 = vpop.f32.mrf.mxu0
    %v1095 = vadd.f32 0.0, %v1094
    %v1096 = vand.u32 %v65, 4294901760
    %v1097 = vsub.f32 %v65, %v1096
    %v1098 = vand.u32 %v1097, 4294901760
    %v1099 = vsub.f32 %v1097, %v1098
    %v1100 = vand.u32 %v1099, 4294901760
    %1101 = vmatmul.f32.gmra.mxu0 %v1100
    %v1102 = vpop.f32.mrf.mxu0
    %v1103 = vadd.f32 0.0, %v1102
    %v1104 = vand.u32 %v68, 4294901760
    %v1105 = vsub.f32 %v68, %v1104
    %v1106 = vand.u32 %v1105, 4294901760
    %v1107 = vsub.f32 %v1105, %v1106
    %v1108 = vand.u32 %v1107, 4294901760
    %1109 = vmatmul.f32.gmra.mxu0 %v1108
    %v1110 = vpop.f32.mrf.mxu0
    %v1111 = vadd.f32 0.0, %v1110
    %v1112 = vand.u32 %v71, 4294901760
    %v1113 = vsub.f32 %v71, %v1112
    %v1114 = vand.u32 %v1113, 4294901760
    %v1115 = vsub.f32 %v1113, %v1114
    %v1116 = vand.u32 %v1115, 4294901760
    %1117 = vmatmul.f32.gmra.mxu0 %v1116
    %v1118 = vpop.f32.mrf.mxu0
    %v1119 = vadd.f32 0.0, %v1118
    %v1120 = vand.u32 %v74, 4294901760
    %v1121 = vsub.f32 %v74, %v1120
    %v1122 = vand.u32 %v1121, 4294901760
    %v1123 = vsub.f32 %v1121, %v1122
    %v1124 = vand.u32 %v1123, 4294901760
    %1125 = vmatmul.f32.gmra.mxu0 %v1124
    %v1126 = vpop.f32.mrf.mxu0
    %v1127 = vadd.f32 0.0, %v1126
    %v1128 = vand.u32 %v77, 4294901760
    %v1129 = vsub.f32 %v77, %v1128
    %v1130 = vand.u32 %v1129, 4294901760
    %v1131 = vsub.f32 %v1129, %v1130
    %v1132 = vand.u32 %v1131, 4294901760
    %1133 = vmatmul.f32.gmra.mxu0 %v1132
    %v1134 = vpop.f32.mrf.mxu0
    %v1135 = vadd.f32 0.0, %v1134
    %v1136 = vand.u32 %v80, 4294901760
    %v1137 = vsub.f32 %v80, %v1136
    %v1138 = vand.u32 %v1137, 4294901760
    %v1139 = vsub.f32 %v1137, %v1138
    %v1140 = vand.u32 %v1139, 4294901760
    %1141 = vmatmul.f32.gmra.mxu0 %v1140
    %v1142 = vpop.f32.mrf.mxu0
    %v1143 = vadd.f32 0.0, %v1142
    %v1144 = vand.u32 %v83, 4294901760
    %v1145 = vsub.f32 %v83, %v1144
    %v1146 = vand.u32 %v1145, 4294901760
    %v1147 = vsub.f32 %v1145, %v1146
    %v1148 = vand.u32 %v1147, 4294901760
    %1149 = vmatmul.f32.gmra.mxu0 %v1148
    %v1150 = vpop.f32.mrf.mxu0
    %v1151 = vadd.f32 0.0, %v1150
    %v1152 = vand.u32 %v86, 4294901760
    %v1153 = vsub.f32 %v86, %v1152
    %v1154 = vand.u32 %v1153, 4294901760
    %v1155 = vsub.f32 %v1153, %v1154
    %v1156 = vand.u32 %v1155, 4294901760
    %1157 = vmatmul.f32.gmra.mxu0 %v1156
    %v1158 = vpop.f32.mrf.mxu0
    %v1159 = vadd.f32 0.0, %v1158
    %v1160 = vand.u32 %v89, 4294901760
    %v1161 = vsub.f32 %v89, %v1160
    %v1162 = vand.u32 %v1161, 4294901760
    %v1163 = vsub.f32 %v1161, %v1162
    %v1164 = vand.u32 %v1163, 4294901760
    %1165 = vmatmul.f32.gmra.mxu0 %v1164
    %v1166 = vpop.f32.mrf.mxu0
    %v1167 = vadd.f32 0.0, %v1166
    %v1168 = vand.u32 %v92, 4294901760
    %v1169 = vsub.f32 %v92, %v1168
    %v1170 = vand.u32 %v1169, 4294901760
    %v1171 = vsub.f32 %v1169, %v1170
    %v1172 = vand.u32 %v1171, 4294901760
    %1173 = vmatmul.f32.gmra.mxu0 %v1172
    %v1174 = vpop.f32.mrf.mxu0
    %v1175 = vadd.f32 0.0, %v1174
    %v1176 = vand.u32 %v95, 4294901760
    %v1177 = vsub.f32 %v95, %v1176
    %v1178 = vand.u32 %v1177, 4294901760
    %v1179 = vsub.f32 %v1177, %v1178
    %v1180 = vand.u32 %v1179, 4294901760
    %1181 = vmatmul.f32.gmra.mxu0 %v1180
    %v1182 = vpop.f32.mrf.mxu0
    %v1183 = vadd.f32 0.0, %v1182
    %1184 = vdwg.mxu0
    %1185 = vmatpush.msra.mxu0 0.0
    %1186 = vmatpush.msra.mxu0 0.0
    %1187 = vmatpush.msra.mxu0 0.0
    %1188 = vmatpush.msra.mxu0 0.0
    %1189 = vmatpush.msra.mxu0 0.0
    %1190 = vmatpush.msra.mxu0 0.0
    %1191 = vmatpush.msra.mxu0 0.0
    %1192 = vmatpush.msra.mxu0 0.0
    %1193 = vmatpush.msra.mxu0 0.0
    %1194 = vmatpush.msra.mxu0 0.0
    %1195 = vmatpush.msra.mxu0 0.0
    %1196 = vmatpush.msra.mxu0 0.0
    %1197 = vmatpush.msra.mxu0 0.0
    %1198 = vmatpush.msra.mxu0 0.0
    %1199 = vmatpush.msra.mxu0 0.0
    %v1200 = vand.u32 %v46, 4294901760
    %v1201 = vsub.f32 %v46, %v1200
    %v1202 = vand.u32 %v1201, 4294901760
    %v1203 = vsub.f32 %v1201, %v1202
    %v1204 = vand.u32 %v1203, 4294901760
    %1205 = vmatpush.msra.mxu0 %v1204
    %v1206 = vand.u32 %v62, 4294901760
    %1207 = vmatmul.f32.gmra.mxu0 %v1206
    %v1208 = vpop.f32.mrf.mxu0
    %v1209 = vadd.f32 %v1095, %v1208
    %v1210 = vand.u32 %v65, 4294901760
    %1211 = vmatmul.f32.gmra.mxu0 %v1210
    %v1212 = vpop.f32.mrf.mxu0
    %v1213 = vadd.f32 %v1103, %v1212
    %v1214 = vand.u32 %v68, 4294901760
    %1215 = vmatmul.f32.gmra.mxu0 %v1214
    %v1216 = vpop.f32.mrf.mxu0
    %v1217 = vadd.f32 %v1111, %v1216
    %v1218 = vand.u32 %v71, 4294901760
    %1219 = vmatmul.f32.gmra.mxu0 %v1218
    %v1220 = vpop.f32.mrf.mxu0
    %v1221 = vadd.f32 %v1119, %v1220
    %v1222 = vand.u32 %v74, 4294901760
    %1223 = vmatmul.f32.gmra.mxu0 %v1222
    %v1224 = vpop.f32.mrf.mxu0
    %v1225 = vadd.f32 %v1127, %v1224
    %v1226 = vand.u32 %v77, 4294901760
    %1227 = vmatmul.f32.gmra.mxu0 %v1226
    %v1228 = vpop.f32.mrf.mxu0
    %v1229 = vadd.f32 %v1135, %v1228
    %v1230 = vand.u32 %v80, 4294901760
    %1231 = vmatmul.f32.gmra.mxu0 %v1230
    %v1232 = vpop.f32.mrf.mxu0
    %v1233 = vadd.f32 %v1143, %v1232
    %v1234 = vand.u32 %v83, 4294901760
    %1235 = vmatmul.f32.gmra.mxu0 %v1234
    %v1236 = vpop.f32.mrf.mxu0
    %v1237 = vadd.f32 %v1151, %v1236
    %v1238 = vand.u32 %v86, 4294901760
    %1239 = vmatmul.f32.gmra.mxu0 %v1238
    %v1240 = vpop.f32.mrf.mxu0
    %v1241 = vadd.f32 %v1159, %v1240
    %v1242 = vand.u32 %v89, 4294901760
    %1243 = vmatmul.f32.gmra.mxu0 %v1242
    %v1244 = vpop.f32.mrf.mxu0
    %v1245 = vadd.f32 %v1167, %v1244
    %v1246 = vand.u32 %v92, 4294901760
    %1247 = vmatmul.f32.gmra.mxu0 %v1246
    %v1248 = vpop.f32.mrf.mxu0
    %v1249 = vadd.f32 %v1175, %v1248
    %v1250 = vand.u32 %v95, 4294901760
    %1251 = vmatmul.f32.gmra.mxu0 %v1250
    %v1252 = vpop.f32.mrf.mxu0
    %v1253 = vadd.f32 %v1183, %v1252
    %1254 = vdwg.mxu0
    %1255 = vmatpush.msra.mxu0 0.0
    %1256 = vmatpush.msra.mxu0 0.0
    %1257 = vmatpush.msra.mxu0 0.0
    %1258 = vmatpush.msra.mxu0 0.0
    %1259 = vmatpush.msra.mxu0 0.0
    %1260 = vmatpush.msra.mxu0 0.0
    %1261 = vmatpush.msra.mxu0 0.0
    %1262 = vmatpush.msra.mxu0 0.0
    %1263 = vmatpush.msra.mxu0 0.0
    %1264 = vmatpush.msra.mxu0 0.0
    %1265 = vmatpush.msra.mxu0 0.0
    %1266 = vmatpush.msra.mxu0 0.0
    %1267 = vmatpush.msra.mxu0 0.0
    %1268 = vmatpush.msra.mxu0 0.0
    %1269 = vmatpush.msra.mxu0 0.0
    %v1270 = vand.u32 %v46, 4294901760
    %v1271 = vsub.f32 %v46, %v1270
    %1272 = vmatpush.msra.mxu0 %v1271
    %v1273 = vand.u32 %v62, 4294901760
    %v1274 = vsub.f32 %v62, %v1273
    %1275 = vmatmul.f32.gmra.mxu0 %v1274
    %v1276 = vpop.f32.mrf.mxu0
    %v1277 = vadd.f32 %v1209, %v1276
    %v1278 = vand.u32 %v65, 4294901760
    %v1279 = vsub.f32 %v65, %v1278
    %1280 = vmatmul.f32.gmra.mxu0 %v1279
    %v1281 = vpop.f32.mrf.mxu0
    %v1282 = vadd.f32 %v1213, %v1281
    %v1283 = vand.u32 %v68, 4294901760
    %v1284 = vsub.f32 %v68, %v1283
    %1285 = vmatmul.f32.gmra.mxu0 %v1284
    %v1286 = vpop.f32.mrf.mxu0
    %v1287 = vadd.f32 %v1217, %v1286
    %v1288 = vand.u32 %v71, 4294901760
    %v1289 = vsub.f32 %v71, %v1288
    %1290 = vmatmul.f32.gmra.mxu0 %v1289
    %v1291 = vpop.f32.mrf.mxu0
    %v1292 = vadd.f32 %v1221, %v1291
    %v1293 = vand.u32 %v74, 4294901760
    %v1294 = vsub.f32 %v74, %v1293
    %1295 = vmatmul.f32.gmra.mxu0 %v1294
    %v1296 = vpop.f32.mrf.mxu0
    %v1297 = vadd.f32 %v1225, %v1296
    %v1298 = vand.u32 %v77, 4294901760
    %v1299 = vsub.f32 %v77, %v1298
    %1300 = vmatmul.f32.gmra.mxu0 %v1299
    %v1301 = vpop.f32.mrf.mxu0
    %v1302 = vadd.f32 %v1229, %v1301
    %v1303 = vand.u32 %v80, 4294901760
    %v1304 = vsub.f32 %v80, %v1303
    %1305 = vmatmul.f32.gmra.mxu0 %v1304
    %v1306 = vpop.f32.mrf.mxu0
    %v1307 = vadd.f32 %v1233, %v1306
    %v1308 = vand.u32 %v83, 4294901760
    %v1309 = vsub.f32 %v83, %v1308
    %1310 = vmatmul.f32.gmra.mxu0 %v1309
    %v1311 = vpop.f32.mrf.mxu0
    %v1312 = vadd.f32 %v1237, %v1311
    %v1313 = vand.u32 %v86, 4294901760
    %v1314 = vsub.f32 %v86, %v1313
    %1315 = vmatmul.f32.gmra.mxu0 %v1314
    %v1316 = vpop.f32.mrf.mxu0
    %v1317 = vadd.f32 %v1241, %v1316
    %v1318 = vand.u32 %v89, 4294901760
    %v1319 = vsub.f32 %v89, %v1318
    %1320 = vmatmul.f32.gmra.mxu0 %v1319
    %v1321 = vpop.f32.mrf.mxu0
    %v1322 = vadd.f32 %v1245, %v1321
    %v1323 = vand.u32 %v92, 4294901760
    %v1324 = vsub.f32 %v92, %v1323
    %1325 = vmatmul.f32.gmra.mxu0 %v1324
    %v1326 = vpop.f32.mrf.mxu0
    %v1327 = vadd.f32 %v1249, %v1326
    %v1328 = vand.u32 %v95, 4294901760
    %v1329 = vsub.f32 %v95, %v1328
    %1330 = vmatmul.f32.gmra.mxu0 %v1329
    %v1331 = vpop.f32.mrf.mxu0
    %v1332 = vadd.f32 %v1253, %v1331
    %1333 = vdwg.mxu0
    %1334 = vmatpush.msra.mxu0 0.0
    %1335 = vmatpush.msra.mxu0 0.0
    %1336 = vmatpush.msra.mxu0 0.0
    %1337 = vmatpush.msra.mxu0 0.0
    %1338 = vmatpush.msra.mxu0 0.0
    %1339 = vmatpush.msra.mxu0 0.0
    %1340 = vmatpush.msra.mxu0 0.0
    %1341 = vmatpush.msra.mxu0 0.0
    %1342 = vmatpush.msra.mxu0 0.0
    %1343 = vmatpush.msra.mxu0 0.0
    %1344 = vmatpush.msra.mxu0 0.0
    %1345 = vmatpush.msra.mxu0 0.0
    %1346 = vmatpush.msra.mxu0 0.0
    %1347 = vmatpush.msra.mxu0 0.0
    %1348 = vmatpush.msra.mxu0 0.0
    %v1349 = vand.u32 %v46, 4294901760
    %1350 = vmatpush.msra.mxu0 %v1349
    %v1351 = vand.u32 %v62, 4294901760
    %v1352 = vsub.f32 %v62, %v1351
    %v1353 = vand.u32 %v1352, 4294901760
    %1354 = vmatmul.f32.gmra.mxu0 %v1353
    %v1355 = vpop.f32.mrf.mxu0
    %v1356 = vadd.f32 %v1277, %v1355
    %v1357 = vand.u32 %v65, 4294901760
    %v1358 = vsub.f32 %v65, %v1357
    %v1359 = vand.u32 %v1358, 4294901760
    %1360 = vmatmul.f32.gmra.mxu0 %v1359
    %v1361 = vpop.f32.mrf.mxu0
    %v1362 = vadd.f32 %v1282, %v1361
    %v1363 = vand.u32 %v68, 4294901760
    %v1364 = vsub.f32 %v68, %v1363
    %v1365 = vand.u32 %v1364, 4294901760
    %1366 = vmatmul.f32.gmra.mxu0 %v1365
    %v1367 = vpop.f32.mrf.mxu0
    %v1368 = vadd.f32 %v1287, %v1367
    %v1369 = vand.u32 %v71, 4294901760
    %v1370 = vsub.f32 %v71, %v1369
    %v1371 = vand.u32 %v1370, 4294901760
    %1372 = vmatmul.f32.gmra.mxu0 %v1371
    %v1373 = vpop.f32.mrf.mxu0
    %v1374 = vadd.f32 %v1292, %v1373
    %v1375 = vand.u32 %v74, 4294901760
    %v1376 = vsub.f32 %v74, %v1375
    %v1377 = vand.u32 %v1376, 4294901760
    %1378 = vmatmul.f32.gmra.mxu0 %v1377
    %v1379 = vpop.f32.mrf.mxu0
    %v1380 = vadd.f32 %v1297, %v1379
    %v1381 = vand.u32 %v77, 4294901760
    %v1382 = vsub.f32 %v77, %v1381
    %v1383 = vand.u32 %v1382, 4294901760
    %1384 = vmatmul.f32.gmra.mxu0 %v1383
    %v1385 = vpop.f32.mrf.mxu0
    %v1386 = vadd.f32 %v1302, %v1385
    %v1387 = vand.u32 %v80, 4294901760
    %v1388 = vsub.f32 %v80, %v1387
    %v1389 = vand.u32 %v1388, 4294901760
    %1390 = vmatmul.f32.gmra.mxu0 %v1389
    %v1391 = vpop.f32.mrf.mxu0
    %v1392 = vadd.f32 %v1307, %v1391
    %v1393 = vand.u32 %v83, 4294901760
    %v1394 = vsub.f32 %v83, %v1393
    %v1395 = vand.u32 %v1394, 4294901760
    %1396 = vmatmul.f32.gmra.mxu0 %v1395
    %v1397 = vpop.f32.mrf.mxu0
    %v1398 = vadd.f32 %v1312, %v1397
    %v1399 = vand.u32 %v86, 4294901760
    %v1400 = vsub.f32 %v86, %v1399
    %v1401 = vand.u32 %v1400, 4294901760
    %1402 = vmatmul.f32.gmra.mxu0 %v1401
    %v1403 = vpop.f32.mrf.mxu0
    %v1404 = vadd.f32 %v1317, %v1403
    %v1405 = vand.u32 %v89, 4294901760
    %v1406 = vsub.f32 %v89, %v1405
    %v1407 = vand.u32 %v1406, 4294901760
    %1408 = vmatmul.f32.gmra.mxu0 %v1407
    %v1409 = vpop.f32.mrf.mxu0
    %v1410 = vadd.f32 %v1322, %v1409
    %v1411 = vand.u32 %v92, 4294901760
    %v1412 = vsub.f32 %v92, %v1411
    %v1413 = vand.u32 %v1412, 4294901760
    %1414 = vmatmul.f32.gmra.mxu0 %v1413
    %v1415 = vpop.f32.mrf.mxu0
    %v1416 = vadd.f32 %v1327, %v1415
    %v1417 = vand.u32 %v95, 4294901760
    %v1418 = vsub.f32 %v95, %v1417
    %v1419 = vand.u32 %v1418, 4294901760
    %1420 = vmatmul.f32.gmra.mxu0 %v1419
    %v1421 = vpop.f32.mrf.mxu0
    %v1422 = vadd.f32 %v1332, %v1421
    %1423 = vdwg.mxu0
    %1424 = vmatpush.msra.mxu0 0.0
    %1425 = vmatpush.msra.mxu0 0.0
    %1426 = vmatpush.msra.mxu0 0.0
    %1427 = vmatpush.msra.mxu0 0.0
    %1428 = vmatpush.msra.mxu0 0.0
    %1429 = vmatpush.msra.mxu0 0.0
    %1430 = vmatpush.msra.mxu0 0.0
    %1431 = vmatpush.msra.mxu0 0.0
    %1432 = vmatpush.msra.mxu0 0.0
    %1433 = vmatpush.msra.mxu0 0.0
    %1434 = vmatpush.msra.mxu0 0.0
    %1435 = vmatpush.msra.mxu0 0.0
    %1436 = vmatpush.msra.mxu0 0.0
    %1437 = vmatpush.msra.mxu0 0.0
    %1438 = vmatpush.msra.mxu0 0.0
    %v1439 = vand.u32 %v46, 4294901760
    %v1440 = vsub.f32 %v46, %v1439
    %v1441 = vand.u32 %v1440, 4294901760
    %1442 = vmatpush.msra.mxu0 %v1441
    %v1443 = vand.u32 %v62, 4294901760
    %1444 = vmatmul.f32.gmra.mxu0 %v1443
    %v1445 = vpop.f32.mrf.mxu0
    %v1446 = vadd.f32 %v1356, %v1445
    %v1447 = vand.u32 %v65, 4294901760
    %1448 = vmatmul.f32.gmra.mxu0 %v1447
    %v1449 = vpop.f32.mrf.mxu0
    %v1450 = vadd.f32 %v1362, %v1449
    %v1451 = vand.u32 %v68, 4294901760
    %1452 = vmatmul.f32.gmra.mxu0 %v1451
    %v1453 = vpop.f32.mrf.mxu0
    %v1454 = vadd.f32 %v1368, %v1453
    %v1455 = vand.u32 %v71, 4294901760
    %1456 = vmatmul.f32.gmra.mxu0 %v1455
    %v1457 = vpop.f32.mrf.mxu0
    %v1458 = vadd.f32 %v1374, %v1457
    %v1459 = vand.u32 %v74, 4294901760
    %1460 = vmatmul.f32.gmra.mxu0 %v1459
    %v1461 = vpop.f32.mrf.mxu0
    %v1462 = vadd.f32 %v1380, %v1461
    %v1463 = vand.u32 %v77, 4294901760
    %1464 = vmatmul.f32.gmra.mxu0 %v1463
    %v1465 = vpop.f32.mrf.mxu0
    %v1466 = vadd.f32 %v1386, %v1465
    %v1467 = vand.u32 %v80, 4294901760
    %1468 = vmatmul.f32.gmra.mxu0 %v1467
    %v1469 = vpop.f32.mrf.mxu0
    %v1470 = vadd.f32 %v1392, %v1469
    %v1471 = vand.u32 %v83, 4294901760
    %1472 = vmatmul.f32.gmra.mxu0 %v1471
    %v1473 = vpop.f32.mrf.mxu0
    %v1474 = vadd.f32 %v1398, %v1473
    %v1475 = vand.u32 %v86, 4294901760
    %1476 = vmatmul.f32.gmra.mxu0 %v1475
    %v1477 = vpop.f32.mrf.mxu0
    %v1478 = vadd.f32 %v1404, %v1477
    %v1479 = vand.u32 %v89, 4294901760
    %1480 = vmatmul.f32.gmra.mxu0 %v1479
    %v1481 = vpop.f32.mrf.mxu0
    %v1482 = vadd.f32 %v1410, %v1481
    %v1483 = vand.u32 %v92, 4294901760
    %1484 = vmatmul.f32.gmra.mxu0 %v1483
    %v1485 = vpop.f32.mrf.mxu0
    %v1486 = vadd.f32 %v1416, %v1485
    %v1487 = vand.u32 %v95, 4294901760
    %1488 = vmatmul.f32.gmra.mxu0 %v1487
    %v1489 = vpop.f32.mrf.mxu0
    %v1490 = vadd.f32 %v1422, %v1489
    %1491 = vdwg.mxu0
    %1492 = vmatpush.msra.mxu0 0.0
    %1493 = vmatpush.msra.mxu0 0.0
    %1494 = vmatpush.msra.mxu0 0.0
    %1495 = vmatpush.msra.mxu0 0.0
    %1496 = vmatpush.msra.mxu0 0.0
    %1497 = vmatpush.msra.mxu0 0.0
    %1498 = vmatpush.msra.mxu0 0.0
    %1499 = vmatpush.msra.mxu0 0.0
    %1500 = vmatpush.msra.mxu0 0.0
    %1501 = vmatpush.msra.mxu0 0.0
    %1502 = vmatpush.msra.mxu0 0.0
    %1503 = vmatpush.msra.mxu0 0.0
    %1504 = vmatpush.msra.mxu0 0.0
    %1505 = vmatpush.msra.mxu0 0.0
    %1506 = vmatpush.msra.mxu0 0.0
    %v1507 = vand.u32 %v46, 4294901760
    %1508 = vmatpush.msra.mxu0 %v1507
    %v1509 = vand.u32 %v62, 4294901760
    %1510 = vmatmul.f32.gmra.mxu0 %v1509
    %v1511 = vpop.f32.mrf.mxu0
    %v1512 = vadd.f32 %v1446, %v1511
    %v1513 = vand.u32 %v65, 4294901760
    %1514 = vmatmul.f32.gmra.mxu0 %v1513
    %v1515 = vpop.f32.mrf.mxu0
    %v1516 = vadd.f32 %v1450, %v1515
    %v1517 = vand.u32 %v68, 4294901760
    %1518 = vmatmul.f32.gmra.mxu0 %v1517
    %v1519 = vpop.f32.mrf.mxu0
    %v1520 = vadd.f32 %v1454, %v1519
    %v1521 = vand.u32 %v71, 4294901760
    %1522 = vmatmul.f32.gmra.mxu0 %v1521
    %v1523 = vpop.f32.mrf.mxu0
    %v1524 = vadd.f32 %v1458, %v1523
    %v1525 = vand.u32 %v74, 4294901760
    %1526 = vmatmul.f32.gmra.mxu0 %v1525
    %v1527 = vpop.f32.mrf.mxu0
    %v1528 = vadd.f32 %v1462, %v1527
    %v1529 = vand.u32 %v77, 4294901760
    %1530 = vmatmul.f32.gmra.mxu0 %v1529
    %v1531 = vpop.f32.mrf.mxu0
    %v1532 = vadd.f32 %v1466, %v1531
    %v1533 = vand.u32 %v80, 4294901760
    %1534 = vmatmul.f32.gmra.mxu0 %v1533
    %v1535 = vpop.f32.mrf.mxu0
    %v1536 = vadd.f32 %v1470, %v1535
    %v1537 = vand.u32 %v83, 4294901760
    %1538 = vmatmul.f32.gmra.mxu0 %v1537
    %v1539 = vpop.f32.mrf.mxu0
    %v1540 = vadd.f32 %v1474, %v1539
    %v1541 = vand.u32 %v86, 4294901760
    %1542 = vmatmul.f32.gmra.mxu0 %v1541
    %v1543 = vpop.f32.mrf.mxu0
    %v1544 = vadd.f32 %v1478, %v1543
    %v1545 = vand.u32 %v89, 4294901760
    %1546 = vmatmul.f32.gmra.mxu0 %v1545
    %v1547 = vpop.f32.mrf.mxu0
    %v1548 = vadd.f32 %v1482, %v1547
    %v1549 = vand.u32 %v92, 4294901760
    %1550 = vmatmul.f32.gmra.mxu0 %v1549
    %v1551 = vpop.f32.mrf.mxu0
    %v1552 = vadd.f32 %v1486, %v1551
    %v1553 = vand.u32 %v95, 4294901760
    %1554 = vmatmul.f32.gmra.mxu0 %v1553
    %v1555 = vpop.f32.mrf.mxu0
    %v1556 = vadd.f32 %v1490, %v1555
    %1557 = vdwg.mxu0
    %1558 = vmatpush.msra.mxu0 0.0
    %1559 = vmatpush.msra.mxu0 0.0
    %1560 = vmatpush.msra.mxu0 0.0
    %1561 = vmatpush.msra.mxu0 0.0
    %1562 = vmatpush.msra.mxu0 0.0
    %1563 = vmatpush.msra.mxu0 0.0
    %1564 = vmatpush.msra.mxu0 0.0
    %1565 = vmatpush.msra.mxu0 0.0
    %1566 = vmatpush.msra.mxu0 0.0
    %1567 = vmatpush.msra.mxu0 0.0
    %1568 = vmatpush.msra.mxu0 0.0
    %1569 = vmatpush.msra.mxu0 0.0
    %1570 = vmatpush.msra.mxu0 0.0
    %1571 = vmatpush.msra.mxu0 0.0
    %1572 = vmatpush.msra.mxu0 0.0
    %v1573 = vand.u32 %v47, 4294901760
    %1574 = vmatpush.msra.mxu0 %v1573
    %v1575 = vand.u32 %v62, 4294901760
    %v1576 = vsub.f32 %v62, %v1575
    %v1577 = vand.u32 %v1576, 4294901760
    %v1578 = vsub.f32 %v1576, %v1577
    %v1579 = vand.u32 %v1578, 4294901760
    %1580 = vmatmul.f32.gmra.mxu0 %v1579
    %v1581 = vpop.f32.mrf.mxu0
    %v1582 = vadd.f32 0.0, %v1581
    %v1583 = vand.u32 %v65, 4294901760
    %v1584 = vsub.f32 %v65, %v1583
    %v1585 = vand.u32 %v1584, 4294901760
    %v1586 = vsub.f32 %v1584, %v1585
    %v1587 = vand.u32 %v1586, 4294901760
    %1588 = vmatmul.f32.gmra.mxu0 %v1587
    %v1589 = vpop.f32.mrf.mxu0
    %v1590 = vadd.f32 0.0, %v1589
    %v1591 = vand.u32 %v68, 4294901760
    %v1592 = vsub.f32 %v68, %v1591
    %v1593 = vand.u32 %v1592, 4294901760
    %v1594 = vsub.f32 %v1592, %v1593
    %v1595 = vand.u32 %v1594, 4294901760
    %1596 = vmatmul.f32.gmra.mxu0 %v1595
    %v1597 = vpop.f32.mrf.mxu0
    %v1598 = vadd.f32 0.0, %v1597
    %v1599 = vand.u32 %v71, 4294901760
    %v1600 = vsub.f32 %v71, %v1599
    %v1601 = vand.u32 %v1600, 4294901760
    %v1602 = vsub.f32 %v1600, %v1601
    %v1603 = vand.u32 %v1602, 4294901760
    %1604 = vmatmul.f32.gmra.mxu0 %v1603
    %v1605 = vpop.f32.mrf.mxu0
    %v1606 = vadd.f32 0.0, %v1605
    %v1607 = vand.u32 %v74, 4294901760
    %v1608 = vsub.f32 %v74, %v1607
    %v1609 = vand.u32 %v1608, 4294901760
    %v1610 = vsub.f32 %v1608, %v1609
    %v1611 = vand.u32 %v1610, 4294901760
    %1612 = vmatmul.f32.gmra.mxu0 %v1611
    %v1613 = vpop.f32.mrf.mxu0
    %v1614 = vadd.f32 0.0, %v1613
    %v1615 = vand.u32 %v77, 4294901760
    %v1616 = vsub.f32 %v77, %v1615
    %v1617 = vand.u32 %v1616, 4294901760
    %v1618 = vsub.f32 %v1616, %v1617
    %v1619 = vand.u32 %v1618, 4294901760
    %1620 = vmatmul.f32.gmra.mxu0 %v1619
    %v1621 = vpop.f32.mrf.mxu0
    %v1622 = vadd.f32 0.0, %v1621
    %v1623 = vand.u32 %v80, 4294901760
    %v1624 = vsub.f32 %v80, %v1623
    %v1625 = vand.u32 %v1624, 4294901760
    %v1626 = vsub.f32 %v1624, %v1625
    %v1627 = vand.u32 %v1626, 4294901760
    %1628 = vmatmul.f32.gmra.mxu0 %v1627
    %v1629 = vpop.f32.mrf.mxu0
    %v1630 = vadd.f32 0.0, %v1629
    %v1631 = vand.u32 %v83, 4294901760
    %v1632 = vsub.f32 %v83, %v1631
    %v1633 = vand.u32 %v1632, 4294901760
    %v1634 = vsub.f32 %v1632, %v1633
    %v1635 = vand.u32 %v1634, 4294901760
    %1636 = vmatmul.f32.gmra.mxu0 %v1635
    %v1637 = vpop.f32.mrf.mxu0
    %v1638 = vadd.f32 0.0, %v1637
    %v1639 = vand.u32 %v86, 4294901760
    %v1640 = vsub.f32 %v86, %v1639
    %v1641 = vand.u32 %v1640, 4294901760
    %v1642 = vsub.f32 %v1640, %v1641
    %v1643 = vand.u32 %v1642, 4294901760
    %1644 = vmatmul.f32.gmra.mxu0 %v1643
    %v1645 = vpop.f32.mrf.mxu0
    %v1646 = vadd.f32 0.0, %v1645
    %v1647 = vand.u32 %v89, 4294901760
    %v1648 = vsub.f32 %v89, %v1647
    %v1649 = vand.u32 %v1648, 4294901760
    %v1650 = vsub.f32 %v1648, %v1649
    %v1651 = vand.u32 %v1650, 4294901760
    %1652 = vmatmul.f32.gmra.mxu0 %v1651
    %v1653 = vpop.f32.mrf.mxu0
    %v1654 = vadd.f32 0.0, %v1653
    %v1655 = vand.u32 %v92, 4294901760
    %v1656 = vsub.f32 %v92, %v1655
    %v1657 = vand.u32 %v1656, 4294901760
    %v1658 = vsub.f32 %v1656, %v1657
    %v1659 = vand.u32 %v1658, 4294901760
    %1660 = vmatmul.f32.gmra.mxu0 %v1659
    %v1661 = vpop.f32.mrf.mxu0
    %v1662 = vadd.f32 0.0, %v1661
    %v1663 = vand.u32 %v95, 4294901760
    %v1664 = vsub.f32 %v95, %v1663
    %v1665 = vand.u32 %v1664, 4294901760
    %v1666 = vsub.f32 %v1664, %v1665
    %v1667 = vand.u32 %v1666, 4294901760
    %1668 = vmatmul.f32.gmra.mxu0 %v1667
    %v1669 = vpop.f32.mrf.mxu0
    %v1670 = vadd.f32 0.0, %v1669
    %1671 = vdwg.mxu0
    %1672 = vmatpush.msra.mxu0 0.0
    %1673 = vmatpush.msra.mxu0 0.0
    %1674 = vmatpush.msra.mxu0 0.0
    %1675 = vmatpush.msra.mxu0 0.0
    %1676 = vmatpush.msra.mxu0 0.0
    %1677 = vmatpush.msra.mxu0 0.0
    %1678 = vmatpush.msra.mxu0 0.0
    %1679 = vmatpush.msra.mxu0 0.0
    %1680 = vmatpush.msra.mxu0 0.0
    %1681 = vmatpush.msra.mxu0 0.0
    %1682 = vmatpush.msra.mxu0 0.0
    %1683 = vmatpush.msra.mxu0 0.0
    %1684 = vmatpush.msra.mxu0 0.0
    %1685 = vmatpush.msra.mxu0 0.0
    %1686 = vmatpush.msra.mxu0 0.0
    %v1687 = vand.u32 %v47, 4294901760
    %v1688 = vsub.f32 %v47, %v1687
    %v1689 = vand.u32 %v1688, 4294901760
    %v1690 = vsub.f32 %v1688, %v1689
    %v1691 = vand.u32 %v1690, 4294901760
    %1692 = vmatpush.msra.mxu0 %v1691
    %v1693 = vand.u32 %v62, 4294901760
    %1694 = vmatmul.f32.gmra.mxu0 %v1693
    %v1695 = vpop.f32.mrf.mxu0
    %v1696 = vadd.f32 %v1582, %v1695
    %v1697 = vand.u32 %v65, 4294901760
    %1698 = vmatmul.f32.gmra.mxu0 %v1697
    %v1699 = vpop.f32.mrf.mxu0
    %v1700 = vadd.f32 %v1590, %v1699
    %v1701 = vand.u32 %v68, 4294901760
    %1702 = vmatmul.f32.gmra.mxu0 %v1701
    %v1703 = vpop.f32.mrf.mxu0
    %v1704 = vadd.f32 %v1598, %v1703
    %v1705 = vand.u32 %v71, 4294901760
    %1706 = vmatmul.f32.gmra.mxu0 %v1705
    %v1707 = vpop.f32.mrf.mxu0
    %v1708 = vadd.f32 %v1606, %v1707
    %v1709 = vand.u32 %v74, 4294901760
    %1710 = vmatmul.f32.gmra.mxu0 %v1709
    %v1711 = vpop.f32.mrf.mxu0
    %v1712 = vadd.f32 %v1614, %v1711
    %v1713 = vand.u32 %v77, 4294901760
    %1714 = vmatmul.f32.gmra.mxu0 %v1713
    %v1715 = vpop.f32.mrf.mxu0
    %v1716 = vadd.f32 %v1622, %v1715
    %v1717 = vand.u32 %v80, 4294901760
    %1718 = vmatmul.f32.gmra.mxu0 %v1717
    %v1719 = vpop.f32.mrf.mxu0
    %v1720 = vadd.f32 %v1630, %v1719
    %v1721 = vand.u32 %v83, 4294901760
    %1722 = vmatmul.f32.gmra.mxu0 %v1721
    %v1723 = vpop.f32.mrf.mxu0
    %v1724 = vadd.f32 %v1638, %v1723
    %v1725 = vand.u32 %v86, 4294901760
    %1726 = vmatmul.f32.gmra.mxu0 %v1725
    %v1727 = vpop.f32.mrf.mxu0
    %v1728 = vadd.f32 %v1646, %v1727
    %v1729 = vand.u32 %v89, 4294901760
    %1730 = vmatmul.f32.gmra.mxu0 %v1729
    %v1731 = vpop.f32.mrf.mxu0
    %v1732 = vadd.f32 %v1654, %v1731
    %v1733 = vand.u32 %v92, 4294901760
    %1734 = vmatmul.f32.gmra.mxu0 %v1733
    %v1735 = vpop.f32.mrf.mxu0
    %v1736 = vadd.f32 %v1662, %v1735
    %v1737 = vand.u32 %v95, 4294901760
    %1738 = vmatmul.f32.gmra.mxu0 %v1737
    %v1739 = vpop.f32.mrf.mxu0
    %v1740 = vadd.f32 %v1670, %v1739
    %1741 = vdwg.mxu0
    %1742 = vmatpush.msra.mxu0 0.0
    %1743 = vmatpush.msra.mxu0 0.0
    %1744 = vmatpush.msra.mxu0 0.0
    %1745 = vmatpush.msra.mxu0 0.0
    %1746 = vmatpush.msra.mxu0 0.0
    %1747 = vmatpush.msra.mxu0 0.0
    %1748 = vmatpush.msra.mxu0 0.0
    %1749 = vmatpush.msra.mxu0 0.0
    %1750 = vmatpush.msra.mxu0 0.0
    %1751 = vmatpush.msra.mxu0 0.0
    %1752 = vmatpush.msra.mxu0 0.0
    %1753 = vmatpush.msra.mxu0 0.0
    %1754 = vmatpush.msra.mxu0 0.0
    %1755 = vmatpush.msra.mxu0 0.0
    %1756 = vmatpush.msra.mxu0 0.0
    %v1757 = vand.u32 %v47, 4294901760
    %v1758 = vsub.f32 %v47, %v1757
    %1759 = vmatpush.msra.mxu0 %v1758
    %v1760 = vand.u32 %v62, 4294901760
    %v1761 = vsub.f32 %v62, %v1760
    %1762 = vmatmul.f32.gmra.mxu0 %v1761
    %v1763 = vpop.f32.mrf.mxu0
    %v1764 = vadd.f32 %v1696, %v1763
    %v1765 = vand.u32 %v65, 4294901760
    %v1766 = vsub.f32 %v65, %v1765
    %1767 = vmatmul.f32.gmra.mxu0 %v1766
    %v1768 = vpop.f32.mrf.mxu0
    %v1769 = vadd.f32 %v1700, %v1768
    %v1770 = vand.u32 %v68, 4294901760
    %v1771 = vsub.f32 %v68, %v1770
    %1772 = vmatmul.f32.gmra.mxu0 %v1771
    %v1773 = vpop.f32.mrf.mxu0
    %v1774 = vadd.f32 %v1704, %v1773
    %v1775 = vand.u32 %v71, 4294901760
    %v1776 = vsub.f32 %v71, %v1775
    %1777 = vmatmul.f32.gmra.mxu0 %v1776
    %v1778 = vpop.f32.mrf.mxu0
    %v1779 = vadd.f32 %v1708, %v1778
    %v1780 = vand.u32 %v74, 4294901760
    %v1781 = vsub.f32 %v74, %v1780
    %1782 = vmatmul.f32.gmra.mxu0 %v1781
    %v1783 = vpop.f32.mrf.mxu0
    %v1784 = vadd.f32 %v1712, %v1783
    %v1785 = vand.u32 %v77, 4294901760
    %v1786 = vsub.f32 %v77, %v1785
    %1787 = vmatmul.f32.gmra.mxu0 %v1786
    %v1788 = vpop.f32.mrf.mxu0
    %v1789 = vadd.f32 %v1716, %v1788
    %v1790 = vand.u32 %v80, 4294901760
    %v1791 = vsub.f32 %v80, %v1790
    %1792 = vmatmul.f32.gmra.mxu0 %v1791
    %v1793 = vpop.f32.mrf.mxu0
    %v1794 = vadd.f32 %v1720, %v1793
    %v1795 = vand.u32 %v83, 4294901760
    %v1796 = vsub.f32 %v83, %v1795
    %1797 = vmatmul.f32.gmra.mxu0 %v1796
    %v1798 = vpop.f32.mrf.mxu0
    %v1799 = vadd.f32 %v1724, %v1798
    %v1800 = vand.u32 %v86, 4294901760
    %v1801 = vsub.f32 %v86, %v1800
    %1802 = vmatmul.f32.gmra.mxu0 %v1801
    %v1803 = vpop.f32.mrf.mxu0
    %v1804 = vadd.f32 %v1728, %v1803
    %v1805 = vand.u32 %v89, 4294901760
    %v1806 = vsub.f32 %v89, %v1805
    %1807 = vmatmul.f32.gmra.mxu0 %v1806
    %v1808 = vpop.f32.mrf.mxu0
    %v1809 = vadd.f32 %v1732, %v1808
    %v1810 = vand.u32 %v92, 4294901760
    %v1811 = vsub.f32 %v92, %v1810
    %1812 = vmatmul.f32.gmra.mxu0 %v1811
    %v1813 = vpop.f32.mrf.mxu0
    %v1814 = vadd.f32 %v1736, %v1813
    %v1815 = vand.u32 %v95, 4294901760
    %v1816 = vsub.f32 %v95, %v1815
    %1817 = vmatmul.f32.gmra.mxu0 %v1816
    %v1818 = vpop.f32.mrf.mxu0
    %v1819 = vadd.f32 %v1740, %v1818
    %1820 = vdwg.mxu0
    %1821 = vmatpush.msra.mxu0 0.0
    %1822 = vmatpush.msra.mxu0 0.0
    %1823 = vmatpush.msra.mxu0 0.0
    %1824 = vmatpush.msra.mxu0 0.0
    %1825 = vmatpush.msra.mxu0 0.0
    %1826 = vmatpush.msra.mxu0 0.0
    %1827 = vmatpush.msra.mxu0 0.0
    %1828 = vmatpush.msra.mxu0 0.0
    %1829 = vmatpush.msra.mxu0 0.0
    %1830 = vmatpush.msra.mxu0 0.0
    %1831 = vmatpush.msra.mxu0 0.0
    %1832 = vmatpush.msra.mxu0 0.0
    %1833 = vmatpush.msra.mxu0 0.0
    %1834 = vmatpush.msra.mxu0 0.0
    %1835 = vmatpush.msra.mxu0 0.0
    %v1836 = vand.u32 %v47, 4294901760
    %1837 = vmatpush.msra.mxu0 %v1836
    %v1838 = vand.u32 %v62, 4294901760
    %v1839 = vsub.f32 %v62, %v1838
    %v1840 = vand.u32 %v1839, 4294901760
    %1841 = vmatmul.f32.gmra.mxu0 %v1840
    %v1842 = vpop.f32.mrf.mxu0
    %v1843 = vadd.f32 %v1764, %v1842
    %v1844 = vand.u32 %v65, 4294901760
    %v1845 = vsub.f32 %v65, %v1844
    %v1846 = vand.u32 %v1845, 4294901760
    %1847 = vmatmul.f32.gmra.mxu0 %v1846
    %v1848 = vpop.f32.mrf.mxu0
    %v1849 = vadd.f32 %v1769, %v1848
    %v1850 = vand.u32 %v68, 4294901760
    %v1851 = vsub.f32 %v68, %v1850
    %v1852 = vand.u32 %v1851, 4294901760
    %1853 = vmatmul.f32.gmra.mxu0 %v1852
    %v1854 = vpop.f32.mrf.mxu0
    %v1855 = vadd.f32 %v1774, %v1854
    %v1856 = vand.u32 %v71, 4294901760
    %v1857 = vsub.f32 %v71, %v1856
    %v1858 = vand.u32 %v1857, 4294901760
    %1859 = vmatmul.f32.gmra.mxu0 %v1858
    %v1860 = vpop.f32.mrf.mxu0
    %v1861 = vadd.f32 %v1779, %v1860
    %v1862 = vand.u32 %v74, 4294901760
    %v1863 = vsub.f32 %v74, %v1862
    %v1864 = vand.u32 %v1863, 4294901760
    %1865 = vmatmul.f32.gmra.mxu0 %v1864
    %v1866 = vpop.f32.mrf.mxu0
    %v1867 = vadd.f32 %v1784, %v1866
    %v1868 = vand.u32 %v77, 4294901760
    %v1869 = vsub.f32 %v77, %v1868
    %v1870 = vand.u32 %v1869, 4294901760
    %1871 = vmatmul.f32.gmra.mxu0 %v1870
    %v1872 = vpop.f32.mrf.mxu0
    %v1873 = vadd.f32 %v1789, %v1872
    %v1874 = vand.u32 %v80, 4294901760
    %v1875 = vsub.f32 %v80, %v1874
    %v1876 = vand.u32 %v1875, 4294901760
    %1877 = vmatmul.f32.gmra.mxu0 %v1876
    %v1878 = vpop.f32.mrf.mxu0
    %v1879 = vadd.f32 %v1794, %v1878
    %v1880 = vand.u32 %v83, 4294901760
    %v1881 = vsub.f32 %v83, %v1880
    %v1882 = vand.u32 %v1881, 4294901760
    %1883 = vmatmul.f32.gmra.mxu0 %v1882
    %v1884 = vpop.f32.mrf.mxu0
    %v1885 = vadd.f32 %v1799, %v1884
    %v1886 = vand.u32 %v86, 4294901760
    %v1887 = vsub.f32 %v86, %v1886
    %v1888 = vand.u32 %v1887, 4294901760
    %1889 = vmatmul.f32.gmra.mxu0 %v1888
    %v1890 = vpop.f32.mrf.mxu0
    %v1891 = vadd.f32 %v1804, %v1890
    %v1892 = vand.u32 %v89, 4294901760
    %v1893 = vsub.f32 %v89, %v1892
    %v1894 = vand.u32 %v1893, 4294901760
    %1895 = vmatmul.f32.gmra.mxu0 %v1894
    %v1896 = vpop.f32.mrf.mxu0
    %v1897 = vadd.f32 %v1809, %v1896
    %v1898 = vand.u32 %v92, 4294901760
    %v1899 = vsub.f32 %v92, %v1898
    %v1900 = vand.u32 %v1899, 4294901760
    %1901 = vmatmul.f32.gmra.mxu0 %v1900
    %v1902 = vpop.f32.mrf.mxu0
    %v1903 = vadd.f32 %v1814, %v1902
    %v1904 = vand.u32 %v95, 4294901760
    %v1905 = vsub.f32 %v95, %v1904
    %v1906 = vand.u32 %v1905, 4294901760
    %1907 = vmatmul.f32.gmra.mxu0 %v1906
    %v1908 = vpop.f32.mrf.mxu0
    %v1909 = vadd.f32 %v1819, %v1908
    %1910 = vdwg.mxu0
    %1911 = vmatpush.msra.mxu0 0.0
    %1912 = vmatpush.msra.mxu0 0.0
    %1913 = vmatpush.msra.mxu0 0.0
    %1914 = vmatpush.msra.mxu0 0.0
    %1915 = vmatpush.msra.mxu0 0.0
    %1916 = vmatpush.msra.mxu0 0.0
    %1917 = vmatpush.msra.mxu0 0.0
    %1918 = vmatpush.msra.mxu0 0.0
    %1919 = vmatpush.msra.mxu0 0.0
    %1920 = vmatpush.msra.mxu0 0.0
    %1921 = vmatpush.msra.mxu0 0.0
    %1922 = vmatpush.msra.mxu0 0.0
    %1923 = vmatpush.msra.mxu0 0.0
    %1924 = vmatpush.msra.mxu0 0.0
    %1925 = vmatpush.msra.mxu0 0.0
    %v1926 = vand.u32 %v47, 4294901760
    %v1927 = vsub.f32 %v47, %v1926
    %v1928 = vand.u32 %v1927, 4294901760
    %1929 = vmatpush.msra.mxu0 %v1928
    %v1930 = vand.u32 %v62, 4294901760
    %1931 = vmatmul.f32.gmra.mxu0 %v1930
    %v1932 = vpop.f32.mrf.mxu0
    %v1933 = vadd.f32 %v1843, %v1932
    %v1934 = vand.u32 %v65, 4294901760
    %1935 = vmatmul.f32.gmra.mxu0 %v1934
    %v1936 = vpop.f32.mrf.mxu0
    %v1937 = vadd.f32 %v1849, %v1936
    %v1938 = vand.u32 %v68, 4294901760
    %1939 = vmatmul.f32.gmra.mxu0 %v1938
    %v1940 = vpop.f32.mrf.mxu0
    %v1941 = vadd.f32 %v1855, %v1940
    %v1942 = vand.u32 %v71, 4294901760
    %1943 = vmatmul.f32.gmra.mxu0 %v1942
    %v1944 = vpop.f32.mrf.mxu0
    %v1945 = vadd.f32 %v1861, %v1944
    %v1946 = vand.u32 %v74, 4294901760
    %1947 = vmatmul.f32.gmra.mxu0 %v1946
    %v1948 = vpop.f32.mrf.mxu0
    %v1949 = vadd.f32 %v1867, %v1948
    %v1950 = vand.u32 %v77, 4294901760
    %1951 = vmatmul.f32.gmra.mxu0 %v1950
    %v1952 = vpop.f32.mrf.mxu0
    %v1953 = vadd.f32 %v1873, %v1952
    %v1954 = vand.u32 %v80, 4294901760
    %1955 = vmatmul.f32.gmra.mxu0 %v1954
    %v1956 = vpop.f32.mrf.mxu0
    %v1957 = vadd.f32 %v1879, %v1956
    %v1958 = vand.u32 %v83, 4294901760
    %1959 = vmatmul.f32.gmra.mxu0 %v1958
    %v1960 = vpop.f32.mrf.mxu0
    %v1961 = vadd.f32 %v1885, %v1960
    %v1962 = vand.u32 %v86, 4294901760
    %1963 = vmatmul.f32.gmra.mxu0 %v1962
    %v1964 = vpop.f32.mrf.mxu0
    %v1965 = vadd.f32 %v1891, %v1964
    %v1966 = vand.u32 %v89, 4294901760
    %1967 = vmatmul.f32.gmra.mxu0 %v1966
    %v1968 = vpop.f32.mrf.mxu0
    %v1969 = vadd.f32 %v1897, %v1968
    %v1970 = vand.u32 %v92, 4294901760
    %1971 = vmatmul.f32.gmra.mxu0 %v1970
    %v1972 = vpop.f32.mrf.mxu0
    %v1973 = vadd.f32 %v1903, %v1972
    %v1974 = vand.u32 %v95, 4294901760
    %1975 = vmatmul.f32.gmra.mxu0 %v1974
    %v1976 = vpop.f32.mrf.mxu0
    %v1977 = vadd.f32 %v1909, %v1976
    %1978 = vdwg.mxu0
    %1979 = vmatpush.msra.mxu0 0.0
    %1980 = vmatpush.msra.mxu0 0.0
    %1981 = vmatpush.msra.mxu0 0.0
    %1982 = vmatpush.msra.mxu0 0.0
    %1983 = vmatpush.msra.mxu0 0.0
    %1984 = vmatpush.msra.mxu0 0.0
    %1985 = vmatpush.msra.mxu0 0.0
    %1986 = vmatpush.msra.mxu0 0.0
    %1987 = vmatpush.msra.mxu0 0.0
    %1988 = vmatpush.msra.mxu0 0.0
    %1989 = vmatpush.msra.mxu0 0.0
    %1990 = vmatpush.msra.mxu0 0.0
    %1991 = vmatpush.msra.mxu0 0.0
    %1992 = vmatpush.msra.mxu0 0.0
    %1993 = vmatpush.msra.mxu0 0.0
    %v1994 = vand.u32 %v47, 4294901760
    %1995 = vmatpush.msra.mxu0 %v1994
    %v1996 = vand.u32 %v62, 4294901760
    %1997 = vmatmul.f32.gmra.mxu0 %v1996
    %v1998 = vpop.f32.mrf.mxu0
    %v1999 = vadd.f32 %v1933, %v1998
    %v2000 = vand.u32 %v65, 4294901760
    %2001 = vmatmul.f32.gmra.mxu0 %v2000
    %v2002 = vpop.f32.mrf.mxu0
    %v2003 = vadd.f32 %v1937, %v2002
    %v2004 = vand.u32 %v68, 4294901760
    %2005 = vmatmul.f32.gmra.mxu0 %v2004
    %v2006 = vpop.f32.mrf.mxu0
    %v2007 = vadd.f32 %v1941, %v2006
    %v2008 = vand.u32 %v71, 4294901760
    %2009 = vmatmul.f32.gmra.mxu0 %v2008
    %v2010 = vpop.f32.mrf.mxu0
    %v2011 = vadd.f32 %v1945, %v2010
    %v2012 = vand.u32 %v74, 4294901760
    %2013 = vmatmul.f32.gmra.mxu0 %v2012
    %v2014 = vpop.f32.mrf.mxu0
    %v2015 = vadd.f32 %v1949, %v2014
    %v2016 = vand.u32 %v77, 4294901760
    %2017 = vmatmul.f32.gmra.mxu0 %v2016
    %v2018 = vpop.f32.mrf.mxu0
    %v2019 = vadd.f32 %v1953, %v2018
    %v2020 = vand.u32 %v80, 4294901760
    %2021 = vmatmul.f32.gmra.mxu0 %v2020
    %v2022 = vpop.f32.mrf.mxu0
    %v2023 = vadd.f32 %v1957, %v2022
    %v2024 = vand.u32 %v83, 4294901760
    %2025 = vmatmul.f32.gmra.mxu0 %v2024
    %v2026 = vpop.f32.mrf.mxu0
    %v2027 = vadd.f32 %v1961, %v2026
    %v2028 = vand.u32 %v86, 4294901760
    %2029 = vmatmul.f32.gmra.mxu0 %v2028
    %v2030 = vpop.f32.mrf.mxu0
    %v2031 = vadd.f32 %v1965, %v2030
    %v2032 = vand.u32 %v89, 4294901760
    %2033 = vmatmul.f32.gmra.mxu0 %v2032
    %v2034 = vpop.f32.mrf.mxu0
    %v2035 = vadd.f32 %v1969, %v2034
    %v2036 = vand.u32 %v92, 4294901760
    %2037 = vmatmul.f32.gmra.mxu0 %v2036
    %v2038 = vpop.f32.mrf.mxu0
    %v2039 = vadd.f32 %v1973, %v2038
    %v2040 = vand.u32 %v95, 4294901760
    %2041 = vmatmul.f32.gmra.mxu0 %v2040
    %v2042 = vpop.f32.mrf.mxu0
    %v2043 = vadd.f32 %v1977, %v2042
    %2044 = vdwg.mxu0
    %v2045 = vmul.f32 %v538, %v538
    %v2046 = vmul.f32 %v1025, %v1025
    %v2047 = vmul.f32 %v1512, %v1512
    %v2048 = vmul.f32 %v1999, %v1999
    %v2049 = vmul.f32 %v542, %v542
    %v2050 = vmul.f32 %v1029, %v1029
    %v2051 = vmul.f32 %v1516, %v1516
    %v2052 = vmul.f32 %v2003, %v2003
    %v2053 = vmul.f32 %v546, %v546
    %v2054 = vmul.f32 %v1033, %v1033
    %v2055 = vmul.f32 %v1520, %v1520
    %v2056 = vmul.f32 %v2007, %v2007
    %v2057 = vmul.f32 %v550, %v550
    %v2058 = vmul.f32 %v1037, %v1037
    %v2059 = vmul.f32 %v1524, %v1524
    %v2060 = vmul.f32 %v2011, %v2011
    %v2061 = vmul.f32 %v554, %v554
    %v2062 = vmul.f32 %v1041, %v1041
    %v2063 = vmul.f32 %v1528, %v1528
    %v2064 = vmul.f32 %v2015, %v2015
    %v2065 = vmul.f32 %v558, %v558
    %v2066 = vmul.f32 %v1045, %v1045
    %v2067 = vmul.f32 %v1532, %v1532
    %v2068 = vmul.f32 %v2019, %v2019
    %v2069 = vmul.f32 %v562, %v562
    %v2070 = vmul.f32 %v1049, %v1049
    %v2071 = vmul.f32 %v1536, %v1536
    %v2072 = vmul.f32 %v2023, %v2023
    %v2073 = vmul.f32 %v566, %v566
    %v2074 = vmul.f32 %v1053, %v1053
    %v2075 = vmul.f32 %v1540, %v1540
    %v2076 = vmul.f32 %v2027, %v2027
    %v2077 = vadd.f32 %v2045, %v2061
    %v2078 = vadd.f32 %v2046, %v2062
    %v2079 = vadd.f32 %v2047, %v2063
    %v2080 = vadd.f32 %v2048, %v2064
    %v2081 = vadd.f32 %v2049, %v2065
    %v2082 = vadd.f32 %v2050, %v2066
    %v2083 = vadd.f32 %v2051, %v2067
    %v2084 = vadd.f32 %v2052, %v2068
    %v2085 = vadd.f32 %v2053, %v2069
    %v2086 = vadd.f32 %v2054, %v2070
    %v2087 = vadd.f32 %v2055, %v2071
    %v2088 = vadd.f32 %v2056, %v2072
    %v2089 = vadd.f32 %v2057, %v2073
    %v2090 = vadd.f32 %v2058, %v2074
    %v2091 = vadd.f32 %v2059, %v2075
    %v2092 = vadd.f32 %v2060, %v2076
    %v2093 = vsub.f32 0.0, %v2077
    %v2094 = vsub.f32 0.0, %v2078
    %v2095 = vsub.f32 0.0, %v2079
    %v2096 = vsub.f32 0.0, %v2080
    %v2097 = vsub.f32 0.0, %v2081
    %v2098 = vsub.f32 0.0, %v2082
    %v2099 = vsub.f32 0.0, %v2083
    %v2100 = vsub.f32 0.0, %v2084
    %v2101 = vsub.f32 0.0, %v2085
    %v2102 = vsub.f32 0.0, %v2086
    %v2103 = vsub.f32 0.0, %v2087
    %v2104 = vsub.f32 0.0, %v2088
    %v2105 = vsub.f32 0.0, %v2089
    %v2106 = vsub.f32 0.0, %v2090
    %v2107 = vsub.f32 0.0, %v2091
    %v2108 = vsub.f32 0.0, %v2092
    %v2109 = vmul.f32 %v2093, 1.442695
    %v2110 = vpow.pop %v2109
    %v2111 = vmul.f32 %v2094, 1.442695
    %v2112 = vpow.pop %v2111
    %v2113 = vmul.f32 %v2095, 1.442695
    %v2114 = vpow.pop %v2113
    %v2115 = vmul.f32 %v2096, 1.442695
    %v2116 = vpow.pop %v2115
    %v2117 = vmul.f32 %v2097, 1.442695
    %v2118 = vpow.pop %v2117
    %v2119 = vmul.f32 %v2098, 1.442695
    %v2120 = vpow.pop %v2119
    %v2121 = vmul.f32 %v2099, 1.442695
    %v2122 = vpow.pop %v2121
    %v2123 = vmul.f32 %v2100, 1.442695
    %v2124 = vpow.pop %v2123
    %v2125 = vmul.f32 %v2101, 1.442695
    %v2126 = vpow.pop %v2125
    %v2127 = vmul.f32 %v2102, 1.442695
    %v2128 = vpow.pop %v2127
    %v2129 = vmul.f32 %v2103, 1.442695
    %v2130 = vpow.pop %v2129
    %v2131 = vmul.f32 %v2104, 1.442695
    %v2132 = vpow.pop %v2131
    %v2133 = vmul.f32 %v2105, 1.442695
    %v2134 = vpow.pop %v2133
    %v2135 = vmul.f32 %v2106, 1.442695
    %v2136 = vpow.pop %v2135
    %v2137 = vmul.f32 %v2107, 1.442695
    %v2138 = vpow.pop %v2137
    %v2139 = vmul.f32 %v2108, 1.442695
    %v2140 = vpow.pop %v2139
    %v2141 = vand.u32 2147483647, %v570
    %vm2142 = vcmp.le.f32.partialorder %v2141, 0.7853982
    %vm2143 = vcmp.lt.s32.totalorder %v570, 0
    %v2144 = vand.u32 %v570, 2139095040
    %v2145 = vshrl.u32 %v2144, 23
    %v2146 = vsub.s32 %v2145, 127
    %v2147 = vand.u32 2147483647, %v570
    %v2148 = vand.u32 %v2147, 8388607
    %v2149 = vor.u32 %v2148, 8388608
    %v2150 = vsub.s32 0, %v2149
    %v2151 = vadd.s32 %v2146, 1
    %vm2152 = vcmp.gt.s32.totalorder %v2151, 0
    %v2153 = vsel %vm2152, %v2151, 0
    %v2154 = vshrl.u32 %v2153, 5
    %v2155 = vand.u32 %v2153, 31
    %v2156 = vsub.s32 32, %v2155
    %v2157 = vshrl.u32 683565275, %v2156
    %v2158 = vshll.u32 683565275, %v2155
    %v2159 = vshrl.u32 2475754826, %v2156
    %v2160 = vor.u32 %v2158, %v2159
    %v2161 = vshll.u32 2475754826, %v2155
    %v2162 = vshrl.u32 2131351028, %v2156
    %v2163 = vor.u32 %v2161, %v2162
    %v2164 = vshll.u32 2131351028, %v2155
    %v2165 = vshrl.u32 2102212464, %v2156
    %v2166 = vor.u32 %v2164, %v2165
    %v2167 = vshll.u32 2102212464, %v2155
    %v2168 = vshrl.u32 920167782, %v2156
    %v2169 = vor.u32 %v2167, %v2168
    %v2170 = vshll.u32 920167782, %v2155
    %v2171 = vshrl.u32 1326507024, %v2156
    %v2172 = vor.u32 %v2170, %v2171
    %vm2173 = vcmp.lt.s32.totalorder %v2154, 1
    %vm2174 = vcmp.lt.s32.totalorder %v2154, 2
    %vm2175 = vcmp.lt.s32.totalorder %v2154, 3
    %vm2176 = vcmp.lt.s32.totalorder %v2154, 4
    %v2177 = vsel %vm2173, %v2157, %v2160
    %v2178 = vsel %vm2176, %v2166, 2102212464
    %v2179 = vsel %vm2175, %v2163, %v2178
    %v2180 = vsel %vm2174, %v2177, %v2179
    %v2181 = vsel %vm2173, %v2160, %v2163
    %v2182 = vsel %vm2176, %v2169, 920167782
    %v2183 = vsel %vm2175, %v2166, %v2182
    %v2184 = vsel %vm2174, %v2181, %v2183
    %v2185 = vsel %vm2173, %v2163, %v2166
    %v2186 = vsel %vm2176, %v2172, 1326507024
    %v2187 = vsel %vm2175, %v2169, %v2186
    %v2188 = vsel %vm2174, %v2185, %v2187
    %v2189 = vshll.u32 %v2149, 8
    %v2190 = vand.u32 %v2189, 65535
    %v2191 = vshrl.u32 %v2189, 16
    %v2192 = vand.u32 %v2188, 65535
    %v2193 = vshrl.u32 %v2188, 16
    %v2194 = vmul.u32 %v2190, %v2192
    %v2195 = vmul.u32 %v2190, %v2193
    %v2196 = vmul.u32 %v2191, %v2192
    %v2197 = vmul.u32 %v2191, %v2193
    %v2198 = vshll.u32 %v2195, 16
    %v2199 = vshrl.u32 %v2195, 16
    %v2200 = vshll.u32 %v2196, 16
    %v2201 = vshrl.u32 %v2196, 16
    %vm2202 = vc.u32 %v2194, %v2198
    %v2203 = vsel %vm2202, 1, 0
    %v2204 = vadd.s32 %v2194, %v2198
    %v2205 = vadd.s32 %v2197, %v2203
    %vm2206 = vc.u32 %v2204, %v2200
    %v2207 = vsel %vm2206, 1, 0
    %v2208 = vadd.s32 %v2204, %v2200
    %v2209 = vadd.s32 %v2205, %v2207
    %v2210 = vadd.s32 %v2209, %v2199
    %v2211 = vadd.s32 %v2210, %v2201
    %v2212 = vand.u32 %v2189, 65535
    %v2213 = vshrl.u32 %v2189, 16
    %v2214 = vand.u32 %v2184, 65535
    %v2215 = vshrl.u32 %v2184, 16
    %v2216 = vmul.u32 %v2212, %v2214
    %v2217 = vmul.u32 %v2212, %v2215
    %v2218 = vmul.u32 %v2213, %v2214
    %v2219 = vmul.u32 %v2213, %v2215
    %v2220 = vshll.u32 %v2217, 16
    %v2221 = vshrl.u32 %v2217, 16
    %v2222 = vshll.u32 %v2218, 16
    %v2223 = vshrl.u32 %v2218, 16
    %vm2224 = vc.u32 %v2216, %v2220
    %v2225 = vsel %vm2224, 1, 0
    %v2226 = vadd.s32 %v2216, %v2220
    %v2227 = vadd.s32 %v2219, %v2225
    %vm2228 = vc.u32 %v2226, %v2222
    %v2229 = vsel %vm2228, 1, 0
    %v2230 = vadd.s32 %v2226, %v2222
    %v2231 = vadd.s32 %v2227, %v2229
    %v2232 = vadd.s32 %v2231, %v2221
    %v2233 = vadd.s32 %v2232, %v2223
    %v2234 = vmul.u32 %v2189, %v2180
    %v2235 = vadd.s32 %v2211, %v2230
    %vm2236 = vc.u32 %v2211, %v2230
    %v2237 = vadd.s32 %v2233, 1
    %v2238 = vsel %vm2236, %v2237, %v2233
    %v2239 = vadd.s32 %v2234, %v2238
    %v2240 = vadd.s32 %v2239, 536870912
    %v2241 = vshrl.u32 %v2240, 30
    %v2242 = vshll.u32 %v2241, 30
    %v2243 = vsub.s32 %v2239, %v2242
    %vm2244 = vcmp.lt.s32.totalorder %v2243, 0
    %v2245 = vsub.s32 0, %v2243
    %v2246 = vsel %vm2244, %v2245, %v2243
    %v2247 = vclz %v2246
    %v2248 = vsub.s32 %v2247, 2
    %vm2249 = vcmp.gt.s32.totalorder 0, %v2248
    %v2250 = vsel %vm2249, 0, %v2248
    %v2251 = vsub.s32 32, %v2250
    %v2252 = vshll.u32 %v2243, %v2250
    %v2253 = vshrl.u32 %v2235, %v2251
    %v2254 = vor.u32 %v2252, %v2253
    %v2255 = vsub.s32 4294967266, %v2250
    %v2256 = vadd.s32 %v2255, 127
    %v2257 = vshll.u32 %v2256, 23
    %v2258 = vor.u32 4788187, %v2257
    %v2259 = vand.u32 2147483647, %v2258
    %v2261 = vcvt.s32.f32 %v2254
    %v2262 = vmul.f32 %v2261, %v2259
    %v2263 = vxor.u32 %v2262, 2147483648
    %v2264 = vsel %vm2143, %v2263, %v2262
    %v2265 = vsub.s32 4, %v2241
    %v2266 = vsel %vm2143, %v2265, %v2241
    %v2267 = vsel %vm2142, %v570, %v2264
    %v2268 = vsel %vm2142, 0, %v2266
    %v2269 = vmul.f32 %v2267, %v2267
    %v2270 = vmul.f32 %v2269, -0.001358992
    %v2271 = vadd.f32 %v2270, 0.041655596
    %v2272 = vmul.f32 %v2269, %v2271
    %v2273 = vadd.f32 %v2272, -0.4999988
    %v2274 = vmul.f32 %v2269, %v2273
    %v2275 = vadd.f32 1.0, %v2274
    %v2276 = vmul.f32 %v2267, %v2267
    %v2277 = vmul.f32 %v2276, -0.00019511016
    %v2278 = vadd.f32 %v2277, 0.008332121
    %v2279 = vmul.f32 %v2276, %v2278
    %v2280 = vadd.f32 %v2279, -0.16666654
    %v2281 = vmul.f32 %v2276, %v2280
    %v2282 = vadd.f32 %v2281, 1.0
    %v2283 = vmul.f32 %v2282, %v2267
    %vm2284 = vweird.f32 %v570
    %v2285 = vadd.s32 %v2268, 3
    %v2286 = vand.u32 %v2285, 3
    %vm2287 = vcmp.lt.s32.totalorder %v2286, 2
    %vm2288 = vcmp.eq.s32.totalorder %v2286, 0
    %v2289 = vxor.u32 %v2283, 2147483648
    %v2290 = vsel %vm2288, %v2275, %v2289
    %vm2291 = vcmp.eq.s32.totalorder %v2286, 2
    %v2292 = vxor.u32 %v2275, 2147483648
    %v2293 = vsel %vm2291, %v2292, %v2283
    %v2294 = vsel %vm2287, %v2290, %v2293
    %v2295 = vsel %vm2284, nan, %v2294
    %v2296 = vand.u32 2147483647, %v1057
    %vm2297 = vcmp.le.f32.partialorder %v2296, 0.7853982
    %vm2298 = vcmp.lt.s32.totalorder %v1057, 0
    %v2299 = vand.u32 %v1057, 2139095040
    %v2300 = vshrl.u32 %v2299, 23
    %v2301 = vsub.s32 %v2300, 127
    %v2302 = vand.u32 2147483647, %v1057
    %v2303 = vand.u32 %v2302, 8388607
    %v2304 = vor.u32 %v2303, 8388608
    %v2305 = vsub.s32 0, %v2304
    %v2306 = vadd.s32 %v2301, 1
    %vm2307 = vcmp.gt.s32.totalorder %v2306, 0
    %v2308 = vsel %vm2307, %v2306, 0
    %v2309 = vshrl.u32 %v2308, 5
    %v2310 = vand.u32 %v2308, 31
    %v2311 = vsub.s32 32, %v2310
    %v2312 = vshrl.u32 683565275, %v2311
    %v2313 = vshll.u32 683565275, %v2310
    %v2314 = vshrl.u32 2475754826, %v2311
    %v2315 = vor.u32 %v2313, %v2314
    %v2316 = vshll.u32 2475754826, %v2310
    %v2317 = vshrl.u32 2131351028, %v2311
    %v2318 = vor.u32 %v2316, %v2317
    %v2319 = vshll.u32 2131351028, %v2310
    %v2320 = vshrl.u32 2102212464, %v2311
    %v2321 = vor.u32 %v2319, %v2320
    %v2322 = vshll.u32 2102212464, %v2310
    %v2323 = vshrl.u32 920167782, %v2311
    %v2324 = vor.u32 %v2322, %v2323
    %v2325 = vshll.u32 920167782, %v2310
    %v2326 = vshrl.u32 1326507024, %v2311
    %v2327 = vor.u32 %v2325, %v2326
    %vm2328 = vcmp.lt.s32.totalorder %v2309, 1
    %vm2329 = vcmp.lt.s32.totalorder %v2309, 2
    %vm2330 = vcmp.lt.s32.totalorder %v2309, 3
    %vm2331 = vcmp.lt.s32.totalorder %v2309, 4
    %v2332 = vsel %vm2328, %v2312, %v2315
    %v2333 = vsel %vm2331, %v2321, 2102212464
    %v2334 = vsel %vm2330, %v2318, %v2333
    %v2335 = vsel %vm2329, %v2332, %v2334
    %v2336 = vsel %vm2328, %v2315, %v2318
    %v2337 = vsel %vm2331, %v2324, 920167782
    %v2338 = vsel %vm2330, %v2321, %v2337
    %v2339 = vsel %vm2329, %v2336, %v2338
    %v2340 = vsel %vm2328, %v2318, %v2321
    %v2341 = vsel %vm2331, %v2327, 1326507024
    %v2342 = vsel %vm2330, %v2324, %v2341
    %v2343 = vsel %vm2329, %v2340, %v2342
    %v2344 = vshll.u32 %v2304, 8
    %v2345 = vand.u32 %v2344, 65535
    %v2346 = vshrl.u32 %v2344, 16
    %v2347 = vand.u32 %v2343, 65535
    %v2348 = vshrl.u32 %v2343, 16
    %v2349 = vmul.u32 %v2345, %v2347
    %v2350 = vmul.u32 %v2345, %v2348
    %v2351 = vmul.u32 %v2346, %v2347
    %v2352 = vmul.u32 %v2346, %v2348
    %v2353 = vshll.u32 %v2350, 16
    %v2354 = vshrl.u32 %v2350, 16
    %v2355 = vshll.u32 %v2351, 16
    %v2356 = vshrl.u32 %v2351, 16
    %vm2357 = vc.u32 %v2349, %v2353
    %v2358 = vsel %vm2357, 1, 0
    %v2359 = vadd.s32 %v2349, %v2353
    %v2360 = vadd.s32 %v2352, %v2358
    %vm2361 = vc.u32 %v2359, %v2355
    %v2362 = vsel %vm2361, 1, 0
    %v2363 = vadd.s32 %v2359, %v2355
    %v2364 = vadd.s32 %v2360, %v2362
    %v2365 = vadd.s32 %v2364, %v2354
    %v2366 = vadd.s32 %v2365, %v2356
    %v2367 = vand.u32 %v2344, 65535
    %v2368 = vshrl.u32 %v2344, 16
    %v2369 = vand.u32 %v2339, 65535
    %v2370 = vshrl.u32 %v2339, 16
    %v2371 = vmul.u32 %v2367, %v2369
    %v2372 = vmul.u32 %v2367, %v2370
    %v2373 = vmul.u32 %v2368, %v2369
    %v2374 = vmul.u32 %v2368, %v2370
    %v2375 = vshll.u32 %v2372, 16
    %v2376 = vshrl.u32 %v2372, 16
    %v2377 = vshll.u32 %v2373, 16
    %v2378 = vshrl.u32 %v2373, 16
    %vm2379 = vc.u32 %v2371, %v2375
    %v2380 = vsel %vm2379, 1, 0
    %v2381 = vadd.s32 %v2371, %v2375
    %v2382 = vadd.s32 %v2374, %v2380
    %vm2383 = vc.u32 %v2381, %v2377
    %v2384 = vsel %vm2383, 1, 0
    %v2385 = vadd.s32 %v2381, %v2377
    %v2386 = vadd.s32 %v2382, %v2384
    %v2387 = vadd.s32 %v2386, %v2376
    %v2388 = vadd.s32 %v2387, %v2378
    %v2389 = vmul.u32 %v2344, %v2335
    %v2390 = vadd.s32 %v2366, %v2385
    %vm2391 = vc.u32 %v2366, %v2385
    %v2392 = vadd.s32 %v2388, 1
    %v2393 = vsel %vm2391, %v2392, %v2388
    %v2394 = vadd.s32 %v2389, %v2393
    %v2395 = vadd.s32 %v2394, 536870912
    %v2396 = vshrl.u32 %v2395, 30
    %v2397 = vshll.u32 %v2396, 30
    %v2398 = vsub.s32 %v2394, %v2397
    %vm2399 = vcmp.lt.s32.totalorder %v2398, 0
    %v2400 = vsub.s32 0, %v2398
    %v2401 = vsel %vm2399, %v2400, %v2398
    %v2402 = vclz %v2401
    %v2403 = vsub.s32 %v2402, 2
    %vm2404 = vcmp.gt.s32.totalorder 0, %v2403
    %v2405 = vsel %vm2404, 0, %v2403
    %v2406 = vsub.s32 32, %v2405
    %v2407 = vshll.u32 %v2398, %v2405
    %v2408 = vshrl.u32 %v2390, %v2406
    %v2409 = vor.u32 %v2407, %v2408
    %v2410 = vsub.s32 4294967266, %v2405
    %v2411 = vadd.s32 %v2410, 127
    %v2412 = vshll.u32 %v2411, 23
    %v2413 = vor.u32 4788187, %v2412
    %v2414 = vand.u32 2147483647, %v2413
    %v2416 = vcvt.s32.f32 %v2409
    %v2417 = vmul.f32 %v2416, %v2414
    %v2418 = vxor.u32 %v2417, 2147483648
    %v2419 = vsel %vm2298, %v2418, %v2417
    %v2420 = vsub.s32 4, %v2396
    %v2421 = vsel %vm2298, %v2420, %v2396
    %v2422 = vsel %vm2297, %v1057, %v2419
    %v2423 = vsel %vm2297, 0, %v2421
    %v2424 = vmul.f32 %v2422, %v2422
    %v2425 = vmul.f32 %v2424, -0.001358992
    %v2426 = vadd.f32 %v2425, 0.041655596
    %v2427 = vmul.f32 %v2424, %v2426
    %v2428 = vadd.f32 %v2427, -0.4999988
    %v2429 = vmul.f32 %v2424, %v2428
    %v2430 = vadd.f32 1.0, %v2429
    %v2431 = vmul.f32 %v2422, %v2422
    %v2432 = vmul.f32 %v2431, -0.00019511016
    %v2433 = vadd.f32 %v2432, 0.008332121
    %v2434 = vmul.f32 %v2431, %v2433
    %v2435 = vadd.f32 %v2434, -0.16666654
    %v2436 = vmul.f32 %v2431, %v2435
    %v2437 = vadd.f32 %v2436, 1.0
    %v2438 = vmul.f32 %v2437, %v2422
    %vm2439 = vweird.f32 %v1057
    %v2440 = vadd.s32 %v2423, 3
    %v2441 = vand.u32 %v2440, 3
    %vm2442 = vcmp.lt.s32.totalorder %v2441, 2
    %vm2443 = vcmp.eq.s32.totalorder %v2441, 0
    %v2444 = vxor.u32 %v2438, 2147483648
    %v2445 = vsel %vm2443, %v2430, %v2444
    %vm2446 = vcmp.eq.s32.totalorder %v2441, 2
    %v2447 = vxor.u32 %v2430, 2147483648
    %v2448 = vsel %vm2446, %v2447, %v2438
    %v2449 = vsel %vm2442, %v2445, %v2448
    %v2450 = vsel %vm2439, nan, %v2449
    %v2451 = vand.u32 2147483647, %v1544
    %vm2452 = vcmp.le.f32.partialorder %v2451, 0.7853982
    %vm2453 = vcmp.lt.s32.totalorder %v1544, 0
    %v2454 = vand.u32 %v1544, 2139095040
    %v2455 = vshrl.u32 %v2454, 23
    %v2456 = vsub.s32 %v2455, 127
    %v2457 = vand.u32 2147483647, %v1544
    %v2458 = vand.u32 %v2457, 8388607
    %v2459 = vor.u32 %v2458, 8388608
    %v2460 = vsub.s32 0, %v2459
    %v2461 = vadd.s32 %v2456, 1
    %vm2462 = vcmp.gt.s32.totalorder %v2461, 0
    %v2463 = vsel %vm2462, %v2461, 0
    %v2464 = vshrl.u32 %v2463, 5
    %v2465 = vand.u32 %v2463, 31
    %v2466 = vsub.s32 32, %v2465
    %v2467 = vshrl.u32 683565275, %v2466
    %v2468 = vshll.u32 683565275, %v2465
    %v2469 = vshrl.u32 2475754826, %v2466
    %v2470 = vor.u32 %v2468, %v2469
    %v2471 = vshll.u32 2475754826, %v2465
    %v2472 = vshrl.u32 2131351028, %v2466
    %v2473 = vor.u32 %v2471, %v2472
    %v2474 = vshll.u32 2131351028, %v2465
    %v2475 = vshrl.u32 2102212464, %v2466
    %v2476 = vor.u32 %v2474, %v2475
    %v2477 = vshll.u32 2102212464, %v2465
    %v2478 = vshrl.u32 920167782, %v2466
    %v2479 = vor.u32 %v2477, %v2478
    %v2480 = vshll.u32 920167782, %v2465
    %v2481 = vshrl.u32 1326507024, %v2466
    %v2482 = vor.u32 %v2480, %v2481
    %vm2483 = vcmp.lt.s32.totalorder %v2464, 1
    %vm2484 = vcmp.lt.s32.totalorder %v2464, 2
    %vm2485 = vcmp.lt.s32.totalorder %v2464, 3
    %vm2486 = vcmp.lt.s32.totalorder %v2464, 4
    %v2487 = vsel %vm2483, %v2467, %v2470
    %v2488 = vsel %vm2486, %v2476, 2102212464
    %v2489 = vsel %vm2485, %v2473, %v2488
    %v2490 = vsel %vm2484, %v2487, %v2489
    %v2491 = vsel %vm2483, %v2470, %v2473
    %v2492 = vsel %vm2486, %v2479, 920167782
    %v2493 = vsel %vm2485, %v2476, %v2492
    %v2494 = vsel %vm2484, %v2491, %v2493
    %v2495 = vsel %vm2483, %v2473, %v2476
    %v2496 = vsel %vm2486, %v2482, 1326507024
    %v2497 = vsel %vm2485, %v2479, %v2496
    %v2498 = vsel %vm2484, %v2495, %v2497
    %v2499 = vshll.u32 %v2459, 8
    %v2500 = vand.u32 %v2499, 65535
    %v2501 = vshrl.u32 %v2499, 16
    %v2502 = vand.u32 %v2498, 65535
    %v2503 = vshrl.u32 %v2498, 16
    %v2504 = vmul.u32 %v2500, %v2502
    %v2505 = vmul.u32 %v2500, %v2503
    %v2506 = vmul.u32 %v2501, %v2502
    %v2507 = vmul.u32 %v2501, %v2503
    %v2508 = vshll.u32 %v2505, 16
    %v2509 = vshrl.u32 %v2505, 16
    %v2510 = vshll.u32 %v2506, 16
    %v2511 = vshrl.u32 %v2506, 16
    %vm2512 = vc.u32 %v2504, %v2508
    %v2513 = vsel %vm2512, 1, 0
    %v2514 = vadd.s32 %v2504, %v2508
    %v2515 = vadd.s32 %v2507, %v2513
    %vm2516 = vc.u32 %v2514, %v2510
    %v2517 = vsel %vm2516, 1, 0
    %v2518 = vadd.s32 %v2514, %v2510
    %v2519 = vadd.s32 %v2515, %v2517
    %v2520 = vadd.s32 %v2519, %v2509
    %v2521 = vadd.s32 %v2520, %v2511
    %v2522 = vand.u32 %v2499, 65535
    %v2523 = vshrl.u32 %v2499, 16
    %v2524 = vand.u32 %v2494, 65535
    %v2525 = vshrl.u32 %v2494, 16
    %v2526 = vmul.u32 %v2522, %v2524
    %v2527 = vmul.u32 %v2522, %v2525
    %v2528 = vmul.u32 %v2523, %v2524
    %v2529 = vmul.u32 %v2523, %v2525
    %v2530 = vshll.u32 %v2527, 16
    %v2531 = vshrl.u32 %v2527, 16
    %v2532 = vshll.u32 %v2528, 16
    %v2533 = vshrl.u32 %v2528, 16
    %vm2534 = vc.u32 %v2526, %v2530
    %v2535 = vsel %vm2534, 1, 0
    %v2536 = vadd.s32 %v2526, %v2530
    %v2537 = vadd.s32 %v2529, %v2535
    %vm2538 = vc.u32 %v2536, %v2532
    %v2539 = vsel %vm2538, 1, 0
    %v2540 = vadd.s32 %v2536, %v2532
    %v2541 = vadd.s32 %v2537, %v2539
    %v2542 = vadd.s32 %v2541, %v2531
    %v2543 = vadd.s32 %v2542, %v2533
    %v2544 = vmul.u32 %v2499, %v2490
    %v2545 = vadd.s32 %v2521, %v2540
    %vm2546 = vc.u32 %v2521, %v2540
    %v2547 = vadd.s32 %v2543, 1
    %v2548 = vsel %vm2546, %v2547, %v2543
    %v2549 = vadd.s32 %v2544, %v2548
    %v2550 = vadd.s32 %v2549, 536870912
    %v2551 = vshrl.u32 %v2550, 30
    %v2552 = vshll.u32 %v2551, 30
    %v2553 = vsub.s32 %v2549, %v2552
    %vm2554 = vcmp.lt.s32.totalorder %v2553, 0
    %v2555 = vsub.s32 0, %v2553
    %v2556 = vsel %vm2554, %v2555, %v2553
    %v2557 = vclz %v2556
    %v2558 = vsub.s32 %v2557, 2
    %vm2559 = vcmp.gt.s32.totalorder 0, %v2558
    %v2560 = vsel %vm2559, 0, %v2558
    %v2561 = vsub.s32 32, %v2560
    %v2562 = vshll.u32 %v2553, %v2560
    %v2563 = vshrl.u32 %v2545, %v2561
    %v2564 = vor.u32 %v2562, %v2563
    %v2565 = vsub.s32 4294967266, %v2560
    %v2566 = vadd.s32 %v2565, 127
    %v2567 = vshll.u32 %v2566, 23
    %v2568 = vor.u32 4788187, %v2567
    %v2569 = vand.u32 2147483647, %v2568
    %v2571 = vcvt.s32.f32 %v2564
    %v2572 = vmul.f32 %v2571, %v2569
    %v2573 = vxor.u32 %v2572, 2147483648
    %v2574 = vsel %vm2453, %v2573, %v2572
    %v2575 = vsub.s32 4, %v2551
    %v2576 = vsel %vm2453, %v2575, %v2551
    %v2577 = vsel %vm2452, %v1544, %v2574
    %v2578 = vsel %vm2452, 0, %v2576
    %v2579 = vmul.f32 %v2577, %v2577
    %v2580 = vmul.f32 %v2579, -0.001358992
    %v2581 = vadd.f32 %v2580, 0.041655596
    %v2582 = vmul.f32 %v2579, %v2581
    %v2583 = vadd.f32 %v2582, -0.4999988
    %v2584 = vmul.f32 %v2579, %v2583
    %v2585 = vadd.f32 1.0, %v2584
    %v2586 = vmul.f32 %v2577, %v2577
    %v2587 = vmul.f32 %v2586, -0.00019511016
    %v2588 = vadd.f32 %v2587, 0.008332121
    %v2589 = vmul.f32 %v2586, %v2588
    %v2590 = vadd.f32 %v2589, -0.16666654
    %v2591 = vmul.f32 %v2586, %v2590
    %v2592 = vadd.f32 %v2591, 1.0
    %v2593 = vmul.f32 %v2592, %v2577
    %vm2594 = vweird.f32 %v1544
    %v2595 = vadd.s32 %v2578, 3
    %v2596 = vand.u32 %v2595, 3
    %vm2597 = vcmp.lt.s32.totalorder %v2596, 2
    %vm2598 = vcmp.eq.s32.totalorder %v2596, 0
    %v2599 = vxor.u32 %v2593, 2147483648
    %v2600 = vsel %vm2598, %v2585, %v2599
    %vm2601 = vcmp.eq.s32.totalorder %v2596, 2
    %v2602 = vxor.u32 %v2585, 2147483648
    %v2603 = vsel %vm2601, %v2602, %v2593
    %v2604 = vsel %vm2597, %v2600, %v2603
    %v2605 = vsel %vm2594, nan, %v2604
    %v2606 = vand.u32 2147483647, %v2031
    %vm2607 = vcmp.le.f32.partialorder %v2606, 0.7853982
    %vm2608 = vcmp.lt.s32.totalorder %v2031, 0
    %v2609 = vand.u32 %v2031, 2139095040
    %v2610 = vshrl.u32 %v2609, 23
    %v2611 = vsub.s32 %v2610, 127
    %v2612 = vand.u32 2147483647, %v2031
    %v2613 = vand.u32 %v2612, 8388607
    %v2614 = vor.u32 %v2613, 8388608
    %v2615 = vsub.s32 0, %v2614
    %v2616 = vadd.s32 %v2611, 1
    %vm2617 = vcmp.gt.s32.totalorder %v2616, 0
    %v2618 = vsel %vm2617, %v2616, 0
    %v2619 = vshrl.u32 %v2618, 5
    %v2620 = vand.u32 %v2618, 31
    %v2621 = vsub.s32 32, %v2620
    %v2622 = vshrl.u32 683565275, %v2621
    %v2623 = vshll.u32 683565275, %v2620
    %v2624 = vshrl.u32 2475754826, %v2621
    %v2625 = vor.u32 %v2623, %v2624
    %v2626 = vshll.u32 2475754826, %v2620
    %v2627 = vshrl.u32 2131351028, %v2621
    %v2628 = vor.u32 %v2626, %v2627
    %v2629 = vshll.u32 2131351028, %v2620
    %v2630 = vshrl.u32 2102212464, %v2621
    %v2631 = vor.u32 %v2629, %v2630
    %v2632 = vshll.u32 2102212464, %v2620
    %v2633 = vshrl.u32 920167782, %v2621
    %v2634 = vor.u32 %v2632, %v2633
    %v2635 = vshll.u32 920167782, %v2620
    %v2636 = vshrl.u32 1326507024, %v2621
    %v2637 = vor.u32 %v2635, %v2636
    %vm2638 = vcmp.lt.s32.totalorder %v2619, 1
    %vm2639 = vcmp.lt.s32.totalorder %v2619, 2
    %vm2640 = vcmp.lt.s32.totalorder %v2619, 3
    %vm2641 = vcmp.lt.s32.totalorder %v2619, 4
    %v2642 = vsel %vm2638, %v2622, %v2625
    %v2643 = vsel %vm2641, %v2631, 2102212464
    %v2644 = vsel %vm2640, %v2628, %v2643
    %v2645 = vsel %vm2639, %v2642, %v2644
    %v2646 = vsel %vm2638, %v2625, %v2628
    %v2647 = vsel %vm2641, %v2634, 920167782
    %v2648 = vsel %vm2640, %v2631, %v2647
    %v2649 = vsel %vm2639, %v2646, %v2648
    %v2650 = vsel %vm2638, %v2628, %v2631
    %v2651 = vsel %vm2641, %v2637, 1326507024
    %v2652 = vsel %vm2640, %v2634, %v2651
    %v2653 = vsel %vm2639, %v2650, %v2652
    %v2654 = vshll.u32 %v2614, 8
    %v2655 = vand.u32 %v2654, 65535
    %v2656 = vshrl.u32 %v2654, 16
    %v2657 = vand.u32 %v2653, 65535
    %v2658 = vshrl.u32 %v2653, 16
    %v2659 = vmul.u32 %v2655, %v2657
    %v2660 = vmul.u32 %v2655, %v2658
    %v2661 = vmul.u32 %v2656, %v2657
    %v2662 = vmul.u32 %v2656, %v2658
    %v2663 = vshll.u32 %v2660, 16
    %v2664 = vshrl.u32 %v2660, 16
    %v2665 = vshll.u32 %v2661, 16
    %v2666 = vshrl.u32 %v2661, 16
    %vm2667 = vc.u32 %v2659, %v2663
    %v2668 = vsel %vm2667, 1, 0
    %v2669 = vadd.s32 %v2659, %v2663
    %v2670 = vadd.s32 %v2662, %v2668
    %vm2671 = vc.u32 %v2669, %v2665
    %v2672 = vsel %vm2671, 1, 0
    %v2673 = vadd.s32 %v2669, %v2665
    %v2674 = vadd.s32 %v2670, %v2672
    %v2675 = vadd.s32 %v2674, %v2664
    %v2676 = vadd.s32 %v2675, %v2666
    %v2677 = vand.u32 %v2654, 65535
    %v2678 = vshrl.u32 %v2654, 16
    %v2679 = vand.u32 %v2649, 65535
    %v2680 = vshrl.u32 %v2649, 16
    %v2681 = vmul.u32 %v2677, %v2679
    %v2682 = vmul.u32 %v2677, %v2680
    %v2683 = vmul.u32 %v2678, %v2679
    %v2684 = vmul.u32 %v2678, %v2680
    %v2685 = vshll.u32 %v2682, 16
    %v2686 = vshrl.u32 %v2682, 16
    %v2687 = vshll.u32 %v2683, 16
    %v2688 = vshrl.u32 %v2683, 16
    %vm2689 = vc.u32 %v2681, %v2685
    %v2690 = vsel %vm2689, 1, 0
    %v2691 = vadd.s32 %v2681, %v2685
    %v2692 = vadd.s32 %v2684, %v2690
    %vm2693 = vc.u32 %v2691, %v2687
    %v2694 = vsel %vm2693, 1, 0
    %v2695 = vadd.s32 %v2691, %v2687
    %v2696 = vadd.s32 %v2692, %v2694
    %v2697 = vadd.s32 %v2696, %v2686
    %v2698 = vadd.s32 %v2697, %v2688
    %v2699 = vmul.u32 %v2654, %v2645
    %v2700 = vadd.s32 %v2676, %v2695
    %vm2701 = vc.u32 %v2676, %v2695
    %v2702 = vadd.s32 %v2698, 1
    %v2703 = vsel %vm2701, %v2702, %v2698
    %v2704 = vadd.s32 %v2699, %v2703
    %v2705 = vadd.s32 %v2704, 536870912
    %v2706 = vshrl.u32 %v2705, 30
    %v2707 = vshll.u32 %v2706, 30
    %v2708 = vsub.s32 %v2704, %v2707
    %vm2709 = vcmp.lt.s32.totalorder %v2708, 0
    %v2710 = vsub.s32 0, %v2708
    %v2711 = vsel %vm2709, %v2710, %v2708
    %v2712 = vclz %v2711
    %v2713 = vsub.s32 %v2712, 2
    %vm2714 = vcmp.gt.s32.totalorder 0, %v2713
    %v2715 = vsel %vm2714, 0, %v2713
    %v2716 = vsub.s32 32, %v2715
    %v2717 = vshll.u32 %v2708, %v2715
    %v2718 = vshrl.u32 %v2700, %v2716
    %v2719 = vor.u32 %v2717, %v2718
    %v2720 = vsub.s32 4294967266, %v2715
    %v2721 = vadd.s32 %v2720, 127
    %v2722 = vshll.u32 %v2721, 23
    %v2723 = vor.u32 4788187, %v2722
    %v2724 = vand.u32 2147483647, %v2723
    %v2726 = vcvt.s32.f32 %v2719
    %v2727 = vmul.f32 %v2726, %v2724
    %v2728 = vxor.u32 %v2727, 2147483648
    %v2729 = vsel %vm2608, %v2728, %v2727
    %v2730 = vsub.s32 4, %v2706
    %v2731 = vsel %vm2608, %v2730, %v2706
    %v2732 = vsel %vm2607, %v2031, %v2729
    %v2733 = vsel %vm2607, 0, %v2731
    %v2734 = vmul.f32 %v2732, %v2732
    %v2735 = vmul.f32 %v2734, -0.001358992
    %v2736 = vadd.f32 %v2735, 0.041655596
    %v2737 = vmul.f32 %v2734, %v2736
    %v2738 = vadd.f32 %v2737, -0.4999988
    %v2739 = vmul.f32 %v2734, %v2738
    %v2740 = vadd.f32 1.0, %v2739
    %v2741 = vmul.f32 %v2732, %v2732
    %v2742 = vmul.f32 %v2741, -0.00019511016
    %v2743 = vadd.f32 %v2742, 0.008332121
    %v2744 = vmul.f32 %v2741, %v2743
    %v2745 = vadd.f32 %v2744, -0.16666654
    %v2746 = vmul.f32 %v2741, %v2745
    %v2747 = vadd.f32 %v2746, 1.0
    %v2748 = vmul.f32 %v2747, %v2732
    %vm2749 = vweird.f32 %v2031
    %v2750 = vadd.s32 %v2733, 3
    %v2751 = vand.u32 %v2750, 3
    %vm2752 = vcmp.lt.s32.totalorder %v2751, 2
    %vm2753 = vcmp.eq.s32.totalorder %v2751, 0
    %v2754 = vxor.u32 %v2748, 2147483648
    %v2755 = vsel %vm2753, %v2740, %v2754
    %vm2756 = vcmp.eq.s32.totalorder %v2751, 2
    %v2757 = vxor.u32 %v2740, 2147483648
    %v2758 = vsel %vm2756, %v2757, %v2748
    %v2759 = vsel %vm2752, %v2755, %v2758
    %v2760 = vsel %vm2749, nan, %v2759
    %v2761 = vand.u32 2147483647, %v574
    %vm2762 = vcmp.le.f32.partialorder %v2761, 0.7853982
    %vm2763 = vcmp.lt.s32.totalorder %v574, 0
    %v2764 = vand.u32 %v574, 2139095040
    %v2765 = vshrl.u32 %v2764, 23
    %v2766 = vsub.s32 %v2765, 127
    %v2767 = vand.u32 2147483647, %v574
    %v2768 = vand.u32 %v2767, 8388607
    %v2769 = vor.u32 %v2768, 8388608
    %v2770 = vsub.s32 0, %v2769
    %v2771 = vadd.s32 %v2766, 1
    %vm2772 = vcmp.gt.s32.totalorder %v2771, 0
    %v2773 = vsel %vm2772, %v2771, 0
    %v2774 = vshrl.u32 %v2773, 5
    %v2775 = vand.u32 %v2773, 31
    %v2776 = vsub.s32 32, %v2775
    %v2777 = vshrl.u32 683565275, %v2776
    %v2778 = vshll.u32 683565275, %v2775
    %v2779 = vshrl.u32 2475754826, %v2776
    %v2780 = vor.u32 %v2778, %v2779
    %v2781 = vshll.u32 2475754826, %v2775
    %v2782 = vshrl.u32 2131351028, %v2776
    %v2783 = vor.u32 %v2781, %v2782
    %v2784 = vshll.u32 2131351028, %v2775
    %v2785 = vshrl.u32 2102212464, %v2776
    %v2786 = vor.u32 %v2784, %v2785
    %v2787 = vshll.u32 2102212464, %v2775
    %v2788 = vshrl.u32 920167782, %v2776
    %v2789 = vor.u32 %v2787, %v2788
    %v2790 = vshll.u32 920167782, %v2775
    %v2791 = vshrl.u32 1326507024, %v2776
    %v2792 = vor.u32 %v2790, %v2791
    %vm2793 = vcmp.lt.s32.totalorder %v2774, 1
    %vm2794 = vcmp.lt.s32.totalorder %v2774, 2
    %vm2795 = vcmp.lt.s32.totalorder %v2774, 3
    %vm2796 = vcmp.lt.s32.totalorder %v2774, 4
    %v2797 = vsel %vm2793, %v2777, %v2780
    %v2798 = vsel %vm2796, %v2786, 2102212464
    %v2799 = vsel %vm2795, %v2783, %v2798
    %v2800 = vsel %vm2794, %v2797, %v2799
    %v2801 = vsel %vm2793, %v2780, %v2783
    %v2802 = vsel %vm2796, %v2789, 920167782
    %v2803 = vsel %vm2795, %v2786, %v2802
    %v2804 = vsel %vm2794, %v2801, %v2803
    %v2805 = vsel %vm2793, %v2783, %v2786
    %v2806 = vsel %vm2796, %v2792, 1326507024
    %v2807 = vsel %vm2795, %v2789, %v2806
    %v2808 = vsel %vm2794, %v2805, %v2807
    %v2809 = vshll.u32 %v2769, 8
    %v2810 = vand.u32 %v2809, 65535
    %v2811 = vshrl.u32 %v2809, 16
    %v2812 = vand.u32 %v2808, 65535
    %v2813 = vshrl.u32 %v2808, 16
    %v2814 = vmul.u32 %v2810, %v2812
    %v2815 = vmul.u32 %v2810, %v2813
    %v2816 = vmul.u32 %v2811, %v2812
    %v2817 = vmul.u32 %v2811, %v2813
    %v2818 = vshll.u32 %v2815, 16
    %v2819 = vshrl.u32 %v2815, 16
    %v2820 = vshll.u32 %v2816, 16
    %v2821 = vshrl.u32 %v2816, 16
    %vm2822 = vc.u32 %v2814, %v2818
    %v2823 = vsel %vm2822, 1, 0
    %v2824 = vadd.s32 %v2814, %v2818
    %v2825 = vadd.s32 %v2817, %v2823
    %vm2826 = vc.u32 %v2824, %v2820
    %v2827 = vsel %vm2826, 1, 0
    %v2828 = vadd.s32 %v2824, %v2820
    %v2829 = vadd.s32 %v2825, %v2827
    %v2830 = vadd.s32 %v2829, %v2819
    %v2831 = vadd.s32 %v2830, %v2821
    %v2832 = vand.u32 %v2809, 65535
    %v2833 = vshrl.u32 %v2809, 16
    %v2834 = vand.u32 %v2804, 65535
    %v2835 = vshrl.u32 %v2804, 16
    %v2836 = vmul.u32 %v2832, %v2834
    %v2837 = vmul.u32 %v2832, %v2835
    %v2838 = vmul.u32 %v2833, %v2834
    %v2839 = vmul.u32 %v2833, %v2835
    %v2840 = vshll.u32 %v2837, 16
    %v2841 = vshrl.u32 %v2837, 16
    %v2842 = vshll.u32 %v2838, 16
    %v2843 = vshrl.u32 %v2838, 16
    %vm2844 = vc.u32 %v2836, %v2840
    %v2845 = vsel %vm2844, 1, 0
    %v2846 = vadd.s32 %v2836, %v2840
    %v2847 = vadd.s32 %v2839, %v2845
    %vm2848 = vc.u32 %v2846, %v2842
    %v2849 = vsel %vm2848, 1, 0
    %v2850 = vadd.s32 %v2846, %v2842
    %v2851 = vadd.s32 %v2847, %v2849
    %v2852 = vadd.s32 %v2851, %v2841
    %v2853 = vadd.s32 %v2852, %v2843
    %v2854 = vmul.u32 %v2809, %v2800
    %v2855 = vadd.s32 %v2831, %v2850
    %vm2856 = vc.u32 %v2831, %v2850
    %v2857 = vadd.s32 %v2853, 1
    %v2858 = vsel %vm2856, %v2857, %v2853
    %v2859 = vadd.s32 %v2854, %v2858
    %v2860 = vadd.s32 %v2859, 536870912
    %v2861 = vshrl.u32 %v2860, 30
    %v2862 = vshll.u32 %v2861, 30
    %v2863 = vsub.s32 %v2859, %v2862
    %vm2864 = vcmp.lt.s32.totalorder %v2863, 0
    %v2865 = vsub.s32 0, %v2863
    %v2866 = vsel %vm2864, %v2865, %v2863
    %v2867 = vclz %v2866
    %v2868 = vsub.s32 %v2867, 2
    %vm2869 = vcmp.gt.s32.totalorder 0, %v2868
    %v2870 = vsel %vm2869, 0, %v2868
    %v2871 = vsub.s32 32, %v2870
    %v2872 = vshll.u32 %v2863, %v2870
    %v2873 = vshrl.u32 %v2855, %v2871
    %v2874 = vor.u32 %v2872, %v2873
    %v2875 = vsub.s32 4294967266, %v2870
    %v2876 = vadd.s32 %v2875, 127
    %v2877 = vshll.u32 %v2876, 23
    %v2878 = vor.u32 4788187, %v2877
    %v2879 = vand.u32 2147483647, %v2878
    %v2881 = vcvt.s32.f32 %v2874
    %v2882 = vmul.f32 %v2881, %v2879
    %v2883 = vxor.u32 %v2882, 2147483648
    %v2884 = vsel %vm2763, %v2883, %v2882
    %v2885 = vsub.s32 4, %v2861
    %v2886 = vsel %vm2763, %v2885, %v2861
    %v2887 = vsel %vm2762, %v574, %v2884
    %v2888 = vsel %vm2762, 0, %v2886
    %v2889 = vmul.f32 %v2887, %v2887
    %v2890 = vmul.f32 %v2889, -0.001358992
    %v2891 = vadd.f32 %v2890, 0.041655596
    %v2892 = vmul.f32 %v2889, %v2891
    %v2893 = vadd.f32 %v2892, -0.4999988
    %v2894 = vmul.f32 %v2889, %v2893
    %v2895 = vadd.f32 1.0, %v2894
    %v2896 = vmul.f32 %v2887, %v2887
    %v2897 = vmul.f32 %v2896, -0.00019511016
    %v2898 = vadd.f32 %v2897, 0.008332121
    %v2899 = vmul.f32 %v2896, %v2898
    %v2900 = vadd.f32 %v2899, -0.16666654
    %v2901 = vmul.f32 %v2896, %v2900
    %v2902 = vadd.f32 %v2901, 1.0
    %v2903 = vmul.f32 %v2902, %v2887
    %vm2904 = vweird.f32 %v574
    %v2905 = vadd.s32 %v2888, 3
    %v2906 = vand.u32 %v2905, 3
    %vm2907 = vcmp.lt.s32.totalorder %v2906, 2
    %vm2908 = vcmp.eq.s32.totalorder %v2906, 0
    %v2909 = vxor.u32 %v2903, 2147483648
    %v2910 = vsel %vm2908, %v2895, %v2909
    %vm2911 = vcmp.eq.s32.totalorder %v2906, 2
    %v2912 = vxor.u32 %v2895, 2147483648
    %v2913 = vsel %vm2911, %v2912, %v2903
    %v2914 = vsel %vm2907, %v2910, %v2913
    %v2915 = vsel %vm2904, nan, %v2914
    %v2916 = vand.u32 2147483647, %v1061
    %vm2917 = vcmp.le.f32.partialorder %v2916, 0.7853982
    %vm2918 = vcmp.lt.s32.totalorder %v1061, 0
    %v2919 = vand.u32 %v1061, 2139095040
    %v2920 = vshrl.u32 %v2919, 23
    %v2921 = vsub.s32 %v2920, 127
    %v2922 = vand.u32 2147483647, %v1061
    %v2923 = vand.u32 %v2922, 8388607
    %v2924 = vor.u32 %v2923, 8388608
    %v2925 = vsub.s32 0, %v2924
    %v2926 = vadd.s32 %v2921, 1
    %vm2927 = vcmp.gt.s32.totalorder %v2926, 0
    %v2928 = vsel %vm2927, %v2926, 0
    %v2929 = vshrl.u32 %v2928, 5
    %v2930 = vand.u32 %v2928, 31
    %v2931 = vsub.s32 32, %v2930
    %v2932 = vshrl.u32 683565275, %v2931
    %v2933 = vshll.u32 683565275, %v2930
    %v2934 = vshrl.u32 2475754826, %v2931
    %v2935 = vor.u32 %v2933, %v2934
    %v2936 = vshll.u32 2475754826, %v2930
    %v2937 = vshrl.u32 2131351028, %v2931
    %v2938 = vor.u32 %v2936, %v2937
    %v2939 = vshll.u32 2131351028, %v2930
    %v2940 = vshrl.u32 2102212464, %v2931
    %v2941 = vor.u32 %v2939, %v2940
    %v2942 = vshll.u32 2102212464, %v2930
    %v2943 = vshrl.u32 920167782, %v2931
    %v2944 = vor.u32 %v2942, %v2943
    %v2945 = vshll.u32 920167782, %v2930
    %v2946 = vshrl.u32 1326507024, %v2931
    %v2947 = vor.u32 %v2945, %v2946
    %vm2948 = vcmp.lt.s32.totalorder %v2929, 1
    %vm2949 = vcmp.lt.s32.totalorder %v2929, 2
    %vm2950 = vcmp.lt.s32.totalorder %v2929, 3
    %vm2951 = vcmp.lt.s32.totalorder %v2929, 4
    %v2952 = vsel %vm2948, %v2932, %v2935
    %v2953 = vsel %vm2951, %v2941, 2102212464
    %v2954 = vsel %vm2950, %v2938, %v2953
    %v2955 = vsel %vm2949, %v2952, %v2954
    %v2956 = vsel %vm2948, %v2935, %v2938
    %v2957 = vsel %vm2951, %v2944, 920167782
    %v2958 = vsel %vm2950, %v2941, %v2957
    %v2959 = vsel %vm2949, %v2956, %v2958
    %v2960 = vsel %vm2948, %v2938, %v2941
    %v2961 = vsel %vm2951, %v2947, 1326507024
    %v2962 = vsel %vm2950, %v2944, %v2961
    %v2963 = vsel %vm2949, %v2960, %v2962
    %v2964 = vshll.u32 %v2924, 8
    %v2965 = vand.u32 %v2964, 65535
    %v2966 = vshrl.u32 %v2964, 16
    %v2967 = vand.u32 %v2963, 65535
    %v2968 = vshrl.u32 %v2963, 16
    %v2969 = vmul.u32 %v2965, %v2967
    %v2970 = vmul.u32 %v2965, %v2968
    %v2971 = vmul.u32 %v2966, %v2967
    %v2972 = vmul.u32 %v2966, %v2968
    %v2973 = vshll.u32 %v2970, 16
    %v2974 = vshrl.u32 %v2970, 16
    %v2975 = vshll.u32 %v2971, 16
    %v2976 = vshrl.u32 %v2971, 16
    %vm2977 = vc.u32 %v2969, %v2973
    %v2978 = vsel %vm2977, 1, 0
    %v2979 = vadd.s32 %v2969, %v2973
    %v2980 = vadd.s32 %v2972, %v2978
    %vm2981 = vc.u32 %v2979, %v2975
    %v2982 = vsel %vm2981, 1, 0
    %v2983 = vadd.s32 %v2979, %v2975
    %v2984 = vadd.s32 %v2980, %v2982
    %v2985 = vadd.s32 %v2984, %v2974
    %v2986 = vadd.s32 %v2985, %v2976
    %v2987 = vand.u32 %v2964, 65535
    %v2988 = vshrl.u32 %v2964, 16
    %v2989 = vand.u32 %v2959, 65535
    %v2990 = vshrl.u32 %v2959, 16
    %v2991 = vmul.u32 %v2987, %v2989
    %v2992 = vmul.u32 %v2987, %v2990
    %v2993 = vmul.u32 %v2988, %v2989
    %v2994 = vmul.u32 %v2988, %v2990
    %v2995 = vshll.u32 %v2992, 16
    %v2996 = vshrl.u32 %v2992, 16
    %v2997 = vshll.u32 %v2993, 16
    %v2998 = vshrl.u32 %v2993, 16
    %vm2999 = vc.u32 %v2991, %v2995
    %v3000 = vsel %vm2999, 1, 0
    %v3001 = vadd.s32 %v2991, %v2995
    %v3002 = vadd.s32 %v2994, %v3000
    %vm3003 = vc.u32 %v3001, %v2997
    %v3004 = vsel %vm3003, 1, 0
    %v3005 = vadd.s32 %v3001, %v2997
    %v3006 = vadd.s32 %v3002, %v3004
    %v3007 = vadd.s32 %v3006, %v2996
    %v3008 = vadd.s32 %v3007, %v2998
    %v3009 = vmul.u32 %v2964, %v2955
    %v3010 = vadd.s32 %v2986, %v3005
    %vm3011 = vc.u32 %v2986, %v3005
    %v3012 = vadd.s32 %v3008, 1
    %v3013 = vsel %vm3011, %v3012, %v3008
    %v3014 = vadd.s32 %v3009, %v3013
    %v3015 = vadd.s32 %v3014, 536870912
    %v3016 = vshrl.u32 %v3015, 30
    %v3017 = vshll.u32 %v3016, 30
    %v3018 = vsub.s32 %v3014, %v3017
    %vm3019 = vcmp.lt.s32.totalorder %v3018, 0
    %v3020 = vsub.s32 0, %v3018
    %v3021 = vsel %vm3019, %v3020, %v3018
    %v3022 = vclz %v3021
    %v3023 = vsub.s32 %v3022, 2
    %vm3024 = vcmp.gt.s32.totalorder 0, %v3023
    %v3025 = vsel %vm3024, 0, %v3023
    %v3026 = vsub.s32 32, %v3025
    %v3027 = vshll.u32 %v3018, %v3025
    %v3028 = vshrl.u32 %v3010, %v3026
    %v3029 = vor.u32 %v3027, %v3028
    %v3030 = vsub.s32 4294967266, %v3025
    %v3031 = vadd.s32 %v3030, 127
    %v3032 = vshll.u32 %v3031, 23
    %v3033 = vor.u32 4788187, %v3032
    %v3034 = vand.u32 2147483647, %v3033
    %v3036 = vcvt.s32.f32 %v3029
    %v3037 = vmul.f32 %v3036, %v3034
    %v3038 = vxor.u32 %v3037, 2147483648
    %v3039 = vsel %vm2918, %v3038, %v3037
    %v3040 = vsub.s32 4, %v3016
    %v3041 = vsel %vm2918, %v3040, %v3016
    %v3042 = vsel %vm2917, %v1061, %v3039
    %v3043 = vsel %vm2917, 0, %v3041
    %v3044 = vmul.f32 %v3042, %v3042
    %v3045 = vmul.f32 %v3044, -0.001358992
    %v3046 = vadd.f32 %v3045, 0.041655596
    %v3047 = vmul.f32 %v3044, %v3046
    %v3048 = vadd.f32 %v3047, -0.4999988
    %v3049 = vmul.f32 %v3044, %v3048
    %v3050 = vadd.f32 1.0, %v3049
    %v3051 = vmul.f32 %v3042, %v3042
    %v3052 = vmul.f32 %v3051, -0.00019511016
    %v3053 = vadd.f32 %v3052, 0.008332121
    %v3054 = vmul.f32 %v3051, %v3053
    %v3055 = vadd.f32 %v3054, -0.16666654
    %v3056 = vmul.f32 %v3051, %v3055
    %v3057 = vadd.f32 %v3056, 1.0
    %v3058 = vmul.f32 %v3057, %v3042
    %vm3059 = vweird.f32 %v1061
    %v3060 = vadd.s32 %v3043, 3
    %v3061 = vand.u32 %v3060, 3
    %vm3062 = vcmp.lt.s32.totalorder %v3061, 2
    %vm3063 = vcmp.eq.s32.totalorder %v3061, 0
    %v3064 = vxor.u32 %v3058, 2147483648
    %v3065 = vsel %vm3063, %v3050, %v3064
    %vm3066 = vcmp.eq.s32.totalorder %v3061, 2
    %v3067 = vxor.u32 %v3050, 2147483648
    %v3068 = vsel %vm3066, %v3067, %v3058
    %v3069 = vsel %vm3062, %v3065, %v3068
    %v3070 = vsel %vm3059, nan, %v3069
    %v3071 = vand.u32 2147483647, %v1548
    %vm3072 = vcmp.le.f32.partialorder %v3071, 0.7853982
    %vm3073 = vcmp.lt.s32.totalorder %v1548, 0
    %v3074 = vand.u32 %v1548, 2139095040
    %v3075 = vshrl.u32 %v3074, 23
    %v3076 = vsub.s32 %v3075, 127
    %v3077 = vand.u32 2147483647, %v1548
    %v3078 = vand.u32 %v3077, 8388607
    %v3079 = vor.u32 %v3078, 8388608
    %v3080 = vsub.s32 0, %v3079
    %v3081 = vadd.s32 %v3076, 1
    %vm3082 = vcmp.gt.s32.totalorder %v3081, 0
    %v3083 = vsel %vm3082, %v3081, 0
    %v3084 = vshrl.u32 %v3083, 5
    %v3085 = vand.u32 %v3083, 31
    %v3086 = vsub.s32 32, %v3085
    %v3087 = vshrl.u32 683565275, %v3086
    %v3088 = vshll.u32 683565275, %v3085
    %v3089 = vshrl.u32 2475754826, %v3086
    %v3090 = vor.u32 %v3088, %v3089
    %v3091 = vshll.u32 2475754826, %v3085
    %v3092 = vshrl.u32 2131351028, %v3086
    %v3093 = vor.u32 %v3091, %v3092
    %v3094 = vshll.u32 2131351028, %v3085
    %v3095 = vshrl.u32 2102212464, %v3086
    %v3096 = vor.u32 %v3094, %v3095
    %v3097 = vshll.u32 2102212464, %v3085
    %v3098 = vshrl.u32 920167782, %v3086
    %v3099 = vor.u32 %v3097, %v3098
    %v3100 = vshll.u32 920167782, %v3085
    %v3101 = vshrl.u32 1326507024, %v3086
    %v3102 = vor.u32 %v3100, %v3101
    %vm3103 = vcmp.lt.s32.totalorder %v3084, 1
    %vm3104 = vcmp.lt.s32.totalorder %v3084, 2
    %vm3105 = vcmp.lt.s32.totalorder %v3084, 3
    %vm3106 = vcmp.lt.s32.totalorder %v3084, 4
    %v3107 = vsel %vm3103, %v3087, %v3090
    %v3108 = vsel %vm3106, %v3096, 2102212464
    %v3109 = vsel %vm3105, %v3093, %v3108
    %v3110 = vsel %vm3104, %v3107, %v3109
    %v3111 = vsel %vm3103, %v3090, %v3093
    %v3112 = vsel %vm3106, %v3099, 920167782
    %v3113 = vsel %vm3105, %v3096, %v3112
    %v3114 = vsel %vm3104, %v3111, %v3113
    %v3115 = vsel %vm3103, %v3093, %v3096
    %v3116 = vsel %vm3106, %v3102, 1326507024
    %v3117 = vsel %vm3105, %v3099, %v3116
    %v3118 = vsel %vm3104, %v3115, %v3117
    %v3119 = vshll.u32 %v3079, 8
    %v3120 = vand.u32 %v3119, 65535
    %v3121 = vshrl.u32 %v3119, 16
    %v3122 = vand.u32 %v3118, 65535
    %v3123 = vshrl.u32 %v3118, 16
    %v3124 = vmul.u32 %v3120, %v3122
    %v3125 = vmul.u32 %v3120, %v3123
    %v3126 = vmul.u32 %v3121, %v3122
    %v3127 = vmul.u32 %v3121, %v3123
    %v3128 = vshll.u32 %v3125, 16
    %v3129 = vshrl.u32 %v3125, 16
    %v3130 = vshll.u32 %v3126, 16
    %v3131 = vshrl.u32 %v3126, 16
    %vm3132 = vc.u32 %v3124, %v3128
    %v3133 = vsel %vm3132, 1, 0
    %v3134 = vadd.s32 %v3124, %v3128
    %v3135 = vadd.s32 %v3127, %v3133
    %vm3136 = vc.u32 %v3134, %v3130
    %v3137 = vsel %vm3136, 1, 0
    %v3138 = vadd.s32 %v3134, %v3130
    %v3139 = vadd.s32 %v3135, %v3137
    %v3140 = vadd.s32 %v3139, %v3129
    %v3141 = vadd.s32 %v3140, %v3131
    %v3142 = vand.u32 %v3119, 65535
    %v3143 = vshrl.u32 %v3119, 16
    %v3144 = vand.u32 %v3114, 65535
    %v3145 = vshrl.u32 %v3114, 16
    %v3146 = vmul.u32 %v3142, %v3144
    %v3147 = vmul.u32 %v3142, %v3145
    %v3148 = vmul.u32 %v3143, %v3144
    %v3149 = vmul.u32 %v3143, %v3145
    %v3150 = vshll.u32 %v3147, 16
    %v3151 = vshrl.u32 %v3147, 16
    %v3152 = vshll.u32 %v3148, 16
    %v3153 = vshrl.u32 %v3148, 16
    %vm3154 = vc.u32 %v3146, %v3150
    %v3155 = vsel %vm3154, 1, 0
    %v3156 = vadd.s32 %v3146, %v3150
    %v3157 = vadd.s32 %v3149, %v3155
    %vm3158 = vc.u32 %v3156, %v3152
    %v3159 = vsel %vm3158, 1, 0
    %v3160 = vadd.s32 %v3156, %v3152
    %v3161 = vadd.s32 %v3157, %v3159
    %v3162 = vadd.s32 %v3161, %v3151
    %v3163 = vadd.s32 %v3162, %v3153
    %v3164 = vmul.u32 %v3119, %v3110
    %v3165 = vadd.s32 %v3141, %v3160
    %vm3166 = vc.u32 %v3141, %v3160
    %v3167 = vadd.s32 %v3163, 1
    %v3168 = vsel %vm3166, %v3167, %v3163
    %v3169 = vadd.s32 %v3164, %v3168
    %v3170 = vadd.s32 %v3169, 536870912
    %v3171 = vshrl.u32 %v3170, 30
    %v3172 = vshll.u32 %v3171, 30
    %v3173 = vsub.s32 %v3169, %v3172
    %vm3174 = vcmp.lt.s32.totalorder %v3173, 0
    %v3175 = vsub.s32 0, %v3173
    %v3176 = vsel %vm3174, %v3175, %v3173
    %v3177 = vclz %v3176
    %v3178 = vsub.s32 %v3177, 2
    %vm3179 = vcmp.gt.s32.totalorder 0, %v3178
    %v3180 = vsel %vm3179, 0, %v3178
    %v3181 = vsub.s32 32, %v3180
    %v3182 = vshll.u32 %v3173, %v3180
    %v3183 = vshrl.u32 %v3165, %v3181
    %v3184 = vor.u32 %v3182, %v3183
    %v3185 = vsub.s32 4294967266, %v3180
    %v3186 = vadd.s32 %v3185, 127
    %v3187 = vshll.u32 %v3186, 23
    %v3188 = vor.u32 4788187, %v3187
    %v3189 = vand.u32 2147483647, %v3188
    %v3191 = vcvt.s32.f32 %v3184
    %v3192 = vmul.f32 %v3191, %v3189
    %v3193 = vxor.u32 %v3192, 2147483648
    %v3194 = vsel %vm3073, %v3193, %v3192
    %v3195 = vsub.s32 4, %v3171
    %v3196 = vsel %vm3073, %v3195, %v3171
    %v3197 = vsel %vm3072, %v1548, %v3194
    %v3198 = vsel %vm3072, 0, %v3196
    %v3199 = vmul.f32 %v3197, %v3197
    %v3200 = vmul.f32 %v3199, -0.001358992
    %v3201 = vadd.f32 %v3200, 0.041655596
    %v3202 = vmul.f32 %v3199, %v3201
    %v3203 = vadd.f32 %v3202, -0.4999988
    %v3204 = vmul.f32 %v3199, %v3203
    %v3205 = vadd.f32 1.0, %v3204
    %v3206 = vmul.f32 %v3197, %v3197
    %v3207 = vmul.f32 %v3206, -0.00019511016
    %v3208 = vadd.f32 %v3207, 0.008332121
    %v3209 = vmul.f32 %v3206, %v3208
    %v3210 = vadd.f32 %v3209, -0.16666654
    %v3211 = vmul.f32 %v3206, %v3210
    %v3212 = vadd.f32 %v3211, 1.0
    %v3213 = vmul.f32 %v3212, %v3197
    %vm3214 = vweird.f32 %v1548
    %v3215 = vadd.s32 %v3198, 3
    %v3216 = vand.u32 %v3215, 3
    %vm3217 = vcmp.lt.s32.totalorder %v3216, 2
    %vm3218 = vcmp.eq.s32.totalorder %v3216, 0
    %v3219 = vxor.u32 %v3213, 2147483648
    %v3220 = vsel %vm3218, %v3205, %v3219
    %vm3221 = vcmp.eq.s32.totalorder %v3216, 2
    %v3222 = vxor.u32 %v3205, 2147483648
    %v3223 = vsel %vm3221, %v3222, %v3213
    %v3224 = vsel %vm3217, %v3220, %v3223
    %v3225 = vsel %vm3214, nan, %v3224
    %v3226 = vand.u32 2147483647, %v2035
    %vm3227 = vcmp.le.f32.partialorder %v3226, 0.7853982
    %vm3228 = vcmp.lt.s32.totalorder %v2035, 0
    %v3229 = vand.u32 %v2035, 2139095040
    %v3230 = vshrl.u32 %v3229, 23
    %v3231 = vsub.s32 %v3230, 127
    %v3232 = vand.u32 2147483647, %v2035
    %v3233 = vand.u32 %v3232, 8388607
    %v3234 = vor.u32 %v3233, 8388608
    %v3235 = vsub.s32 0, %v3234
    %v3236 = vadd.s32 %v3231, 1
    %vm3237 = vcmp.gt.s32.totalorder %v3236, 0
    %v3238 = vsel %vm3237, %v3236, 0
    %v3239 = vshrl.u32 %v3238, 5
    %v3240 = vand.u32 %v3238, 31
    %v3241 = vsub.s32 32, %v3240
    %v3242 = vshrl.u32 683565275, %v3241
    %v3243 = vshll.u32 683565275, %v3240
    %v3244 = vshrl.u32 2475754826, %v3241
    %v3245 = vor.u32 %v3243, %v3244
    %v3246 = vshll.u32 2475754826, %v3240
    %v3247 = vshrl.u32 2131351028, %v3241
    %v3248 = vor.u32 %v3246, %v3247
    %v3249 = vshll.u32 2131351028, %v3240
    %v3250 = vshrl.u32 2102212464, %v3241
    %v3251 = vor.u32 %v3249, %v3250
    %v3252 = vshll.u32 2102212464, %v3240
    %v3253 = vshrl.u32 920167782, %v3241
    %v3254 = vor.u32 %v3252, %v3253
    %v3255 = vshll.u32 920167782, %v3240
    %v3256 = vshrl.u32 1326507024, %v3241
    %v3257 = vor.u32 %v3255, %v3256
    %vm3258 = vcmp.lt.s32.totalorder %v3239, 1
    %vm3259 = vcmp.lt.s32.totalorder %v3239, 2
    %vm3260 = vcmp.lt.s32.totalorder %v3239, 3
    %vm3261 = vcmp.lt.s32.totalorder %v3239, 4
    %v3262 = vsel %vm3258, %v3242, %v3245
    %v3263 = vsel %vm3261, %v3251, 2102212464
    %v3264 = vsel %vm3260, %v3248, %v3263
    %v3265 = vsel %vm3259, %v3262, %v3264
    %v3266 = vsel %vm3258, %v3245, %v3248
    %v3267 = vsel %vm3261, %v3254, 920167782
    %v3268 = vsel %vm3260, %v3251, %v3267
    %v3269 = vsel %vm3259, %v3266, %v3268
    %v3270 = vsel %vm3258, %v3248, %v3251
    %v3271 = vsel %vm3261, %v3257, 1326507024
    %v3272 = vsel %vm3260, %v3254, %v3271
    %v3273 = vsel %vm3259, %v3270, %v3272
    %v3274 = vshll.u32 %v3234, 8
    %v3275 = vand.u32 %v3274, 65535
    %v3276 = vshrl.u32 %v3274, 16
    %v3277 = vand.u32 %v3273, 65535
    %v3278 = vshrl.u32 %v3273, 16
    %v3279 = vmul.u32 %v3275, %v3277
    %v3280 = vmul.u32 %v3275, %v3278
    %v3281 = vmul.u32 %v3276, %v3277
    %v3282 = vmul.u32 %v3276, %v3278
    %v3283 = vshll.u32 %v3280, 16
    %v3284 = vshrl.u32 %v3280, 16
    %v3285 = vshll.u32 %v3281, 16
    %v3286 = vshrl.u32 %v3281, 16
    %vm3287 = vc.u32 %v3279, %v3283
    %v3288 = vsel %vm3287, 1, 0
    %v3289 = vadd.s32 %v3279, %v3283
    %v3290 = vadd.s32 %v3282, %v3288
    %vm3291 = vc.u32 %v3289, %v3285
    %v3292 = vsel %vm3291, 1, 0
    %v3293 = vadd.s32 %v3289, %v3285
    %v3294 = vadd.s32 %v3290, %v3292
    %v3295 = vadd.s32 %v3294, %v3284
    %v3296 = vadd.s32 %v3295, %v3286
    %v3297 = vand.u32 %v3274, 65535
    %v3298 = vshrl.u32 %v3274, 16
    %v3299 = vand.u32 %v3269, 65535
    %v3300 = vshrl.u32 %v3269, 16
    %v3301 = vmul.u32 %v3297, %v3299
    %v3302 = vmul.u32 %v3297, %v3300
    %v3303 = vmul.u32 %v3298, %v3299
    %v3304 = vmul.u32 %v3298, %v3300
    %v3305 = vshll.u32 %v3302, 16
    %v3306 = vshrl.u32 %v3302, 16
    %v3307 = vshll.u32 %v3303, 16
    %v3308 = vshrl.u32 %v3303, 16
    %vm3309 = vc.u32 %v3301, %v3305
    %v3310 = vsel %vm3309, 1, 0
    %v3311 = vadd.s32 %v3301, %v3305
    %v3312 = vadd.s32 %v3304, %v3310
    %vm3313 = vc.u32 %v3311, %v3307
    %v3314 = vsel %vm3313, 1, 0
    %v3315 = vadd.s32 %v3311, %v3307
    %v3316 = vadd.s32 %v3312, %v3314
    %v3317 = vadd.s32 %v3316, %v3306
    %v3318 = vadd.s32 %v3317, %v3308
    %v3319 = vmul.u32 %v3274, %v3265
    %v3320 = vadd.s32 %v3296, %v3315
    %vm3321 = vc.u32 %v3296, %v3315
    %v3322 = vadd.s32 %v3318, 1
    %v3323 = vsel %vm3321, %v3322, %v3318
    %v3324 = vadd.s32 %v3319, %v3323
    %v3325 = vadd.s32 %v3324, 536870912
    %v3326 = vshrl.u32 %v3325, 30
    %v3327 = vshll.u32 %v3326, 30
    %v3328 = vsub.s32 %v3324, %v3327
    %vm3329 = vcmp.lt.s32.totalorder %v3328, 0
    %v3330 = vsub.s32 0, %v3328
    %v3331 = vsel %vm3329, %v3330, %v3328
    %v3332 = vclz %v3331
    %v3333 = vsub.s32 %v3332, 2
    %vm3334 = vcmp.gt.s32.totalorder 0, %v3333
    %v3335 = vsel %vm3334, 0, %v3333
    %v3336 = vsub.s32 32, %v3335
    %v3337 = vshll.u32 %v3328, %v3335
    %v3338 = vshrl.u32 %v3320, %v3336
    %v3339 = vor.u32 %v3337, %v3338
    %v3340 = vsub.s32 4294967266, %v3335
    %v3341 = vadd.s32 %v3340, 127
    %v3342 = vshll.u32 %v3341, 23
    %v3343 = vor.u32 4788187, %v3342
    %v3344 = vand.u32 2147483647, %v3343
    %v3346 = vcvt.s32.f32 %v3339
    %v3347 = vmul.f32 %v3346, %v3344
    %v3348 = vxor.u32 %v3347, 2147483648
    %v3349 = vsel %vm3228, %v3348, %v3347
    %v3350 = vsub.s32 4, %v3326
    %v3351 = vsel %vm3228, %v3350, %v3326
    %v3352 = vsel %vm3227, %v2035, %v3349
    %v3353 = vsel %vm3227, 0, %v3351
    %v3354 = vmul.f32 %v3352, %v3352
    %v3355 = vmul.f32 %v3354, -0.001358992
    %v3356 = vadd.f32 %v3355, 0.041655596
    %v3357 = vmul.f32 %v3354, %v3356
    %v3358 = vadd.f32 %v3357, -0.4999988
    %v3359 = vmul.f32 %v3354, %v3358
    %v3360 = vadd.f32 1.0, %v3359
    %v3361 = vmul.f32 %v3352, %v3352
    %v3362 = vmul.f32 %v3361, -0.00019511016
    %v3363 = vadd.f32 %v3362, 0.008332121
    %v3364 = vmul.f32 %v3361, %v3363
    %v3365 = vadd.f32 %v3364, -0.16666654
    %v3366 = vmul.f32 %v3361, %v3365
    %v3367 = vadd.f32 %v3366, 1.0
    %v3368 = vmul.f32 %v3367, %v3352
    %vm3369 = vweird.f32 %v2035
    %v3370 = vadd.s32 %v3353, 3
    %v3371 = vand.u32 %v3370, 3
    %vm3372 = vcmp.lt.s32.totalorder %v3371, 2
    %vm3373 = vcmp.eq.s32.totalorder %v3371, 0
    %v3374 = vxor.u32 %v3368, 2147483648
    %v3375 = vsel %vm3373, %v3360, %v3374
    %vm3376 = vcmp.eq.s32.totalorder %v3371, 2
    %v3377 = vxor.u32 %v3360, 2147483648
    %v3378 = vsel %vm3376, %v3377, %v3368
    %v3379 = vsel %vm3372, %v3375, %v3378
    %v3380 = vsel %vm3369, nan, %v3379
    %v3381 = vand.u32 2147483647, %v578
    %vm3382 = vcmp.le.f32.partialorder %v3381, 0.7853982
    %vm3383 = vcmp.lt.s32.totalorder %v578, 0
    %v3384 = vand.u32 %v578, 2139095040
    %v3385 = vshrl.u32 %v3384, 23
    %v3386 = vsub.s32 %v3385, 127
    %v3387 = vand.u32 2147483647, %v578
    %v3388 = vand.u32 %v3387, 8388607
    %v3389 = vor.u32 %v3388, 8388608
    %v3390 = vsub.s32 0, %v3389
    %v3391 = vadd.s32 %v3386, 1
    %vm3392 = vcmp.gt.s32.totalorder %v3391, 0
    %v3393 = vsel %vm3392, %v3391, 0
    %v3394 = vshrl.u32 %v3393, 5
    %v3395 = vand.u32 %v3393, 31
    %v3396 = vsub.s32 32, %v3395
    %v3397 = vshrl.u32 683565275, %v3396
    %v3398 = vshll.u32 683565275, %v3395
    %v3399 = vshrl.u32 2475754826, %v3396
    %v3400 = vor.u32 %v3398, %v3399
    %v3401 = vshll.u32 2475754826, %v3395
    %v3402 = vshrl.u32 2131351028, %v3396
    %v3403 = vor.u32 %v3401, %v3402
    %v3404 = vshll.u32 2131351028, %v3395
    %v3405 = vshrl.u32 2102212464, %v3396
    %v3406 = vor.u32 %v3404, %v3405
    %v3407 = vshll.u32 2102212464, %v3395
    %v3408 = vshrl.u32 920167782, %v3396
    %v3409 = vor.u32 %v3407, %v3408
    %v3410 = vshll.u32 920167782, %v3395
    %v3411 = vshrl.u32 1326507024, %v3396
    %v3412 = vor.u32 %v3410, %v3411
    %vm3413 = vcmp.lt.s32.totalorder %v3394, 1
    %vm3414 = vcmp.lt.s32.totalorder %v3394, 2
    %vm3415 = vcmp.lt.s32.totalorder %v3394, 3
    %vm3416 = vcmp.lt.s32.totalorder %v3394, 4
    %v3417 = vsel %vm3413, %v3397, %v3400
    %v3418 = vsel %vm3416, %v3406, 2102212464
    %v3419 = vsel %vm3415, %v3403, %v3418
    %v3420 = vsel %vm3414, %v3417, %v3419
    %v3421 = vsel %vm3413, %v3400, %v3403
    %v3422 = vsel %vm3416, %v3409, 920167782
    %v3423 = vsel %vm3415, %v3406, %v3422
    %v3424 = vsel %vm3414, %v3421, %v3423
    %v3425 = vsel %vm3413, %v3403, %v3406
    %v3426 = vsel %vm3416, %v3412, 1326507024
    %v3427 = vsel %vm3415, %v3409, %v3426
    %v3428 = vsel %vm3414, %v3425, %v3427
    %v3429 = vshll.u32 %v3389, 8
    %v3430 = vand.u32 %v3429, 65535
    %v3431 = vshrl.u32 %v3429, 16
    %v3432 = vand.u32 %v3428, 65535
    %v3433 = vshrl.u32 %v3428, 16
    %v3434 = vmul.u32 %v3430, %v3432
    %v3435 = vmul.u32 %v3430, %v3433
    %v3436 = vmul.u32 %v3431, %v3432
    %v3437 = vmul.u32 %v3431, %v3433
    %v3438 = vshll.u32 %v3435, 16
    %v3439 = vshrl.u32 %v3435, 16
    %v3440 = vshll.u32 %v3436, 16
    %v3441 = vshrl.u32 %v3436, 16
    %vm3442 = vc.u32 %v3434, %v3438
    %v3443 = vsel %vm3442, 1, 0
    %v3444 = vadd.s32 %v3434, %v3438
    %v3445 = vadd.s32 %v3437, %v3443
    %vm3446 = vc.u32 %v3444, %v3440
    %v3447 = vsel %vm3446, 1, 0
    %v3448 = vadd.s32 %v3444, %v3440
    %v3449 = vadd.s32 %v3445, %v3447
    %v3450 = vadd.s32 %v3449, %v3439
    %v3451 = vadd.s32 %v3450, %v3441
    %v3452 = vand.u32 %v3429, 65535
    %v3453 = vshrl.u32 %v3429, 16
    %v3454 = vand.u32 %v3424, 65535
    %v3455 = vshrl.u32 %v3424, 16
    %v3456 = vmul.u32 %v3452, %v3454
    %v3457 = vmul.u32 %v3452, %v3455
    %v3458 = vmul.u32 %v3453, %v3454
    %v3459 = vmul.u32 %v3453, %v3455
    %v3460 = vshll.u32 %v3457, 16
    %v3461 = vshrl.u32 %v3457, 16
    %v3462 = vshll.u32 %v3458, 16
    %v3463 = vshrl.u32 %v3458, 16
    %vm3464 = vc.u32 %v3456, %v3460
    %v3465 = vsel %vm3464, 1, 0
    %v3466 = vadd.s32 %v3456, %v3460
    %v3467 = vadd.s32 %v3459, %v3465
    %vm3468 = vc.u32 %v3466, %v3462
    %v3469 = vsel %vm3468, 1, 0
    %v3470 = vadd.s32 %v3466, %v3462
    %v3471 = vadd.s32 %v3467, %v3469
    %v3472 = vadd.s32 %v3471, %v3461
    %v3473 = vadd.s32 %v3472, %v3463
    %v3474 = vmul.u32 %v3429, %v3420
    %v3475 = vadd.s32 %v3451, %v3470
    %vm3476 = vc.u32 %v3451, %v3470
    %v3477 = vadd.s32 %v3473, 1
    %v3478 = vsel %vm3476, %v3477, %v3473
    %v3479 = vadd.s32 %v3474, %v3478
    %v3480 = vadd.s32 %v3479, 536870912
    %v3481 = vshrl.u32 %v3480, 30
    %v3482 = vshll.u32 %v3481, 30
    %v3483 = vsub.s32 %v3479, %v3482
    %vm3484 = vcmp.lt.s32.totalorder %v3483, 0
    %v3485 = vsub.s32 0, %v3483
    %v3486 = vsel %vm3484, %v3485, %v3483
    %v3487 = vclz %v3486
    %v3488 = vsub.s32 %v3487, 2
    %vm3489 = vcmp.gt.s32.totalorder 0, %v3488
    %v3490 = vsel %vm3489, 0, %v3488
    %v3491 = vsub.s32 32, %v3490
    %v3492 = vshll.u32 %v3483, %v3490
    %v3493 = vshrl.u32 %v3475, %v3491
    %v3494 = vor.u32 %v3492, %v3493
    %v3495 = vsub.s32 4294967266, %v3490
    %v3496 = vadd.s32 %v3495, 127
    %v3497 = vshll.u32 %v3496, 23
    %v3498 = vor.u32 4788187, %v3497
    %v3499 = vand.u32 2147483647, %v3498
    %v3501 = vcvt.s32.f32 %v3494
    %v3502 = vmul.f32 %v3501, %v3499
    %v3503 = vxor.u32 %v3502, 2147483648
    %v3504 = vsel %vm3383, %v3503, %v3502
    %v3505 = vsub.s32 4, %v3481
    %v3506 = vsel %vm3383, %v3505, %v3481
    %v3507 = vsel %vm3382, %v578, %v3504
    %v3508 = vsel %vm3382, 0, %v3506
    %v3509 = vmul.f32 %v3507, %v3507
    %v3510 = vmul.f32 %v3509, -0.001358992
    %v3511 = vadd.f32 %v3510, 0.041655596
    %v3512 = vmul.f32 %v3509, %v3511
    %v3513 = vadd.f32 %v3512, -0.4999988
    %v3514 = vmul.f32 %v3509, %v3513
    %v3515 = vadd.f32 1.0, %v3514
    %v3516 = vmul.f32 %v3507, %v3507
    %v3517 = vmul.f32 %v3516, -0.00019511016
    %v3518 = vadd.f32 %v3517, 0.008332121
    %v3519 = vmul.f32 %v3516, %v3518
    %v3520 = vadd.f32 %v3519, -0.16666654
    %v3521 = vmul.f32 %v3516, %v3520
    %v3522 = vadd.f32 %v3521, 1.0
    %v3523 = vmul.f32 %v3522, %v3507
    %vm3524 = vweird.f32 %v578
    %v3525 = vadd.s32 %v3508, 3
    %v3526 = vand.u32 %v3525, 3
    %vm3527 = vcmp.lt.s32.totalorder %v3526, 2
    %vm3528 = vcmp.eq.s32.totalorder %v3526, 0
    %v3529 = vxor.u32 %v3523, 2147483648
    %v3530 = vsel %vm3528, %v3515, %v3529
    %vm3531 = vcmp.eq.s32.totalorder %v3526, 2
    %v3532 = vxor.u32 %v3515, 2147483648
    %v3533 = vsel %vm3531, %v3532, %v3523
    %v3534 = vsel %vm3527, %v3530, %v3533
    %v3535 = vsel %vm3524, nan, %v3534
    %v3536 = vand.u32 2147483647, %v1065
    %vm3537 = vcmp.le.f32.partialorder %v3536, 0.7853982
    %vm3538 = vcmp.lt.s32.totalorder %v1065, 0
    %v3539 = vand.u32 %v1065, 2139095040
    %v3540 = vshrl.u32 %v3539, 23
    %v3541 = vsub.s32 %v3540, 127
    %v3542 = vand.u32 2147483647, %v1065
    %v3543 = vand.u32 %v3542, 8388607
    %v3544 = vor.u32 %v3543, 8388608
    %v3545 = vsub.s32 0, %v3544
    %v3546 = vadd.s32 %v3541, 1
    %vm3547 = vcmp.gt.s32.totalorder %v3546, 0
    %v3548 = vsel %vm3547, %v3546, 0
    %v3549 = vshrl.u32 %v3548, 5
    %v3550 = vand.u32 %v3548, 31
    %v3551 = vsub.s32 32, %v3550
    %v3552 = vshrl.u32 683565275, %v3551
    %v3553 = vshll.u32 683565275, %v3550
    %v3554 = vshrl.u32 2475754826, %v3551
    %v3555 = vor.u32 %v3553, %v3554
    %v3556 = vshll.u32 2475754826, %v3550
    %v3557 = vshrl.u32 2131351028, %v3551
    %v3558 = vor.u32 %v3556, %v3557
    %v3559 = vshll.u32 2131351028, %v3550
    %v3560 = vshrl.u32 2102212464, %v3551
    %v3561 = vor.u32 %v3559, %v3560
    %v3562 = vshll.u32 2102212464, %v3550
    %v3563 = vshrl.u32 920167782, %v3551
    %v3564 = vor.u32 %v3562, %v3563
    %v3565 = vshll.u32 920167782, %v3550
    %v3566 = vshrl.u32 1326507024, %v3551
    %v3567 = vor.u32 %v3565, %v3566
    %vm3568 = vcmp.lt.s32.totalorder %v3549, 1
    %vm3569 = vcmp.lt.s32.totalorder %v3549, 2
    %vm3570 = vcmp.lt.s32.totalorder %v3549, 3
    %vm3571 = vcmp.lt.s32.totalorder %v3549, 4
    %v3572 = vsel %vm3568, %v3552, %v3555
    %v3573 = vsel %vm3571, %v3561, 2102212464
    %v3574 = vsel %vm3570, %v3558, %v3573
    %v3575 = vsel %vm3569, %v3572, %v3574
    %v3576 = vsel %vm3568, %v3555, %v3558
    %v3577 = vsel %vm3571, %v3564, 920167782
    %v3578 = vsel %vm3570, %v3561, %v3577
    %v3579 = vsel %vm3569, %v3576, %v3578
    %v3580 = vsel %vm3568, %v3558, %v3561
    %v3581 = vsel %vm3571, %v3567, 1326507024
    %v3582 = vsel %vm3570, %v3564, %v3581
    %v3583 = vsel %vm3569, %v3580, %v3582
    %v3584 = vshll.u32 %v3544, 8
    %v3585 = vand.u32 %v3584, 65535
    %v3586 = vshrl.u32 %v3584, 16
    %v3587 = vand.u32 %v3583, 65535
    %v3588 = vshrl.u32 %v3583, 16
    %v3589 = vmul.u32 %v3585, %v3587
    %v3590 = vmul.u32 %v3585, %v3588
    %v3591 = vmul.u32 %v3586, %v3587
    %v3592 = vmul.u32 %v3586, %v3588
    %v3593 = vshll.u32 %v3590, 16
    %v3594 = vshrl.u32 %v3590, 16
    %v3595 = vshll.u32 %v3591, 16
    %v3596 = vshrl.u32 %v3591, 16
    %vm3597 = vc.u32 %v3589, %v3593
    %v3598 = vsel %vm3597, 1, 0
    %v3599 = vadd.s32 %v3589, %v3593
    %v3600 = vadd.s32 %v3592, %v3598
    %vm3601 = vc.u32 %v3599, %v3595
    %v3602 = vsel %vm3601, 1, 0
    %v3603 = vadd.s32 %v3599, %v3595
    %v3604 = vadd.s32 %v3600, %v3602
    %v3605 = vadd.s32 %v3604, %v3594
    %v3606 = vadd.s32 %v3605, %v3596
    %v3607 = vand.u32 %v3584, 65535
    %v3608 = vshrl.u32 %v3584, 16
    %v3609 = vand.u32 %v3579, 65535
    %v3610 = vshrl.u32 %v3579, 16
    %v3611 = vmul.u32 %v3607, %v3609
    %v3612 = vmul.u32 %v3607, %v3610
    %v3613 = vmul.u32 %v3608, %v3609
    %v3614 = vmul.u32 %v3608, %v3610
    %v3615 = vshll.u32 %v3612, 16
    %v3616 = vshrl.u32 %v3612, 16
    %v3617 = vshll.u32 %v3613, 16
    %v3618 = vshrl.u32 %v3613, 16
    %vm3619 = vc.u32 %v3611, %v3615
    %v3620 = vsel %vm3619, 1, 0
    %v3621 = vadd.s32 %v3611, %v3615
    %v3622 = vadd.s32 %v3614, %v3620
    %vm3623 = vc.u32 %v3621, %v3617
    %v3624 = vsel %vm3623, 1, 0
    %v3625 = vadd.s32 %v3621, %v3617
    %v3626 = vadd.s32 %v3622, %v3624
    %v3627 = vadd.s32 %v3626, %v3616
    %v3628 = vadd.s32 %v3627, %v3618
    %v3629 = vmul.u32 %v3584, %v3575
    %v3630 = vadd.s32 %v3606, %v3625
    %vm3631 = vc.u32 %v3606, %v3625
    %v3632 = vadd.s32 %v3628, 1
    %v3633 = vsel %vm3631, %v3632, %v3628
    %v3634 = vadd.s32 %v3629, %v3633
    %v3635 = vadd.s32 %v3634, 536870912
    %v3636 = vshrl.u32 %v3635, 30
    %v3637 = vshll.u32 %v3636, 30
    %v3638 = vsub.s32 %v3634, %v3637
    %vm3639 = vcmp.lt.s32.totalorder %v3638, 0
    %v3640 = vsub.s32 0, %v3638
    %v3641 = vsel %vm3639, %v3640, %v3638
    %v3642 = vclz %v3641
    %v3643 = vsub.s32 %v3642, 2
    %vm3644 = vcmp.gt.s32.totalorder 0, %v3643
    %v3645 = vsel %vm3644, 0, %v3643
    %v3646 = vsub.s32 32, %v3645
    %v3647 = vshll.u32 %v3638, %v3645
    %v3648 = vshrl.u32 %v3630, %v3646
    %v3649 = vor.u32 %v3647, %v3648
    %v3650 = vsub.s32 4294967266, %v3645
    %v3651 = vadd.s32 %v3650, 127
    %v3652 = vshll.u32 %v3651, 23
    %v3653 = vor.u32 4788187, %v3652
    %v3654 = vand.u32 2147483647, %v3653
    %v3656 = vcvt.s32.f32 %v3649
    %v3657 = vmul.f32 %v3656, %v3654
    %v3658 = vxor.u32 %v3657, 2147483648
    %v3659 = vsel %vm3538, %v3658, %v3657
    %v3660 = vsub.s32 4, %v3636
    %v3661 = vsel %vm3538, %v3660, %v3636
    %v3662 = vsel %vm3537, %v1065, %v3659
    %v3663 = vsel %vm3537, 0, %v3661
    %v3664 = vmul.f32 %v3662, %v3662
    %v3665 = vmul.f32 %v3664, -0.001358992
    %v3666 = vadd.f32 %v3665, 0.041655596
    %v3667 = vmul.f32 %v3664, %v3666
    %v3668 = vadd.f32 %v3667, -0.4999988
    %v3669 = vmul.f32 %v3664, %v3668
    %v3670 = vadd.f32 1.0, %v3669
    %v3671 = vmul.f32 %v3662, %v3662
    %v3672 = vmul.f32 %v3671, -0.00019511016
    %v3673 = vadd.f32 %v3672, 0.008332121
    %v3674 = vmul.f32 %v3671, %v3673
    %v3675 = vadd.f32 %v3674, -0.16666654
    %v3676 = vmul.f32 %v3671, %v3675
    %v3677 = vadd.f32 %v3676, 1.0
    %v3678 = vmul.f32 %v3677, %v3662
    %vm3679 = vweird.f32 %v1065
    %v3680 = vadd.s32 %v3663, 3
    %v3681 = vand.u32 %v3680, 3
    %vm3682 = vcmp.lt.s32.totalorder %v3681, 2
    %vm3683 = vcmp.eq.s32.totalorder %v3681, 0
    %v3684 = vxor.u32 %v3678, 2147483648
    %v3685 = vsel %vm3683, %v3670, %v3684
    %vm3686 = vcmp.eq.s32.totalorder %v3681, 2
    %v3687 = vxor.u32 %v3670, 2147483648
    %v3688 = vsel %vm3686, %v3687, %v3678
    %v3689 = vsel %vm3682, %v3685, %v3688
    %v3690 = vsel %vm3679, nan, %v3689
    %v3691 = vand.u32 2147483647, %v1552
    %vm3692 = vcmp.le.f32.partialorder %v3691, 0.7853982
    %vm3693 = vcmp.lt.s32.totalorder %v1552, 0
    %v3694 = vand.u32 %v1552, 2139095040
    %v3695 = vshrl.u32 %v3694, 23
    %v3696 = vsub.s32 %v3695, 127
    %v3697 = vand.u32 2147483647, %v1552
    %v3698 = vand.u32 %v3697, 8388607
    %v3699 = vor.u32 %v3698, 8388608
    %v3700 = vsub.s32 0, %v3699
    %v3701 = vadd.s32 %v3696, 1
    %vm3702 = vcmp.gt.s32.totalorder %v3701, 0
    %v3703 = vsel %vm3702, %v3701, 0
    %v3704 = vshrl.u32 %v3703, 5
    %v3705 = vand.u32 %v3703, 31
    %v3706 = vsub.s32 32, %v3705
    %v3707 = vshrl.u32 683565275, %v3706
    %v3708 = vshll.u32 683565275, %v3705
    %v3709 = vshrl.u32 2475754826, %v3706
    %v3710 = vor.u32 %v3708, %v3709
    %v3711 = vshll.u32 2475754826, %v3705
    %v3712 = vshrl.u32 2131351028, %v3706
    %v3713 = vor.u32 %v3711, %v3712
    %v3714 = vshll.u32 2131351028, %v3705
    %v3715 = vshrl.u32 2102212464, %v3706
    %v3716 = vor.u32 %v3714, %v3715
    %v3717 = vshll.u32 2102212464, %v3705
    %v3718 = vshrl.u32 920167782, %v3706
    %v3719 = vor.u32 %v3717, %v3718
    %v3720 = vshll.u32 920167782, %v3705
    %v3721 = vshrl.u32 1326507024, %v3706
    %v3722 = vor.u32 %v3720, %v3721
    %vm3723 = vcmp.lt.s32.totalorder %v3704, 1
    %vm3724 = vcmp.lt.s32.totalorder %v3704, 2
    %vm3725 = vcmp.lt.s32.totalorder %v3704, 3
    %vm3726 = vcmp.lt.s32.totalorder %v3704, 4
    %v3727 = vsel %vm3723, %v3707, %v3710
    %v3728 = vsel %vm3726, %v3716, 2102212464
    %v3729 = vsel %vm3725, %v3713, %v3728
    %v3730 = vsel %vm3724, %v3727, %v3729
    %v3731 = vsel %vm3723, %v3710, %v3713
    %v3732 = vsel %vm3726, %v3719, 920167782
    %v3733 = vsel %vm3725, %v3716, %v3732
    %v3734 = vsel %vm3724, %v3731, %v3733
    %v3735 = vsel %vm3723, %v3713, %v3716
    %v3736 = vsel %vm3726, %v3722, 1326507024
    %v3737 = vsel %vm3725, %v3719, %v3736
    %v3738 = vsel %vm3724, %v3735, %v3737
    %v3739 = vshll.u32 %v3699, 8
    %v3740 = vand.u32 %v3739, 65535
    %v3741 = vshrl.u32 %v3739, 16
    %v3742 = vand.u32 %v3738, 65535
    %v3743 = vshrl.u32 %v3738, 16
    %v3744 = vmul.u32 %v3740, %v3742
    %v3745 = vmul.u32 %v3740, %v3743
    %v3746 = vmul.u32 %v3741, %v3742
    %v3747 = vmul.u32 %v3741, %v3743
    %v3748 = vshll.u32 %v3745, 16
    %v3749 = vshrl.u32 %v3745, 16
    %v3750 = vshll.u32 %v3746, 16
    %v3751 = vshrl.u32 %v3746, 16
    %vm3752 = vc.u32 %v3744, %v3748
    %v3753 = vsel %vm3752, 1, 0
    %v3754 = vadd.s32 %v3744, %v3748
    %v3755 = vadd.s32 %v3747, %v3753
    %vm3756 = vc.u32 %v3754, %v3750
    %v3757 = vsel %vm3756, 1, 0
    %v3758 = vadd.s32 %v3754, %v3750
    %v3759 = vadd.s32 %v3755, %v3757
    %v3760 = vadd.s32 %v3759, %v3749
    %v3761 = vadd.s32 %v3760, %v3751
    %v3762 = vand.u32 %v3739, 65535
    %v3763 = vshrl.u32 %v3739, 16
    %v3764 = vand.u32 %v3734, 65535
    %v3765 = vshrl.u32 %v3734, 16
    %v3766 = vmul.u32 %v3762, %v3764
    %v3767 = vmul.u32 %v3762, %v3765
    %v3768 = vmul.u32 %v3763, %v3764
    %v3769 = vmul.u32 %v3763, %v3765
    %v3770 = vshll.u32 %v3767, 16
    %v3771 = vshrl.u32 %v3767, 16
    %v3772 = vshll.u32 %v3768, 16
    %v3773 = vshrl.u32 %v3768, 16
    %vm3774 = vc.u32 %v3766, %v3770
    %v3775 = vsel %vm3774, 1, 0
    %v3776 = vadd.s32 %v3766, %v3770
    %v3777 = vadd.s32 %v3769, %v3775
    %vm3778 = vc.u32 %v3776, %v3772
    %v3779 = vsel %vm3778, 1, 0
    %v3780 = vadd.s32 %v3776, %v3772
    %v3781 = vadd.s32 %v3777, %v3779
    %v3782 = vadd.s32 %v3781, %v3771
    %v3783 = vadd.s32 %v3782, %v3773
    %v3784 = vmul.u32 %v3739, %v3730
    %v3785 = vadd.s32 %v3761, %v3780
    %vm3786 = vc.u32 %v3761, %v3780
    %v3787 = vadd.s32 %v3783, 1
    %v3788 = vsel %vm3786, %v3787, %v3783
    %v3789 = vadd.s32 %v3784, %v3788
    %v3790 = vadd.s32 %v3789, 536870912
    %v3791 = vshrl.u32 %v3790, 30
    %v3792 = vshll.u32 %v3791, 30
    %v3793 = vsub.s32 %v3789, %v3792
    %vm3794 = vcmp.lt.s32.totalorder %v3793, 0
    %v3795 = vsub.s32 0, %v3793
    %v3796 = vsel %vm3794, %v3795, %v3793
    %v3797 = vclz %v3796
    %v3798 = vsub.s32 %v3797, 2
    %vm3799 = vcmp.gt.s32.totalorder 0, %v3798
    %v3800 = vsel %vm3799, 0, %v3798
    %v3801 = vsub.s32 32, %v3800
    %v3802 = vshll.u32 %v3793, %v3800
    %v3803 = vshrl.u32 %v3785, %v3801
    %v3804 = vor.u32 %v3802, %v3803
    %v3805 = vsub.s32 4294967266, %v3800
    %v3806 = vadd.s32 %v3805, 127
    %v3807 = vshll.u32 %v3806, 23
    %v3808 = vor.u32 4788187, %v3807
    %v3809 = vand.u32 2147483647, %v3808
    %v3811 = vcvt.s32.f32 %v3804
    %v3812 = vmul.f32 %v3811, %v3809
    %v3813 = vxor.u32 %v3812, 2147483648
    %v3814 = vsel %vm3693, %v3813, %v3812
    %v3815 = vsub.s32 4, %v3791
    %v3816 = vsel %vm3693, %v3815, %v3791
    %v3817 = vsel %vm3692, %v1552, %v3814
    %v3818 = vsel %vm3692, 0, %v3816
    %v3819 = vmul.f32 %v3817, %v3817
    %v3820 = vmul.f32 %v3819, -0.001358992
    %v3821 = vadd.f32 %v3820, 0.041655596
    %v3822 = vmul.f32 %v3819, %v3821
    %v3823 = vadd.f32 %v3822, -0.4999988
    %v3824 = vmul.f32 %v3819, %v3823
    %v3825 = vadd.f32 1.0, %v3824
    %v3826 = vmul.f32 %v3817, %v3817
    %v3827 = vmul.f32 %v3826, -0.00019511016
    %v3828 = vadd.f32 %v3827, 0.008332121
    %v3829 = vmul.f32 %v3826, %v3828
    %v3830 = vadd.f32 %v3829, -0.16666654
    %v3831 = vmul.f32 %v3826, %v3830
    %v3832 = vadd.f32 %v3831, 1.0
    %v3833 = vmul.f32 %v3832, %v3817
    %vm3834 = vweird.f32 %v1552
    %v3835 = vadd.s32 %v3818, 3
    %v3836 = vand.u32 %v3835, 3
    %vm3837 = vcmp.lt.s32.totalorder %v3836, 2
    %vm3838 = vcmp.eq.s32.totalorder %v3836, 0
    %v3839 = vxor.u32 %v3833, 2147483648
    %v3840 = vsel %vm3838, %v3825, %v3839
    %vm3841 = vcmp.eq.s32.totalorder %v3836, 2
    %v3842 = vxor.u32 %v3825, 2147483648
    %v3843 = vsel %vm3841, %v3842, %v3833
    %v3844 = vsel %vm3837, %v3840, %v3843
    %v3845 = vsel %vm3834, nan, %v3844
    %v3846 = vand.u32 2147483647, %v2039
    %vm3847 = vcmp.le.f32.partialorder %v3846, 0.7853982
    %vm3848 = vcmp.lt.s32.totalorder %v2039, 0
    %v3849 = vand.u32 %v2039, 2139095040
    %v3850 = vshrl.u32 %v3849, 23
    %v3851 = vsub.s32 %v3850, 127
    %v3852 = vand.u32 2147483647, %v2039
    %v3853 = vand.u32 %v3852, 8388607
    %v3854 = vor.u32 %v3853, 8388608
    %v3855 = vsub.s32 0, %v3854
    %v3856 = vadd.s32 %v3851, 1
    %vm3857 = vcmp.gt.s32.totalorder %v3856, 0
    %v3858 = vsel %vm3857, %v3856, 0
    %v3859 = vshrl.u32 %v3858, 5
    %v3860 = vand.u32 %v3858, 31
    %v3861 = vsub.s32 32, %v3860
    %v3862 = vshrl.u32 683565275, %v3861
    %v3863 = vshll.u32 683565275, %v3860
    %v3864 = vshrl.u32 2475754826, %v3861
    %v3865 = vor.u32 %v3863, %v3864
    %v3866 = vshll.u32 2475754826, %v3860
    %v3867 = vshrl.u32 2131351028, %v3861
    %v3868 = vor.u32 %v3866, %v3867
    %v3869 = vshll.u32 2131351028, %v3860
    %v3870 = vshrl.u32 2102212464, %v3861
    %v3871 = vor.u32 %v3869, %v3870
    %v3872 = vshll.u32 2102212464, %v3860
    %v3873 = vshrl.u32 920167782, %v3861
    %v3874 = vor.u32 %v3872, %v3873
    %v3875 = vshll.u32 920167782, %v3860
    %v3876 = vshrl.u32 1326507024, %v3861
    %v3877 = vor.u32 %v3875, %v3876
    %vm3878 = vcmp.lt.s32.totalorder %v3859, 1
    %vm3879 = vcmp.lt.s32.totalorder %v3859, 2
    %vm3880 = vcmp.lt.s32.totalorder %v3859, 3
    %vm3881 = vcmp.lt.s32.totalorder %v3859, 4
    %v3882 = vsel %vm3878, %v3862, %v3865
    %v3883 = vsel %vm3881, %v3871, 2102212464
    %v3884 = vsel %vm3880, %v3868, %v3883
    %v3885 = vsel %vm3879, %v3882, %v3884
    %v3886 = vsel %vm3878, %v3865, %v3868
    %v3887 = vsel %vm3881, %v3874, 920167782
    %v3888 = vsel %vm3880, %v3871, %v3887
    %v3889 = vsel %vm3879, %v3886, %v3888
    %v3890 = vsel %vm3878, %v3868, %v3871
    %v3891 = vsel %vm3881, %v3877, 1326507024
    %v3892 = vsel %vm3880, %v3874, %v3891
    %v3893 = vsel %vm3879, %v3890, %v3892
    %v3894 = vshll.u32 %v3854, 8
    %v3895 = vand.u32 %v3894, 65535
    %v3896 = vshrl.u32 %v3894, 16
    %v3897 = vand.u32 %v3893, 65535
    %v3898 = vshrl.u32 %v3893, 16
    %v3899 = vmul.u32 %v3895, %v3897
    %v3900 = vmul.u32 %v3895, %v3898
    %v3901 = vmul.u32 %v3896, %v3897
    %v3902 = vmul.u32 %v3896, %v3898
    %v3903 = vshll.u32 %v3900, 16
    %v3904 = vshrl.u32 %v3900, 16
    %v3905 = vshll.u32 %v3901, 16
    %v3906 = vshrl.u32 %v3901, 16
    %vm3907 = vc.u32 %v3899, %v3903
    %v3908 = vsel %vm3907, 1, 0
    %v3909 = vadd.s32 %v3899, %v3903
    %v3910 = vadd.s32 %v3902, %v3908
    %vm3911 = vc.u32 %v3909, %v3905
    %v3912 = vsel %vm3911, 1, 0
    %v3913 = vadd.s32 %v3909, %v3905
    %v3914 = vadd.s32 %v3910, %v3912
    %v3915 = vadd.s32 %v3914, %v3904
    %v3916 = vadd.s32 %v3915, %v3906
    %v3917 = vand.u32 %v3894, 65535
    %v3918 = vshrl.u32 %v3894, 16
    %v3919 = vand.u32 %v3889, 65535
    %v3920 = vshrl.u32 %v3889, 16
    %v3921 = vmul.u32 %v3917, %v3919
    %v3922 = vmul.u32 %v3917, %v3920
    %v3923 = vmul.u32 %v3918, %v3919
    %v3924 = vmul.u32 %v3918, %v3920
    %v3925 = vshll.u32 %v3922, 16
    %v3926 = vshrl.u32 %v3922, 16
    %v3927 = vshll.u32 %v3923, 16
    %v3928 = vshrl.u32 %v3923, 16
    %vm3929 = vc.u32 %v3921, %v3925
    %v3930 = vsel %vm3929, 1, 0
    %v3931 = vadd.s32 %v3921, %v3925
    %v3932 = vadd.s32 %v3924, %v3930
    %vm3933 = vc.u32 %v3931, %v3927
    %v3934 = vsel %vm3933, 1, 0
    %v3935 = vadd.s32 %v3931, %v3927
    %v3936 = vadd.s32 %v3932, %v3934
    %v3937 = vadd.s32 %v3936, %v3926
    %v3938 = vadd.s32 %v3937, %v3928
    %v3939 = vmul.u32 %v3894, %v3885
    %v3940 = vadd.s32 %v3916, %v3935
    %vm3941 = vc.u32 %v3916, %v3935
    %v3942 = vadd.s32 %v3938, 1
    %v3943 = vsel %vm3941, %v3942, %v3938
    %v3944 = vadd.s32 %v3939, %v3943
    %v3945 = vadd.s32 %v3944, 536870912
    %v3946 = vshrl.u32 %v3945, 30
    %v3947 = vshll.u32 %v3946, 30
    %v3948 = vsub.s32 %v3944, %v3947
    %vm3949 = vcmp.lt.s32.totalorder %v3948, 0
    %v3950 = vsub.s32 0, %v3948
    %v3951 = vsel %vm3949, %v3950, %v3948
    %v3952 = vclz %v3951
    %v3953 = vsub.s32 %v3952, 2
    %vm3954 = vcmp.gt.s32.totalorder 0, %v3953
    %v3955 = vsel %vm3954, 0, %v3953
    %v3956 = vsub.s32 32, %v3955
    %v3957 = vshll.u32 %v3948, %v3955
    %v3958 = vshrl.u32 %v3940, %v3956
    %v3959 = vor.u32 %v3957, %v3958
    %v3960 = vsub.s32 4294967266, %v3955
    %v3961 = vadd.s32 %v3960, 127
    %v3962 = vshll.u32 %v3961, 23
    %v3963 = vor.u32 4788187, %v3962
    %v3964 = vand.u32 2147483647, %v3963
    %v3966 = vcvt.s32.f32 %v3959
    %v3967 = vmul.f32 %v3966, %v3964
    %v3968 = vxor.u32 %v3967, 2147483648
    %v3969 = vsel %vm3848, %v3968, %v3967
    %v3970 = vsub.s32 4, %v3946
    %v3971 = vsel %vm3848, %v3970, %v3946
    %v3972 = vsel %vm3847, %v2039, %v3969
    %v3973 = vsel %vm3847, 0, %v3971
    %v3974 = vmul.f32 %v3972, %v3972
    %v3975 = vmul.f32 %v3974, -0.001358992
    %v3976 = vadd.f32 %v3975, 0.041655596
    %v3977 = vmul.f32 %v3974, %v3976
    %v3978 = vadd.f32 %v3977, -0.4999988
    %v3979 = vmul.f32 %v3974, %v3978
    %v3980 = vadd.f32 1.0, %v3979
    %v3981 = vmul.f32 %v3972, %v3972
    %v3982 = vmul.f32 %v3981, -0.00019511016
    %v3983 = vadd.f32 %v3982, 0.008332121
    %v3984 = vmul.f32 %v3981, %v3983
    %v3985 = vadd.f32 %v3984, -0.16666654
    %v3986 = vmul.f32 %v3981, %v3985
    %v3987 = vadd.f32 %v3986, 1.0
    %v3988 = vmul.f32 %v3987, %v3972
    %vm3989 = vweird.f32 %v2039
    %v3990 = vadd.s32 %v3973, 3
    %v3991 = vand.u32 %v3990, 3
    %vm3992 = vcmp.lt.s32.totalorder %v3991, 2
    %vm3993 = vcmp.eq.s32.totalorder %v3991, 0
    %v3994 = vxor.u32 %v3988, 2147483648
    %v3995 = vsel %vm3993, %v3980, %v3994
    %vm3996 = vcmp.eq.s32.totalorder %v3991, 2
    %v3997 = vxor.u32 %v3980, 2147483648
    %v3998 = vsel %vm3996, %v3997, %v3988
    %v3999 = vsel %vm3992, %v3995, %v3998
    %v4000 = vsel %vm3989, nan, %v3999
    %v4001 = vand.u32 2147483647, %v582
    %vm4002 = vcmp.le.f32.partialorder %v4001, 0.7853982
    %vm4003 = vcmp.lt.s32.totalorder %v582, 0
    %v4004 = vand.u32 %v582, 2139095040
    %v4005 = vshrl.u32 %v4004, 23
    %v4006 = vsub.s32 %v4005, 127
    %v4007 = vand.u32 2147483647, %v582
    %v4008 = vand.u32 %v4007, 8388607
    %v4009 = vor.u32 %v4008, 8388608
    %v4010 = vsub.s32 0, %v4009
    %v4011 = vadd.s32 %v4006, 1
    %vm4012 = vcmp.gt.s32.totalorder %v4011, 0
    %v4013 = vsel %vm4012, %v4011, 0
    %v4014 = vshrl.u32 %v4013, 5
    %v4015 = vand.u32 %v4013, 31
    %v4016 = vsub.s32 32, %v4015
    %v4017 = vshrl.u32 683565275, %v4016
    %v4018 = vshll.u32 683565275, %v4015
    %v4019 = vshrl.u32 2475754826, %v4016
    %v4020 = vor.u32 %v4018, %v4019
    %v4021 = vshll.u32 2475754826, %v4015
    %v4022 = vshrl.u32 2131351028, %v4016
    %v4023 = vor.u32 %v4021, %v4022
    %v4024 = vshll.u32 2131351028, %v4015
    %v4025 = vshrl.u32 2102212464, %v4016
    %v4026 = vor.u32 %v4024, %v4025
    %v4027 = vshll.u32 2102212464, %v4015
    %v4028 = vshrl.u32 920167782, %v4016
    %v4029 = vor.u32 %v4027, %v4028
    %v4030 = vshll.u32 920167782, %v4015
    %v4031 = vshrl.u32 1326507024, %v4016
    %v4032 = vor.u32 %v4030, %v4031
    %vm4033 = vcmp.lt.s32.totalorder %v4014, 1
    %vm4034 = vcmp.lt.s32.totalorder %v4014, 2
    %vm4035 = vcmp.lt.s32.totalorder %v4014, 3
    %vm4036 = vcmp.lt.s32.totalorder %v4014, 4
    %v4037 = vsel %vm4033, %v4017, %v4020
    %v4038 = vsel %vm4036, %v4026, 2102212464
    %v4039 = vsel %vm4035, %v4023, %v4038
    %v4040 = vsel %vm4034, %v4037, %v4039
    %v4041 = vsel %vm4033, %v4020, %v4023
    %v4042 = vsel %vm4036, %v4029, 920167782
    %v4043 = vsel %vm4035, %v4026, %v4042
    %v4044 = vsel %vm4034, %v4041, %v4043
    %v4045 = vsel %vm4033, %v4023, %v4026
    %v4046 = vsel %vm4036, %v4032, 1326507024
    %v4047 = vsel %vm4035, %v4029, %v4046
    %v4048 = vsel %vm4034, %v4045, %v4047
    %v4049 = vshll.u32 %v4009, 8
    %v4050 = vand.u32 %v4049, 65535
    %v4051 = vshrl.u32 %v4049, 16
    %v4052 = vand.u32 %v4048, 65535
    %v4053 = vshrl.u32 %v4048, 16
    %v4054 = vmul.u32 %v4050, %v4052
    %v4055 = vmul.u32 %v4050, %v4053
    %v4056 = vmul.u32 %v4051, %v4052
    %v4057 = vmul.u32 %v4051, %v4053
    %v4058 = vshll.u32 %v4055, 16
    %v4059 = vshrl.u32 %v4055, 16
    %v4060 = vshll.u32 %v4056, 16
    %v4061 = vshrl.u32 %v4056, 16
    %vm4062 = vc.u32 %v4054, %v4058
    %v4063 = vsel %vm4062, 1, 0
    %v4064 = vadd.s32 %v4054, %v4058
    %v4065 = vadd.s32 %v4057, %v4063
    %vm4066 = vc.u32 %v4064, %v4060
    %v4067 = vsel %vm4066, 1, 0
    %v4068 = vadd.s32 %v4064, %v4060
    %v4069 = vadd.s32 %v4065, %v4067
    %v4070 = vadd.s32 %v4069, %v4059
    %v4071 = vadd.s32 %v4070, %v4061
    %v4072 = vand.u32 %v4049, 65535
    %v4073 = vshrl.u32 %v4049, 16
    %v4074 = vand.u32 %v4044, 65535
    %v4075 = vshrl.u32 %v4044, 16
    %v4076 = vmul.u32 %v4072, %v4074
    %v4077 = vmul.u32 %v4072, %v4075
    %v4078 = vmul.u32 %v4073, %v4074
    %v4079 = vmul.u32 %v4073, %v4075
    %v4080 = vshll.u32 %v4077, 16
    %v4081 = vshrl.u32 %v4077, 16
    %v4082 = vshll.u32 %v4078, 16
    %v4083 = vshrl.u32 %v4078, 16
    %vm4084 = vc.u32 %v4076, %v4080
    %v4085 = vsel %vm4084, 1, 0
    %v4086 = vadd.s32 %v4076, %v4080
    %v4087 = vadd.s32 %v4079, %v4085
    %vm4088 = vc.u32 %v4086, %v4082
    %v4089 = vsel %vm4088, 1, 0
    %v4090 = vadd.s32 %v4086, %v4082
    %v4091 = vadd.s32 %v4087, %v4089
    %v4092 = vadd.s32 %v4091, %v4081
    %v4093 = vadd.s32 %v4092, %v4083
    %v4094 = vmul.u32 %v4049, %v4040
    %v4095 = vadd.s32 %v4071, %v4090
    %vm4096 = vc.u32 %v4071, %v4090
    %v4097 = vadd.s32 %v4093, 1
    %v4098 = vsel %vm4096, %v4097, %v4093
    %v4099 = vadd.s32 %v4094, %v4098
    %v4100 = vadd.s32 %v4099, 536870912
    %v4101 = vshrl.u32 %v4100, 30
    %v4102 = vshll.u32 %v4101, 30
    %v4103 = vsub.s32 %v4099, %v4102
    %vm4104 = vcmp.lt.s32.totalorder %v4103, 0
    %v4105 = vsub.s32 0, %v4103
    %v4106 = vsel %vm4104, %v4105, %v4103
    %v4107 = vclz %v4106
    %v4108 = vsub.s32 %v4107, 2
    %vm4109 = vcmp.gt.s32.totalorder 0, %v4108
    %v4110 = vsel %vm4109, 0, %v4108
    %v4111 = vsub.s32 32, %v4110
    %v4112 = vshll.u32 %v4103, %v4110
    %v4113 = vshrl.u32 %v4095, %v4111
    %v4114 = vor.u32 %v4112, %v4113
    %v4115 = vsub.s32 4294967266, %v4110
    %v4116 = vadd.s32 %v4115, 127
    %v4117 = vshll.u32 %v4116, 23
    %v4118 = vor.u32 4788187, %v4117
    %v4119 = vand.u32 2147483647, %v4118
    %v4121 = vcvt.s32.f32 %v4114
    %v4122 = vmul.f32 %v4121, %v4119
    %v4123 = vxor.u32 %v4122, 2147483648
    %v4124 = vsel %vm4003, %v4123, %v4122
    %v4125 = vsub.s32 4, %v4101
    %v4126 = vsel %vm4003, %v4125, %v4101
    %v4127 = vsel %vm4002, %v582, %v4124
    %v4128 = vsel %vm4002, 0, %v4126
    %v4129 = vmul.f32 %v4127, %v4127
    %v4130 = vmul.f32 %v4129, -0.001358992
    %v4131 = vadd.f32 %v4130, 0.041655596
    %v4132 = vmul.f32 %v4129, %v4131
    %v4133 = vadd.f32 %v4132, -0.4999988
    %v4134 = vmul.f32 %v4129, %v4133
    %v4135 = vadd.f32 1.0, %v4134
    %v4136 = vmul.f32 %v4127, %v4127
    %v4137 = vmul.f32 %v4136, -0.00019511016
    %v4138 = vadd.f32 %v4137, 0.008332121
    %v4139 = vmul.f32 %v4136, %v4138
    %v4140 = vadd.f32 %v4139, -0.16666654
    %v4141 = vmul.f32 %v4136, %v4140
    %v4142 = vadd.f32 %v4141, 1.0
    %v4143 = vmul.f32 %v4142, %v4127
    %vm4144 = vweird.f32 %v582
    %v4145 = vadd.s32 %v4128, 3
    %v4146 = vand.u32 %v4145, 3
    %vm4147 = vcmp.lt.s32.totalorder %v4146, 2
    %vm4148 = vcmp.eq.s32.totalorder %v4146, 0
    %v4149 = vxor.u32 %v4143, 2147483648
    %v4150 = vsel %vm4148, %v4135, %v4149
    %vm4151 = vcmp.eq.s32.totalorder %v4146, 2
    %v4152 = vxor.u32 %v4135, 2147483648
    %v4153 = vsel %vm4151, %v4152, %v4143
    %v4154 = vsel %vm4147, %v4150, %v4153
    %v4155 = vsel %vm4144, nan, %v4154
    %v4156 = vand.u32 2147483647, %v1069
    %vm4157 = vcmp.le.f32.partialorder %v4156, 0.7853982
    %vm4158 = vcmp.lt.s32.totalorder %v1069, 0
    %v4159 = vand.u32 %v1069, 2139095040
    %v4160 = vshrl.u32 %v4159, 23
    %v4161 = vsub.s32 %v4160, 127
    %v4162 = vand.u32 2147483647, %v1069
    %v4163 = vand.u32 %v4162, 8388607
    %v4164 = vor.u32 %v4163, 8388608
    %v4165 = vsub.s32 0, %v4164
    %v4166 = vadd.s32 %v4161, 1
    %vm4167 = vcmp.gt.s32.totalorder %v4166, 0
    %v4168 = vsel %vm4167, %v4166, 0
    %v4169 = vshrl.u32 %v4168, 5
    %v4170 = vand.u32 %v4168, 31
    %v4171 = vsub.s32 32, %v4170
    %v4172 = vshrl.u32 683565275, %v4171
    %v4173 = vshll.u32 683565275, %v4170
    %v4174 = vshrl.u32 2475754826, %v4171
    %v4175 = vor.u32 %v4173, %v4174
    %v4176 = vshll.u32 2475754826, %v4170
    %v4177 = vshrl.u32 2131351028, %v4171
    %v4178 = vor.u32 %v4176, %v4177
    %v4179 = vshll.u32 2131351028, %v4170
    %v4180 = vshrl.u32 2102212464, %v4171
    %v4181 = vor.u32 %v4179, %v4180
    %v4182 = vshll.u32 2102212464, %v4170
    %v4183 = vshrl.u32 920167782, %v4171
    %v4184 = vor.u32 %v4182, %v4183
    %v4185 = vshll.u32 920167782, %v4170
    %v4186 = vshrl.u32 1326507024, %v4171
    %v4187 = vor.u32 %v4185, %v4186
    %vm4188 = vcmp.lt.s32.totalorder %v4169, 1
    %vm4189 = vcmp.lt.s32.totalorder %v4169, 2
    %vm4190 = vcmp.lt.s32.totalorder %v4169, 3
    %vm4191 = vcmp.lt.s32.totalorder %v4169, 4
    %v4192 = vsel %vm4188, %v4172, %v4175
    %v4193 = vsel %vm4191, %v4181, 2102212464
    %v4194 = vsel %vm4190, %v4178, %v4193
    %v4195 = vsel %vm4189, %v4192, %v4194
    %v4196 = vsel %vm4188, %v4175, %v4178
    %v4197 = vsel %vm4191, %v4184, 920167782
    %v4198 = vsel %vm4190, %v4181, %v4197
    %v4199 = vsel %vm4189, %v4196, %v4198
    %v4200 = vsel %vm4188, %v4178, %v4181
    %v4201 = vsel %vm4191, %v4187, 1326507024
    %v4202 = vsel %vm4190, %v4184, %v4201
    %v4203 = vsel %vm4189, %v4200, %v4202
    %v4204 = vshll.u32 %v4164, 8
    %v4205 = vand.u32 %v4204, 65535
    %v4206 = vshrl.u32 %v4204, 16
    %v4207 = vand.u32 %v4203, 65535
    %v4208 = vshrl.u32 %v4203, 16
    %v4209 = vmul.u32 %v4205, %v4207
    %v4210 = vmul.u32 %v4205, %v4208
    %v4211 = vmul.u32 %v4206, %v4207
    %v4212 = vmul.u32 %v4206, %v4208
    %v4213 = vshll.u32 %v4210, 16
    %v4214 = vshrl.u32 %v4210, 16
    %v4215 = vshll.u32 %v4211, 16
    %v4216 = vshrl.u32 %v4211, 16
    %vm4217 = vc.u32 %v4209, %v4213
    %v4218 = vsel %vm4217, 1, 0
    %v4219 = vadd.s32 %v4209, %v4213
    %v4220 = vadd.s32 %v4212, %v4218
    %vm4221 = vc.u32 %v4219, %v4215
    %v4222 = vsel %vm4221, 1, 0
    %v4223 = vadd.s32 %v4219, %v4215
    %v4224 = vadd.s32 %v4220, %v4222
    %v4225 = vadd.s32 %v4224, %v4214
    %v4226 = vadd.s32 %v4225, %v4216
    %v4227 = vand.u32 %v4204, 65535
    %v4228 = vshrl.u32 %v4204, 16
    %v4229 = vand.u32 %v4199, 65535
    %v4230 = vshrl.u32 %v4199, 16
    %v4231 = vmul.u32 %v4227, %v4229
    %v4232 = vmul.u32 %v4227, %v4230
    %v4233 = vmul.u32 %v4228, %v4229
    %v4234 = vmul.u32 %v4228, %v4230
    %v4235 = vshll.u32 %v4232, 16
    %v4236 = vshrl.u32 %v4232, 16
    %v4237 = vshll.u32 %v4233, 16
    %v4238 = vshrl.u32 %v4233, 16
    %vm4239 = vc.u32 %v4231, %v4235
    %v4240 = vsel %vm4239, 1, 0
    %v4241 = vadd.s32 %v4231, %v4235
    %v4242 = vadd.s32 %v4234, %v4240
    %vm4243 = vc.u32 %v4241, %v4237
    %v4244 = vsel %vm4243, 1, 0
    %v4245 = vadd.s32 %v4241, %v4237
    %v4246 = vadd.s32 %v4242, %v4244
    %v4247 = vadd.s32 %v4246, %v4236
    %v4248 = vadd.s32 %v4247, %v4238
    %v4249 = vmul.u32 %v4204, %v4195
    %v4250 = vadd.s32 %v4226, %v4245
    %vm4251 = vc.u32 %v4226, %v4245
    %v4252 = vadd.s32 %v4248, 1
    %v4253 = vsel %vm4251, %v4252, %v4248
    %v4254 = vadd.s32 %v4249, %v4253
    %v4255 = vadd.s32 %v4254, 536870912
    %v4256 = vshrl.u32 %v4255, 30
    %v4257 = vshll.u32 %v4256, 30
    %v4258 = vsub.s32 %v4254, %v4257
    %vm4259 = vcmp.lt.s32.totalorder %v4258, 0
    %v4260 = vsub.s32 0, %v4258
    %v4261 = vsel %vm4259, %v4260, %v4258
    %v4262 = vclz %v4261
    %v4263 = vsub.s32 %v4262, 2
    %vm4264 = vcmp.gt.s32.totalorder 0, %v4263
    %v4265 = vsel %vm4264, 0, %v4263
    %v4266 = vsub.s32 32, %v4265
    %v4267 = vshll.u32 %v4258, %v4265
    %v4268 = vshrl.u32 %v4250, %v4266
    %v4269 = vor.u32 %v4267, %v4268
    %v4270 = vsub.s32 4294967266, %v4265
    %v4271 = vadd.s32 %v4270, 127
    %v4272 = vshll.u32 %v4271, 23
    %v4273 = vor.u32 4788187, %v4272
    %v4274 = vand.u32 2147483647, %v4273
    %v4276 = vcvt.s32.f32 %v4269
    %v4277 = vmul.f32 %v4276, %v4274
    %v4278 = vxor.u32 %v4277, 2147483648
    %v4279 = vsel %vm4158, %v4278, %v4277
    %v4280 = vsub.s32 4, %v4256
    %v4281 = vsel %vm4158, %v4280, %v4256
    %v4282 = vsel %vm4157, %v1069, %v4279
    %v4283 = vsel %vm4157, 0, %v4281
    %v4284 = vmul.f32 %v4282, %v4282
    %v4285 = vmul.f32 %v4284, -0.001358992
    %v4286 = vadd.f32 %v4285, 0.041655596
    %v4287 = vmul.f32 %v4284, %v4286
    %v4288 = vadd.f32 %v4287, -0.4999988
    %v4289 = vmul.f32 %v4284, %v4288
    %v4290 = vadd.f32 1.0, %v4289
    %v4291 = vmul.f32 %v4282, %v4282
    %v4292 = vmul.f32 %v4291, -0.00019511016
    %v4293 = vadd.f32 %v4292, 0.008332121
    %v4294 = vmul.f32 %v4291, %v4293
    %v4295 = vadd.f32 %v4294, -0.16666654
    %v4296 = vmul.f32 %v4291, %v4295
    %v4297 = vadd.f32 %v4296, 1.0
    %v4298 = vmul.f32 %v4297, %v4282
    %vm4299 = vweird.f32 %v1069
    %v4300 = vadd.s32 %v4283, 3
    %v4301 = vand.u32 %v4300, 3
    %vm4302 = vcmp.lt.s32.totalorder %v4301, 2
    %vm4303 = vcmp.eq.s32.totalorder %v4301, 0
    %v4304 = vxor.u32 %v4298, 2147483648
    %v4305 = vsel %vm4303, %v4290, %v4304
    %vm4306 = vcmp.eq.s32.totalorder %v4301, 2
    %v4307 = vxor.u32 %v4290, 2147483648
    %v4308 = vsel %vm4306, %v4307, %v4298
    %v4309 = vsel %vm4302, %v4305, %v4308
    %v4310 = vsel %vm4299, nan, %v4309
    %v4311 = vand.u32 2147483647, %v1556
    %vm4312 = vcmp.le.f32.partialorder %v4311, 0.7853982
    %vm4313 = vcmp.lt.s32.totalorder %v1556, 0
    %v4314 = vand.u32 %v1556, 2139095040
    %v4315 = vshrl.u32 %v4314, 23
    %v4316 = vsub.s32 %v4315, 127
    %v4317 = vand.u32 2147483647, %v1556
    %v4318 = vand.u32 %v4317, 8388607
    %v4319 = vor.u32 %v4318, 8388608
    %v4320 = vsub.s32 0, %v4319
    %v4321 = vadd.s32 %v4316, 1
    %vm4322 = vcmp.gt.s32.totalorder %v4321, 0
    %v4323 = vsel %vm4322, %v4321, 0
    %v4324 = vshrl.u32 %v4323, 5
    %v4325 = vand.u32 %v4323, 31
    %v4326 = vsub.s32 32, %v4325
    %v4327 = vshrl.u32 683565275, %v4326
    %v4328 = vshll.u32 683565275, %v4325
    %v4329 = vshrl.u32 2475754826, %v4326
    %v4330 = vor.u32 %v4328, %v4329
    %v4331 = vshll.u32 2475754826, %v4325
    %v4332 = vshrl.u32 2131351028, %v4326
    %v4333 = vor.u32 %v4331, %v4332
    %v4334 = vshll.u32 2131351028, %v4325
    %v4335 = vshrl.u32 2102212464, %v4326
    %v4336 = vor.u32 %v4334, %v4335
    %v4337 = vshll.u32 2102212464, %v4325
    %v4338 = vshrl.u32 920167782, %v4326
    %v4339 = vor.u32 %v4337, %v4338
    %v4340 = vshll.u32 920167782, %v4325
    %v4341 = vshrl.u32 1326507024, %v4326
    %v4342 = vor.u32 %v4340, %v4341
    %vm4343 = vcmp.lt.s32.totalorder %v4324, 1
    %vm4344 = vcmp.lt.s32.totalorder %v4324, 2
    %vm4345 = vcmp.lt.s32.totalorder %v4324, 3
    %vm4346 = vcmp.lt.s32.totalorder %v4324, 4
    %v4347 = vsel %vm4343, %v4327, %v4330
    %v4348 = vsel %vm4346, %v4336, 2102212464
    %v4349 = vsel %vm4345, %v4333, %v4348
    %v4350 = vsel %vm4344, %v4347, %v4349
    %v4351 = vsel %vm4343, %v4330, %v4333
    %v4352 = vsel %vm4346, %v4339, 920167782
    %v4353 = vsel %vm4345, %v4336, %v4352
    %v4354 = vsel %vm4344, %v4351, %v4353
    %v4355 = vsel %vm4343, %v4333, %v4336
    %v4356 = vsel %vm4346, %v4342, 1326507024
    %v4357 = vsel %vm4345, %v4339, %v4356
    %v4358 = vsel %vm4344, %v4355, %v4357
    %v4359 = vshll.u32 %v4319, 8
    %v4360 = vand.u32 %v4359, 65535
    %v4361 = vshrl.u32 %v4359, 16
    %v4362 = vand.u32 %v4358, 65535
    %v4363 = vshrl.u32 %v4358, 16
    %v4364 = vmul.u32 %v4360, %v4362
    %v4365 = vmul.u32 %v4360, %v4363
    %v4366 = vmul.u32 %v4361, %v4362
    %v4367 = vmul.u32 %v4361, %v4363
    %v4368 = vshll.u32 %v4365, 16
    %v4369 = vshrl.u32 %v4365, 16
    %v4370 = vshll.u32 %v4366, 16
    %v4371 = vshrl.u32 %v4366, 16
    %vm4372 = vc.u32 %v4364, %v4368
    %v4373 = vsel %vm4372, 1, 0
    %v4374 = vadd.s32 %v4364, %v4368
    %v4375 = vadd.s32 %v4367, %v4373
    %vm4376 = vc.u32 %v4374, %v4370
    %v4377 = vsel %vm4376, 1, 0
    %v4378 = vadd.s32 %v4374, %v4370
    %v4379 = vadd.s32 %v4375, %v4377
    %v4380 = vadd.s32 %v4379, %v4369
    %v4381 = vadd.s32 %v4380, %v4371
    %v4382 = vand.u32 %v4359, 65535
    %v4383 = vshrl.u32 %v4359, 16
    %v4384 = vand.u32 %v4354, 65535
    %v4385 = vshrl.u32 %v4354, 16
    %v4386 = vmul.u32 %v4382, %v4384
    %v4387 = vmul.u32 %v4382, %v4385
    %v4388 = vmul.u32 %v4383, %v4384
    %v4389 = vmul.u32 %v4383, %v4385
    %v4390 = vshll.u32 %v4387, 16
    %v4391 = vshrl.u32 %v4387, 16
    %v4392 = vshll.u32 %v4388, 16
    %v4393 = vshrl.u32 %v4388, 16
    %vm4394 = vc.u32 %v4386, %v4390
    %v4395 = vsel %vm4394, 1, 0
    %v4396 = vadd.s32 %v4386, %v4390
    %v4397 = vadd.s32 %v4389, %v4395
    %vm4398 = vc.u32 %v4396, %v4392
    %v4399 = vsel %vm4398, 1, 0
    %v4400 = vadd.s32 %v4396, %v4392
    %v4401 = vadd.s32 %v4397, %v4399
    %v4402 = vadd.s32 %v4401, %v4391
    %v4403 = vadd.s32 %v4402, %v4393
    %v4404 = vmul.u32 %v4359, %v4350
    %v4405 = vadd.s32 %v4381, %v4400
    %vm4406 = vc.u32 %v4381, %v4400
    %v4407 = vadd.s32 %v4403, 1
    %v4408 = vsel %vm4406, %v4407, %v4403
    %v4409 = vadd.s32 %v4404, %v4408
    %v4410 = vadd.s32 %v4409, 536870912
    %v4411 = vshrl.u32 %v4410, 30
    %v4412 = vshll.u32 %v4411, 30
    %v4413 = vsub.s32 %v4409, %v4412
    %vm4414 = vcmp.lt.s32.totalorder %v4413, 0
    %v4415 = vsub.s32 0, %v4413
    %v4416 = vsel %vm4414, %v4415, %v4413
    %v4417 = vclz %v4416
    %v4418 = vsub.s32 %v4417, 2
    %vm4419 = vcmp.gt.s32.totalorder 0, %v4418
    %v4420 = vsel %vm4419, 0, %v4418
    %v4421 = vsub.s32 32, %v4420
    %v4422 = vshll.u32 %v4413, %v4420
    %v4423 = vshrl.u32 %v4405, %v4421
    %v4424 = vor.u32 %v4422, %v4423
    %v4425 = vsub.s32 4294967266, %v4420
    %v4426 = vadd.s32 %v4425, 127
    %v4427 = vshll.u32 %v4426, 23
    %v4428 = vor.u32 4788187, %v4427
    %v4429 = vand.u32 2147483647, %v4428
    %v4431 = vcvt.s32.f32 %v4424
    %v4432 = vmul.f32 %v4431, %v4429
    %v4433 = vxor.u32 %v4432, 2147483648
    %v4434 = vsel %vm4313, %v4433, %v4432
    %v4435 = vsub.s32 4, %v4411
    %v4436 = vsel %vm4313, %v4435, %v4411
    %v4437 = vsel %vm4312, %v1556, %v4434
    %v4438 = vsel %vm4312, 0, %v4436
    %v4439 = vmul.f32 %v4437, %v4437
    %v4440 = vmul.f32 %v4439, -0.001358992
    %v4441 = vadd.f32 %v4440, 0.041655596
    %v4442 = vmul.f32 %v4439, %v4441
    %v4443 = vadd.f32 %v4442, -0.4999988
    %v4444 = vmul.f32 %v4439, %v4443
    %v4445 = vadd.f32 1.0, %v4444
    %v4446 = vmul.f32 %v4437, %v4437
    %v4447 = vmul.f32 %v4446, -0.00019511016
    %v4448 = vadd.f32 %v4447, 0.008332121
    %v4449 = vmul.f32 %v4446, %v4448
    %v4450 = vadd.f32 %v4449, -0.16666654
    %v4451 = vmul.f32 %v4446, %v4450
    %v4452 = vadd.f32 %v4451, 1.0
    %v4453 = vmul.f32 %v4452, %v4437
    %vm4454 = vweird.f32 %v1556
    %v4455 = vadd.s32 %v4438, 3
    %v4456 = vand.u32 %v4455, 3
    %vm4457 = vcmp.lt.s32.totalorder %v4456, 2
    %vm4458 = vcmp.eq.s32.totalorder %v4456, 0
    %v4459 = vxor.u32 %v4453, 2147483648
    %v4460 = vsel %vm4458, %v4445, %v4459
    %vm4461 = vcmp.eq.s32.totalorder %v4456, 2
    %v4462 = vxor.u32 %v4445, 2147483648
    %v4463 = vsel %vm4461, %v4462, %v4453
    %v4464 = vsel %vm4457, %v4460, %v4463
    %v4465 = vsel %vm4454, nan, %v4464
    %v4466 = vand.u32 2147483647, %v2043
    %vm4467 = vcmp.le.f32.partialorder %v4466, 0.7853982
    %vm4468 = vcmp.lt.s32.totalorder %v2043, 0
    %v4469 = vand.u32 %v2043, 2139095040
    %v4470 = vshrl.u32 %v4469, 23
    %v4471 = vsub.s32 %v4470, 127
    %v4472 = vand.u32 2147483647, %v2043
    %v4473 = vand.u32 %v4472, 8388607
    %v4474 = vor.u32 %v4473, 8388608
    %v4475 = vsub.s32 0, %v4474
    %v4476 = vadd.s32 %v4471, 1
    %vm4477 = vcmp.gt.s32.totalorder %v4476, 0
    %v4478 = vsel %vm4477, %v4476, 0
    %v4479 = vshrl.u32 %v4478, 5
    %v4480 = vand.u32 %v4478, 31
    %v4481 = vsub.s32 32, %v4480
    %v4482 = vshrl.u32 683565275, %v4481
    %v4483 = vshll.u32 683565275, %v4480
    %v4484 = vshrl.u32 2475754826, %v4481
    %v4485 = vor.u32 %v4483, %v4484
    %v4486 = vshll.u32 2475754826, %v4480
    %v4487 = vshrl.u32 2131351028, %v4481
    %v4488 = vor.u32 %v4486, %v4487
    %v4489 = vshll.u32 2131351028, %v4480
    %v4490 = vshrl.u32 2102212464, %v4481
    %v4491 = vor.u32 %v4489, %v4490
    %v4492 = vshll.u32 2102212464, %v4480
    %v4493 = vshrl.u32 920167782, %v4481
    %v4494 = vor.u32 %v4492, %v4493
    %v4495 = vshll.u32 920167782, %v4480
    %v4496 = vshrl.u32 1326507024, %v4481
    %v4497 = vor.u32 %v4495, %v4496
    %vm4498 = vcmp.lt.s32.totalorder %v4479, 1
    %vm4499 = vcmp.lt.s32.totalorder %v4479, 2
    %vm4500 = vcmp.lt.s32.totalorder %v4479, 3
    %vm4501 = vcmp.lt.s32.totalorder %v4479, 4
    %v4502 = vsel %vm4498, %v4482, %v4485
    %v4503 = vsel %vm4501, %v4491, 2102212464
    %v4504 = vsel %vm4500, %v4488, %v4503
    %v4505 = vsel %vm4499, %v4502, %v4504
    %v4506 = vsel %vm4498, %v4485, %v4488
    %v4507 = vsel %vm4501, %v4494, 920167782
    %v4508 = vsel %vm4500, %v4491, %v4507
    %v4509 = vsel %vm4499, %v4506, %v4508
    %v4510 = vsel %vm4498, %v4488, %v4491
    %v4511 = vsel %vm4501, %v4497, 1326507024
    %v4512 = vsel %vm4500, %v4494, %v4511
    %v4513 = vsel %vm4499, %v4510, %v4512
    %v4514 = vshll.u32 %v4474, 8
    %v4515 = vand.u32 %v4514, 65535
    %v4516 = vshrl.u32 %v4514, 16
    %v4517 = vand.u32 %v4513, 65535
    %v4518 = vshrl.u32 %v4513, 16
    %v4519 = vmul.u32 %v4515, %v4517
    %v4520 = vmul.u32 %v4515, %v4518
    %v4521 = vmul.u32 %v4516, %v4517
    %v4522 = vmul.u32 %v4516, %v4518
    %v4523 = vshll.u32 %v4520, 16
    %v4524 = vshrl.u32 %v4520, 16
    %v4525 = vshll.u32 %v4521, 16
    %v4526 = vshrl.u32 %v4521, 16
    %vm4527 = vc.u32 %v4519, %v4523
    %v4528 = vsel %vm4527, 1, 0
    %v4529 = vadd.s32 %v4519, %v4523
    %v4530 = vadd.s32 %v4522, %v4528
    %vm4531 = vc.u32 %v4529, %v4525
    %v4532 = vsel %vm4531, 1, 0
    %v4533 = vadd.s32 %v4529, %v4525
    %v4534 = vadd.s32 %v4530, %v4532
    %v4535 = vadd.s32 %v4534, %v4524
    %v4536 = vadd.s32 %v4535, %v4526
    %v4537 = vand.u32 %v4514, 65535
    %v4538 = vshrl.u32 %v4514, 16
    %v4539 = vand.u32 %v4509, 65535
    %v4540 = vshrl.u32 %v4509, 16
    %v4541 = vmul.u32 %v4537, %v4539
    %v4542 = vmul.u32 %v4537, %v4540
    %v4543 = vmul.u32 %v4538, %v4539
    %v4544 = vmul.u32 %v4538, %v4540
    %v4545 = vshll.u32 %v4542, 16
    %v4546 = vshrl.u32 %v4542, 16
    %v4547 = vshll.u32 %v4543, 16
    %v4548 = vshrl.u32 %v4543, 16
    %vm4549 = vc.u32 %v4541, %v4545
    %v4550 = vsel %vm4549, 1, 0
    %v4551 = vadd.s32 %v4541, %v4545
    %v4552 = vadd.s32 %v4544, %v4550
    %vm4553 = vc.u32 %v4551, %v4547
    %v4554 = vsel %vm4553, 1, 0
    %v4555 = vadd.s32 %v4551, %v4547
    %v4556 = vadd.s32 %v4552, %v4554
    %v4557 = vadd.s32 %v4556, %v4546
    %v4558 = vadd.s32 %v4557, %v4548
    %v4559 = vmul.u32 %v4514, %v4505
    %v4560 = vadd.s32 %v4536, %v4555
    %vm4561 = vc.u32 %v4536, %v4555
    %v4562 = vadd.s32 %v4558, 1
    %v4563 = vsel %vm4561, %v4562, %v4558
    %v4564 = vadd.s32 %v4559, %v4563
    %v4565 = vadd.s32 %v4564, 536870912
    %v4566 = vshrl.u32 %v4565, 30
    %v4567 = vshll.u32 %v4566, 30
    %v4568 = vsub.s32 %v4564, %v4567
    %vm4569 = vcmp.lt.s32.totalorder %v4568, 0
    %v4570 = vsub.s32 0, %v4568
    %v4571 = vsel %vm4569, %v4570, %v4568
    %v4572 = vclz %v4571
    %v4573 = vsub.s32 %v4572, 2
    %vm4574 = vcmp.gt.s32.totalorder 0, %v4573
    %v4575 = vsel %vm4574, 0, %v4573
    %v4576 = vsub.s32 32, %v4575
    %v4577 = vshll.u32 %v4568, %v4575
    %v4578 = vshrl.u32 %v4560, %v4576
    %v4579 = vor.u32 %v4577, %v4578
    %v4580 = vsub.s32 4294967266, %v4575
    %v4581 = vadd.s32 %v4580, 127
    %v4582 = vshll.u32 %v4581, 23
    %v4583 = vor.u32 4788187, %v4582
    %v4584 = vand.u32 2147483647, %v4583
    %v4586 = vcvt.s32.f32 %v4579
    %v4587 = vmul.f32 %v4586, %v4584
    %v4588 = vxor.u32 %v4587, 2147483648
    %v4589 = vsel %vm4468, %v4588, %v4587
    %v4590 = vsub.s32 4, %v4566
    %v4591 = vsel %vm4468, %v4590, %v4566
    %v4592 = vsel %vm4467, %v2043, %v4589
    %v4593 = vsel %vm4467, 0, %v4591
    %v4594 = vmul.f32 %v4592, %v4592
    %v4595 = vmul.f32 %v4594, -0.001358992
    %v4596 = vadd.f32 %v4595, 0.041655596
    %v4597 = vmul.f32 %v4594, %v4596
    %v4598 = vadd.f32 %v4597, -0.4999988
    %v4599 = vmul.f32 %v4594, %v4598
    %v4600 = vadd.f32 1.0, %v4599
    %v4601 = vmul.f32 %v4592, %v4592
    %v4602 = vmul.f32 %v4601, -0.00019511016
    %v4603 = vadd.f32 %v4602, 0.008332121
    %v4604 = vmul.f32 %v4601, %v4603
    %v4605 = vadd.f32 %v4604, -0.16666654
    %v4606 = vmul.f32 %v4601, %v4605
    %v4607 = vadd.f32 %v4606, 1.0
    %v4608 = vmul.f32 %v4607, %v4592
    %vm4609 = vweird.f32 %v2043
    %v4610 = vadd.s32 %v4593, 3
    %v4611 = vand.u32 %v4610, 3
    %vm4612 = vcmp.lt.s32.totalorder %v4611, 2
    %vm4613 = vcmp.eq.s32.totalorder %v4611, 0
    %v4614 = vxor.u32 %v4608, 2147483648
    %v4615 = vsel %vm4613, %v4600, %v4614
    %vm4616 = vcmp.eq.s32.totalorder %v4611, 2
    %v4617 = vxor.u32 %v4600, 2147483648
    %v4618 = vsel %vm4616, %v4617, %v4608
    %v4619 = vsel %vm4612, %v4615, %v4618
    %v4620 = vsel %vm4609, nan, %v4619
    %v4621 = vmul.f32 %v2110, %v2295
    %v4622 = vmul.f32 %v2112, %v2450
    %v4623 = vmul.f32 %v2114, %v2605
    %v4624 = vmul.f32 %v2116, %v2760
    %v4625 = vmul.f32 %v2118, %v2915
    %v4626 = vmul.f32 %v2120, %v3070
    %v4627 = vmul.f32 %v2122, %v3225
    %v4628 = vmul.f32 %v2124, %v3380
    %v4629 = vmul.f32 %v2126, %v3535
    %v4630 = vmul.f32 %v2128, %v3690
    %v4631 = vmul.f32 %v2130, %v3845
    %v4632 = vmul.f32 %v2132, %v4000
    %v4633 = vmul.f32 %v2134, %v4155
    %v4634 = vmul.f32 %v2136, %v4310
    %v4635 = vmul.f32 %v2138, %v4465
    %v4636 = vmul.f32 %v2140, %v4620
    %4637 = vst [vmem:[#allocation2] sm:$0xff] %v4621
    %4638 = vst [vmem:[#allocation2 + $0x8] sm:$0xff] %v4622
    %4639 = vst [vmem:[#allocation2 + $0x10] sm:$0xff] %v4623
    %4640 = vst [vmem:[#allocation2 + $0x18] sm:$0xff] %v4624
    %4641 = vst [vmem:[#allocation2 + $0x20] sm:$0xff] %v4625
    %4642 = vst [vmem:[#allocation2 + $0x28] sm:$0xff] %v4626
    %4643 = vst [vmem:[#allocation2 + $0x30] sm:$0xff] %v4627
    %4644 = vst [vmem:[#allocation2 + $0x38] sm:$0xff] %v4628
    %4645 = vst [vmem:[#allocation2 + $0x40] sm:$0xff] %v4629
    %4646 = vst [vmem:[#allocation2 + $0x48] sm:$0xff] %v4630
    %4647 = vst [vmem:[#allocation2 + $0x50] sm:$0xff] %v4631
    %4648 = vst [vmem:[#allocation2 + $0x58] sm:$0xff] %v4632
    %4649 = vst [vmem:[#allocation2 + $0x60] sm:$0xff] %v4633
    %4650 = vst [vmem:[#allocation2 + $0x68] sm:$0xff] %v4634
    %4651 = vst [vmem:[#allocation2 + $0x70] sm:$0xff] %v4635
    %4652 = vst [vmem:[#allocation2 + $0x78] sm:$0xff] %v4636
    // Predicated region
    $region10: #{tpu_custom_call.1} parent=1 // pred_check
      _
    $region11: #{tpu_custom_call.1} parent=1 // pred_check_branch
      %4654 = sbr.rel (0) target = $region13
    $region12: #{tpu_custom_call.1} parent=1 // pred_region
      %4656 = vsyncadd [#allocation3], 0
      %s4657 = sshll.u32 [#allocation2], 4
      %s4658 = int_to_ptr.vmem [resolvable:$true] %s4657
      %s4659 = sshll.u32 %s2, 4
      %s4660 = int_to_ptr.hbm [resolvable:$true] %s4659
      %4665 = dma.vmem_to_hbm [thread:$0]  %s4658, 2048, %s4660, [#allocation3], 512, 512, 32
    $region13: #{tpu_custom_call.1} parent=1 // pred_fallthru
      _
    // Predicated region
    $region14: #{tpu_custom_call.1} parent=1 // pred_check
      _
    $region15: #{tpu_custom_call.1} parent=1 // pred_check_branch
      %4667 = sbr.rel (0) target = $region17
    $region16: #{tpu_custom_call.1} parent=1 // pred_region
      %4669 = dma.done [#allocation3], 2048
    $region17: #{tpu_custom_call.1} parent=1 // pred_fallthru
      _
    %4670 = vsyncpa [#allocation3], 1

</llo_original>
